<compile_context>
chip_gen: v7x
topology: tpu7x:2x2x1
jax: 0.10.0
libtpu: 0.0.40
codegen_flags: <defaults>
</compile_context>

<pallas_src>
import jax
import jax.numpy as jnp
from jax.experimental import pallas as pl
from jax.experimental.pallas import tpu as pltpu


def fusion_kernel(lidar_ref, cam_ref, wcam_ref, wrest_ref, bias_ref,
                  out_ref, cam_acc):
    """Grid: (Cc // cam_block,) over cam channels (reduction axis).

    lidar_ref : (B, Cl, HWl)        resident across the grid
    cam_ref   : (B, TK, HWc)        K-streamed cam-activation chunk
    wcam_ref  : (TK, F)   bf16      K-streamed cam-weight chunk
    wrest_ref : (Cl+2F, F) bf16     resident: rows [0:Cl]=wl, [Cl:Cl+F]=wf_l,
                                    [Cl+F:Cl+2F]=wf_c
    bias_ref  : (3, F)    f32       resident: rows = (bl, bc, bf)
    out_ref   : (B, F)    f32       written once on the last step
    cam_acc   : (B, F)    f32 VMEM  cam-branch partial accumulator
    """
    k = pl.program_id(0)

    @pl.when(k == 0)
    def _init():
        cam_acc[...] = jnp.zeros_like(cam_acc)

    # ---- cam branch, this K chunk: spatial mean (lane reduce, f32 acc) ----
    hw_cam = cam_ref.shape[-1]
    cam_pooled = jnp.sum(cam_ref[...], axis=-1, dtype=jnp.float32) * (1.0 / hw_cam)
    # bf16 x bf16 MXU matmul, f32 accumulation of the partial product.
    cam_acc[...] += jnp.dot(cam_pooled.astype(jnp.bfloat16), wcam_ref[...],
                            preferred_element_type=jnp.float32)

    @pl.when(k == pl.num_programs(0) - 1)
    def _finalize():
        Cl = lidar_ref.shape[1]
        F = out_ref.shape[-1]
        hw_l = lidar_ref.shape[-1]

        bl = bias_ref[0:1, :]
        bc = bias_ref[1:2, :]
        bf = bias_ref[2:3, :]

        # ---- lidar branch (small, runs once) ----
        lidar_pooled = jnp.sum(lidar_ref[...], axis=-1, dtype=jnp.float32) * (1.0 / hw_l)
        wl = wrest_ref[0:Cl, :]
        l = jnp.maximum(
            jnp.dot(lidar_pooled.astype(jnp.bfloat16), wl,
                    preferred_element_type=jnp.float32) + bl, 0.0)          # (B, F)

        # ---- cam branch epilogue ----
        c = jnp.maximum(cam_acc[...] + bc, 0.0)                             # (B, F)

        # ---- fusion: concat([l, c]) @ Wf == l @ Wf[:F] + c @ Wf[F:] ----
        wf_l = wrest_ref[Cl:Cl + F, :]
        wf_c = wrest_ref[Cl + F:Cl + 2 * F, :]
        fused = (jnp.dot(l.astype(jnp.bfloat16), wf_l,
                         preferred_element_type=jnp.float32)
                 + jnp.dot(c.astype(jnp.bfloat16), wf_c,
                           preferred_element_type=jnp.float32)
                 + bf)
        out_ref[...] = jnp.maximum(fused, 0.0)                              # (B, F)


def fusion_forward(lidar_feat_nchw, cam_feat_nchw, packed, *, cam_block=512):
    """lidar_feat_nchw: (B, Cl, H, W); cam_feat_nchw: (B, Cc, Hc, Wc).
    `packed` comes from pack_params() (bf16 weights, stacked f32 biases)."""
    B, Cl, H, W = lidar_feat_nchw.shape
    _, Cc, Hc, Wc = cam_feat_nchw.shape
    F = packed["w_rest"].shape[-1]

    cam_block = min(cam_block, Cc)
    assert Cc % cam_block == 0, (Cc, cam_block)
    n_k = Cc // cam_block

    # NCHW -> (B, C, H*W): a free reshape (no transpose, no extra HBM pass).
    lidar_3d = lidar_feat_nchw.reshape(B, Cl, H * W)
    cam_3d = cam_feat_nchw.reshape(B, Cc, Hc * Wc)

    bytes_accessed = (
        lidar_3d.size * lidar_3d.dtype.itemsize
        + cam_3d.size * cam_3d.dtype.itemsize
        + packed["w_cam"].size * packed["w_cam"].dtype.itemsize
        + packed["w_rest"].size * packed["w_rest"].dtype.itemsize
        + packed["biases"].size * packed["biases"].dtype.itemsize
        + B * F * 4)
    flops = 2 * B * (Cl + Cc + 2 * F) * F + B * (Cl * H * W + Cc * Hc * Wc)

    grid_spec = pltpu.PrefetchScalarGridSpec(
        num_scalar_prefetch=0,
        grid=(n_k,),
        in_specs=[
            # lidar activations: whole block, constant index -> fetched once.
            pl.BlockSpec((B, Cl, H * W), lambda k: (0, 0, 0)),
            # cam activations: streamed over the channel axis.
            pl.BlockSpec((B, cam_block, Hc * Wc), lambda k: (0, k, 0)),
            # cam weight: streamed over the channel axis.
            pl.BlockSpec((cam_block, F), lambda k: (k, 0)),
            # lidar + fusion weights: one contiguous slab, VMEM-resident.
            pl.BlockSpec((Cl + 2 * F, F), lambda k: (0, 0)),
            # packed biases: resident.
            pl.BlockSpec((3, F), lambda k: (0, 0)),
        ],
        out_specs=pl.BlockSpec((B, F), lambda k: (0, 0)),
        scratch_shapes=[pltpu.VMEM((B, F), jnp.float32)],
    )

    return pl.pallas_call(
        fusion_kernel,
        out_shape=jax.ShapeDtypeStruct((B, F), jnp.float32),
        grid_spec=grid_spec,
        compiler_params=pltpu.CompilerParams(
            dimension_semantics=("arbitrary",)),
        cost_estimate=pl.CostEstimate(flops=flops, transcendentals=0,
                                      bytes_accessed=bytes_accessed),
    )(lidar_3d, cam_3d, packed["w_cam"], packed["w_rest"], packed["biases"])


def init_params(key, lidar_channels=256, cam_channels=2048, fused_channels=512):
    """Deterministic synthetic f32 master params.  nn.Linear weights are
    (out, in) in PyTorch; stored pre-transposed as (in, out) so x @ W."""
    k1, k2, k3, k4, k5, k6 = jax.random.split(key, 6)
    F = fused_channels
    s = 0.02
    return {
        "wl": s * jax.random.normal(k1, (lidar_channels, F), jnp.float32),
        "bl": s * jax.random.normal(k2, (F,), jnp.float32),
        "wc": s * jax.random.normal(k3, (cam_channels, F), jnp.float32),
        "bc": s * jax.random.normal(k4, (F,), jnp.float32),
        "wf": s * jax.random.normal(k5, (2 * F, F), jnp.float32),
        "bf": s * jax.random.normal(k6, (F,), jnp.float32),
    }


def pack_params(params):
    """One-time (amortized) packing for the kernel:
      w_cam  : (Cc, F) bf16          -- K-streamed over the grid
      w_rest : (Cl + 2F, F) bf16     -- [wl; wf] contiguous, resident in VMEM
      biases : (3, F) f32            -- [bl; bc; bf]
    """
    wl = params["wl"].astype(jnp.bfloat16)
    wc = params["wc"].astype(jnp.bfloat16)
    wf = params["wf"].astype(jnp.bfloat16)
    return {
        "w_cam": wc,
        "w_rest": jnp.concatenate([wl, wf], axis=0),
        "biases": jnp.stack([params["bl"], params["bc"], params["bf"]], axis=0),
    }


def reference_forward(lidar_feat, cam_feat, params):
    """Pure-JAX f32 reference mirroring the PyTorch forward."""
    lp = lidar_feat.mean(axis=(2, 3))
    cp = cam_feat.mean(axis=(2, 3))
    l = jax.nn.relu(lp @ params["wl"] + params["bl"])
    c = jax.nn.relu(cp @ params["wc"] + params["bc"])
    fused = jnp.concatenate([l, c], axis=1)
    return jax.nn.relu(fused @ params["wf"] + params["bf"])


if __name__ == "__main__":
    key = jax.random.PRNGKey(0)
    k_lidar, k_cam, k_params = jax.random.split(key, 3)

    B, H, W = 2, 8, 8
    LIDAR_C, CAM_C, FUSED_C = 256, 2048, 512

    # Backbone feature maps in bf16 (as a mixed-precision backbone would emit
    # them) -> halves activation DMA into the kernel; f32 also works.
    lidar_feat = jax.random.normal(
        k_lidar, (B, LIDAR_C, H, W), jnp.float32).astype(jnp.bfloat16)
    cam_feat = jax.random.normal(
        k_cam, (B, CAM_C, H, W), jnp.float32).astype(jnp.bfloat16)

    params = init_params(k_params, LIDAR_C, CAM_C, FUSED_C)
    packed = pack_params(params)

    out = fusion_forward(lidar_feat, cam_feat, packed)
    out = jax.block_until_ready(out)

    ref = reference_forward(lidar_feat.astype(jnp.float32),
                            cam_feat.astype(jnp.float32), params)
    assert out.shape == (B, FUSED_C), out.shape
    max_err = float(jnp.max(jnp.abs(out - ref)))
    assert jnp.allclose(out, ref, atol=2e-2, rtol=2e-2), \
        f"mismatch vs reference, max abs err {max_err}"

    print("KERNEL_OK")
</pallas_src>

<mosaic_0001>
module attributes {stable_mosaic.version = 11 : i64} {
  func.func @fusion_kernel(%arg0: i32, %arg1: memref<2x256x64xbf16, #tpu.memory_space<vmem>>, %arg2: memref<2x512x64xbf16, #tpu.memory_space<vmem>>, %arg3: memref<512x512xbf16, #tpu.memory_space<vmem>>, %arg4: memref<1280x512xbf16, #tpu.memory_space<vmem>>, %arg5: memref<3x512xf32, #tpu.memory_space<vmem>>, %arg6: memref<2x512xf32, #tpu.memory_space<vmem>>, %arg7: memref<2x512xf32, #tpu.memory_space<vmem>>) attributes {dimension_semantics = [#tpu.dimension_semantics<arbitrary>], iteration_bounds = array<i64: 4>, scalar_prefetch = 0 : i64, scratch_operands = 1 : i64, tpu.core_type = #tpu.core_type<tc>, window_params = [{pipeline_mode = #tpu.pipeline_mode<synchronous>, transform_indices = @transform_0, window_bounds = array<i64: 2, 256, 64>}, {transform_indices = @transform_1, window_bounds = array<i64: 2, 512, 64>}, {transform_indices = @transform_2, window_bounds = array<i64: 512, 512>}, {pipeline_mode = #tpu.pipeline_mode<synchronous>, transform_indices = @transform_3, window_bounds = array<i64: 1280, 512>}, {pipeline_mode = #tpu.pipeline_mode<synchronous>, transform_indices = @transform_4, window_bounds = array<i64: 3, 512>}, {pipeline_mode = #tpu.pipeline_mode<synchronous>, transform_indices = @transform_5, window_bounds = array<i64: 2, 512>}]} {
    %c0_i32 = arith.constant 0 : i32
    %0 = arith.cmpi eq, %arg0, %c0_i32 : i32
    %1 = arith.extui %0 : i1 to i32
    %c0_i32_0 = arith.constant 0 : i32
    %2 = arith.cmpi ne, %1, %c0_i32_0 : i32
    scf.if %2 {
      %cst_12 = arith.constant 0.000000e+00 : f32
      %17 = vector.broadcast %cst_12 : f32 to vector<2x512xf32>
      %c0_13 = arith.constant 0 : index
      %c0_14 = arith.constant 0 : index
      %18 = vector.load %arg7[%c0_13, %c0_14] : memref<2x512xf32, #tpu.memory_space<vmem>>, vector<2x512xf32>
      tpu.vector_store %arg7[%c0_13, %c0_14], %17 {strides = array<i32>} : memref<2x512xf32, #tpu.memory_space<vmem>>, vector<2x512xf32>,
    } else {
    }
    %c0 = arith.constant 0 : index
    %c0_1 = arith.constant 0 : index
    %c0_2 = arith.constant 0 : index
    %3 = vector.load %arg2[%c0, %c0_1, %c0_2] : memref<2x512x64xbf16, #tpu.memory_space<vmem>>, vector<2x512x64xbf16>
    %4 = arith.extf %3 : vector<2x512x64xbf16> to vector<2x512x64xf32>
    %cst = arith.constant dense<0.000000e+00> : vector<2x512xf32>
    %5 = vector.multi_reduction <add>, %4, %cst [2] : vector<2x512x64xf32> to vector<2x512xf32>
    %cst_3 = arith.constant 1.562500e-02 : f32
    %6 = vector.broadcast %cst_3 : f32 to vector<2x512xf32>
    %7 = arith.mulf %5, %6 : vector<2x512xf32>
    %c0_4 = arith.constant 0 : index
    %c0_5 = arith.constant 0 : index
    %8 = vector.load %arg7[%c0_4, %c0_5] : memref<2x512xf32, #tpu.memory_space<vmem>>, vector<2x512xf32>
    %9 = arith.truncf %7 : vector<2x512xf32> to vector<2x512xbf16>
    %c0_6 = arith.constant 0 : index
    %c0_7 = arith.constant 0 : index
    %10 = vector.load %arg3[%c0_6, %c0_7] : memref<512x512xbf16, #tpu.memory_space<vmem>>, vector<512x512xbf16>
    %cst_8 = arith.constant dense<0.000000e+00> : vector<2x512xf32>
    %11 = tpu.matmul %9, %10, %cst_8 {dimension_numbers = #tpu.dot_dimension_numbers<[1], [0], [0], [1], [0, 0, 1, 1], [], []>} : vector<2x512xbf16>, vector<512x512xbf16>, vector<2x512xf32> -> vector<2x512xf32>
    %12 = arith.addf %8, %11 : vector<2x512xf32>
    %c0_9 = arith.constant 0 : index
    %c0_10 = arith.constant 0 : index
    %13 = vector.load %arg7[%c0_9, %c0_10] : memref<2x512xf32, #tpu.memory_space<vmem>>, vector<2x512xf32>
    tpu.vector_store %arg7[%c0_9, %c0_10], %12 {strides = array<i32>} : memref<2x512xf32, #tpu.memory_space<vmem>>, vector<2x512xf32>,
    %c3_i32 = arith.constant 3 : i32
    %14 = arith.cmpi eq, %arg0, %c3_i32 : i32
    %15 = arith.extui %14 : i1 to i32
    %c0_i32_11 = arith.constant 0 : i32
    %16 = arith.cmpi ne, %15, %c0_i32_11 : i32
    scf.if %16 {
      %c0_12 = arith.constant 0 : index
      %c0_13 = arith.constant 0 : index
      %17 = vector.load %arg5[%c0_12, %c0_13] : memref<3x512xf32, #tpu.memory_space<vmem>>, vector<1x512xf32>
      %c1 = arith.constant 1 : index
      %c0_14 = arith.constant 0 : index
      %18 = vector.load %arg5[%c1, %c0_14] : memref<3x512xf32, #tpu.memory_space<vmem>>, vector<1x512xf32>
      %c2 = arith.constant 2 : index
      %c0_15 = arith.constant 0 : index
      %19 = vector.load %arg5[%c2, %c0_15] : memref<3x512xf32, #tpu.memory_space<vmem>>, vector<1x512xf32>
      %c0_16 = arith.constant 0 : index
      %c0_17 = arith.constant 0 : index
      %c0_18 = arith.constant 0 : index
      %20 = vector.load %arg1[%c0_16, %c0_17, %c0_18] : memref<2x256x64xbf16, #tpu.memory_space<vmem>>, vector<2x256x64xbf16>
      %21 = arith.extf %20 : vector<2x256x64xbf16> to vector<2x256x64xf32>
      %cst_19 = arith.constant dense<0.000000e+00> : vector<2x256xf32>
      %22 = vector.multi_reduction <add>, %21, %cst_19 [2] : vector<2x256x64xf32> to vector<2x256xf32>
      %cst_20 = arith.constant 1.562500e-02 : f32
      %23 = vector.broadcast %cst_20 : f32 to vector<2x256xf32>
      %24 = arith.mulf %22, %23 : vector<2x256xf32>
      %c0_21 = arith.constant 0 : index
      %c0_22 = arith.constant 0 : index
      %25 = vector.load %arg4[%c0_21, %c0_22] : memref<1280x512xbf16, #tpu.memory_space<vmem>>, vector<256x512xbf16>
      %26 = arith.truncf %24 : vector<2x256xf32> to vector<2x256xbf16>
      %cst_23 = arith.constant dense<0.000000e+00> : vector<2x512xf32>
      %27 = tpu.matmul %26, %25, %cst_23 {dimension_numbers = #tpu.dot_dimension_numbers<[1], [0], [0], [1], [0, 0, 1, 1], [], []>} : vector<2x256xbf16>, vector<256x512xbf16>, vector<2x512xf32> -> vector<2x512xf32>
      %28 = vector.broadcast %17 : vector<1x512xf32> to vector<2x512xf32>
      %29 = arith.addf %27, %28 : vector<2x512xf32>
      %cst_24 = arith.constant 0.000000e+00 : f32
      %30 = vector.broadcast %cst_24 : f32 to vector<2x512xf32>
      %31 = arith.maximumf %29, %30 : vector<2x512xf32>
      %c0_25 = arith.constant 0 : index
      %c0_26 = arith.constant 0 : index
      %32 = vector.load %arg7[%c0_25, %c0_26] : memref<2x512xf32, #tpu.memory_space<vmem>>, vector<2x512xf32>
      %33 = vector.broadcast %18 : vector<1x512xf32> to vector<2x512xf32>
      %34 = arith.addf %32, %33 : vector<2x512xf32>
      %cst_27 = arith.constant 0.000000e+00 : f32
      %35 = vector.broadcast %cst_27 : f32 to vector<2x512xf32>
      %36 = arith.maximumf %34, %35 : vector<2x512xf32>
      %c256 = arith.constant 256 : index
      %c0_28 = arith.constant 0 : index
      %37 = vector.load %arg4[%c256, %c0_28] : memref<1280x512xbf16, #tpu.memory_space<vmem>>, vector<512x512xbf16>
      %c768 = arith.constant 768 : index
      %c0_29 = arith.constant 0 : index
      %38 = vector.load %arg4[%c768, %c0_29] : memref<1280x512xbf16, #tpu.memory_space<vmem>>, vector<512x512xbf16>
      %39 = arith.truncf %31 : vector<2x512xf32> to vector<2x512xbf16>
      %cst_30 = arith.constant dense<0.000000e+00> : vector<2x512xf32>
      %40 = tpu.matmul %39, %37, %cst_30 {dimension_numbers = #tpu.dot_dimension_numbers<[1], [0], [0], [1], [0, 0, 1, 1], [], []>} : vector<2x512xbf16>, vector<512x512xbf16>, vector<2x512xf32> -> vector<2x512xf32>
      %41 = arith.truncf %36 : vector<2x512xf32> to vector<2x512xbf16>
      %cst_31 = arith.constant dense<0.000000e+00> : vector<2x512xf32>
      %42 = tpu.matmul %41, %38, %cst_31 {dimension_numbers = #tpu.dot_dimension_numbers<[1], [0], [0], [1], [0, 0, 1, 1], [], []>} : vector<2x512xbf16>, vector<512x512xbf16>, vector<2x512xf32> -> vector<2x512xf32>
      %43 = arith.addf %40, %42 : vector<2x512xf32>
      %44 = vector.broadcast %19 : vector<1x512xf32> to vector<2x512xf32>
      %45 = arith.addf %43, %44 : vector<2x512xf32>
      %cst_32 = arith.constant 0.000000e+00 : f32
      %46 = vector.broadcast %cst_32 : f32 to vector<2x512xf32>
      %47 = arith.maximumf %45, %46 : vector<2x512xf32>
      %c0_33 = arith.constant 0 : index
      %c0_34 = arith.constant 0 : index
      %48 = vector.load %arg6[%c0_33, %c0_34] : memref<2x512xf32, #tpu.memory_space<vmem>>, vector<2x512xf32>
      tpu.vector_store %arg6[%c0_33, %c0_34], %47 {strides = array<i32>} : memref<2x512xf32, #tpu.memory_space<vmem>>, vector<2x512xf32>,
    } else {
    }
    return
  }
  func.func @transform_0(%arg0: i32) -> (i32, i32, i32) {
    %c0_i32 = arith.constant 0 : i32
    %c0_i32_0 = arith.constant 0 : i32
    %c0_i32_1 = arith.constant 0 : i32
    %c0_i32_2 = arith.constant 0 : i32
    return %c0_i32, %c0_i32_0, %c0_i32_1 : i32, i32, i32
  }
  func.func @transform_1(%arg0: i32) -> (i32, i32, i32) {
    %c0_i32 = arith.constant 0 : i32
    %c0_i32_0 = arith.constant 0 : i32
    %c0_i32_1 = arith.constant 0 : i32
    return %c0_i32, %arg0, %c0_i32_0 : i32, i32, i32
  }
  func.func @transform_2(%arg0: i32) -> (i32, i32) {
    %c0_i32 = arith.constant 0 : i32
    %c0_i32_0 = arith.constant 0 : i32
    return %arg0, %c0_i32 : i32, i32
  }
  func.func @transform_3(%arg0: i32) -> (i32, i32) {
    %c0_i32 = arith.constant 0 : i32
    %c0_i32_0 = arith.constant 0 : i32
    %c0_i32_1 = arith.constant 0 : i32
    return %c0_i32, %c0_i32_0 : i32, i32
  }
  func.func @transform_4(%arg0: i32) -> (i32, i32) {
    %c0_i32 = arith.constant 0 : i32
    %c0_i32_0 = arith.constant 0 : i32
    %c0_i32_1 = arith.constant 0 : i32
    return %c0_i32, %c0_i32_0 : i32, i32
  }
  func.func @transform_5(%arg0: i32) -> (i32, i32) {
    %c0_i32 = arith.constant 0 : i32
    %c0_i32_0 = arith.constant 0 : i32
    %c0_i32_1 = arith.constant 0 : i32
    return %c0_i32, %c0_i32_0 : i32, i32
  }
}

</mosaic_0001>

<llo_original>
// kernel: tpu_custom_call.1
$region0: #{tpu_custom_call.1}
  #allocation0 [shape = 'u32[]', space=smem, size = 0x4, offset = 0x4, fixed_abs, tag = 'smem constant byte address 0x4 - core index']
  #allocation1 [shape = 'u32[144,128]{1,0:T(1,128)}', space=vmem, size = 0x12000, scoped, tag = 'internal scratch']
  #allocation2 [shape = 'f32[2,512]{1,0:T(2,128)}', space=vmem, size = 0x1000, scoped, tag = 'scratch operand']
  %s0 = inlined_call_operand.vmem [shape: bf16[2,256,64], index: 0, kind: input, shape index: {}]
  %s1 = inlined_call_operand.vmem [shape: bf16[2,2048,64], index: 1, kind: input, shape index: {}]
  %s2 = inlined_call_operand.hbm [shape: bf16[2048,512], index: 2, kind: input, shape index: {}]
  %s3 = inlined_call_operand.vmem [shape: bf16[1280,512], index: 3, kind: input, shape index: {}]
  %s4 = inlined_call_operand.hbm [shape: f32[3,512], index: 4, kind: input, shape index: {}]
  %s5 = inlined_call_operand.hbm [shape: f32[2,512], index: 5, kind: output, shape index: {}]
  %s6 = sld [smem:[#allocation0]]
  $region110: #{tpu_custom_call.1} parent=0
    _
  %s8 = ssub.s32 1, %s6
  %s9 = scalar_select 0, %s8, %s6
  $region1: #{tpu_custom_call.1} parent=0
    #allocation3 [shape = 'u8[524288]{0}', space=vmem, size = 0x80000, scoped, tag = 'input window, operand 1']
    #allocation4 [shape = 'u8[1048576]{0}', space=vmem, size = 0x100000, scoped, tag = 'input window, operand 2']
    #allocation5 [shape = 's32[2]{0}', space=sflag, size = 0x8, scoped, tag = 'scoped memory for tpu_custom_call.1']
    #allocation6 [shape = 's32[2]{0}', space=sflag, size = 0x8, scoped, tag = 'scoped memory for tpu_custom_call.1']
    #allocation7 [shape = 'u8[8192]{0}', space=vmem, size = 0x2000, scoped, tag = 'input window, operand 4, single buffered']
    #allocation8 [shape = 's32[1]{0}', space=sflag, size = 0x4, scoped, tag = 'scoped memory for tpu_custom_call.1']
    #allocation9 [shape = 'u8[4096]{0}', space=vmem, size = 0x1000, scoped, tag = 'output window, operand 0, single buffered']
    %10 = vsyncpa [#allocation5], 0
    %s11 = scalar_lea.sflag [#allocation5], 1
    %12 = vsyncpa %s11, 0
    %13 = vsyncpa [#allocation8], 0
    %14 = vsyncpa [#allocation6], 0
    loop: start=0, step=1, limit=6
    $region2: #{tpu_custom_call.1} parent=1 // loop_pre_header
      _
    $region3: #{tpu_custom_call.1} parent=1 // loop_header
      %s16 = sphi 0, %s20
      %p17 = scmp.ge.s32.totalorder %s16, 6
      %s24 = sphi 0, %s24
      %s26 = sphi 0, %s24
      %s27 = sphi 0, %s26
      %s41 = sphi 0, %s27
      %s47 = sphi 0, %s49
      %s50 = sphi 0, %s47
      %s51 = sphi 0, %s50
      %s67 = sphi 0, %s51
      %s73 = sphi 0, %s75
      %s76 = sphi 0, %s73
      %s77 = sphi 0, %s76
      %s93 = sphi 0, %s77
      %s97 = sphi 0, %s97
      %s99 = sphi 0, %s97
      %s100 = sphi 0, %s99
      %s114 = sphi 0, %s100
      %s118 = sphi 0, %s118
      %s120 = sphi 0, %s118
      %s121 = sphi 0, %s120
      %s135 = sphi 0, %s121
      %s139 = sphi 0, %s139
      %s141 = sphi 0, %s139
      %s142 = sphi 0, %s141
      %s156 = sphi 0, %s142
    $region4: #{tpu_custom_call.1} parent=1 // loop_header_branch
      %19 = sbr.rel (%p17) target = $region8
    $region5: #{tpu_custom_call.1} parent=1 // loop_body
      %s21 = ssub.s32 %s16, 1
      %s22 = ssub.s32 %s16, 2
      %s23 = sadd.s32 %s16, 1
      %s25 = sadd.s32 %s24, 1
      %p28 = scmp.eq.s32.totalorder %s16, 3
      %p29 = scmp.ne.s32.totalorder %s24, %s26
      %p30 = scmp.eq.s32.totalorder %s16, 0
      %p31 = por %p29, %p30
      %p32 = scmp.ne.s32.totalorder %s24, %s26
      %p33 = scmp.eq.s32.totalorder %s21, 3
      %p34 = por %p32, %p33
      %p35 = scmp.ne.s32.totalorder %s26, %s27
      %p36 = scmp.eq.s32.totalorder %s21, 0
      %p37 = por %p35, %p36
      %p38 = scmp.ne.s32.totalorder %s26, %s27
      %p39 = scmp.eq.s32.totalorder %s22, 3
      %p40 = por %p38, %p39
      %p42 = scmp.ne.s32.totalorder %s27, %s41
      %p43 = scmp.eq.s32.totalorder %s22, 0
      %p44 = por %p42, %p43
      %s45 = ssub.s32 %s16, %s23
      %p46 = scmp.eq.s32.totalorder %s45, 0
      %s48 = sadd.s32 %s47, 1
      %s49 = scalar_select %p46, %s47, %s48
      %p52 = pneg %p46
      %p53 = scmp.eq.s32.totalorder %s16, 3
      %p54 = por %p52, %p53
      %p55 = scmp.ne.s32.totalorder %s47, %s50
      %p56 = scmp.eq.s32.totalorder %s16, 0
      %p57 = por %p55, %p56
      %p58 = scmp.ne.s32.totalorder %s47, %s50
      %p59 = scmp.eq.s32.totalorder %s21, 3
      %p60 = por %p58, %p59
      %p61 = scmp.ne.s32.totalorder %s50, %s51
      %p62 = scmp.eq.s32.totalorder %s21, 0
      %p63 = por %p61, %p62
      %p64 = scmp.ne.s32.totalorder %s50, %s51
      %p65 = scmp.eq.s32.totalorder %s22, 3
      %p66 = por %p64, %p65
      %p68 = scmp.ne.s32.totalorder %s51, %s67
      %p69 = scmp.eq.s32.totalorder %s22, 0
      %p70 = por %p68, %p69
      %s71 = ssub.s32 %s16, %s23
      %p72 = scmp.eq.s32.totalorder %s71, 0
      %s74 = sadd.s32 %s73, 1
      %s75 = scalar_select %p72, %s73, %s74
      %p78 = pneg %p72
      %p79 = scmp.eq.s32.totalorder %s16, 3
      %p80 = por %p78, %p79
      %p81 = scmp.ne.s32.totalorder %s73, %s76
      %p82 = scmp.eq.s32.totalorder %s16, 0
      %p83 = por %p81, %p82
      %p84 = scmp.ne.s32.totalorder %s73, %s76
      %p85 = scmp.eq.s32.totalorder %s21, 3
      %p86 = por %p84, %p85
      %p87 = scmp.ne.s32.totalorder %s76, %s77
      %p88 = scmp.eq.s32.totalorder %s21, 0
      %p89 = por %p87, %p88
      %p90 = scmp.ne.s32.totalorder %s76, %s77
      %p91 = scmp.eq.s32.totalorder %s22, 3
      %p92 = por %p90, %p91
      %p94 = scmp.ne.s32.totalorder %s77, %s93
      %p95 = scmp.eq.s32.totalorder %s22, 0
      %p96 = por %p94, %p95
      %s98 = sadd.s32 %s97, 1
      %p101 = scmp.eq.s32.totalorder %s16, 3
      %p102 = scmp.ne.s32.totalorder %s97, %s99
      %p103 = scmp.eq.s32.totalorder %s16, 0
      %p104 = por %p102, %p103
      %p105 = scmp.ne.s32.totalorder %s97, %s99
      %p106 = scmp.eq.s32.totalorder %s21, 3
      %p107 = por %p105, %p106
      %p108 = scmp.ne.s32.totalorder %s99, %s100
      %p109 = scmp.eq.s32.totalorder %s21, 0
      %p110 = por %p108, %p109
      %p111 = scmp.ne.s32.totalorder %s99, %s100
      %p112 = scmp.eq.s32.totalorder %s22, 3
      %p113 = por %p111, %p112
      %p115 = scmp.ne.s32.totalorder %s100, %s114
      %p116 = scmp.eq.s32.totalorder %s22, 0
      %p117 = por %p115, %p116
      %s119 = sadd.s32 %s118, 1
      %p122 = scmp.eq.s32.totalorder %s16, 3
      %p123 = scmp.ne.s32.totalorder %s118, %s120
      %p124 = scmp.eq.s32.totalorder %s16, 0
      %p125 = por %p123, %p124
      %p126 = scmp.ne.s32.totalorder %s118, %s120
      %p127 = scmp.eq.s32.totalorder %s21, 3
      %p128 = por %p126, %p127
      %p129 = scmp.ne.s32.totalorder %s120, %s121
      %p130 = scmp.eq.s32.totalorder %s21, 0
      %p131 = por %p129, %p130
      %p132 = scmp.ne.s32.totalorder %s120, %s121
      %p133 = scmp.eq.s32.totalorder %s22, 3
      %p134 = por %p132, %p133
      %p136 = scmp.ne.s32.totalorder %s121, %s135
      %p137 = scmp.eq.s32.totalorder %s22, 0
      %p138 = por %p136, %p137
      %s140 = sadd.s32 %s139, 1
      %p143 = scmp.eq.s32.totalorder %s16, 3
      %p144 = scmp.ne.s32.totalorder %s139, %s141
      %p145 = scmp.eq.s32.totalorder %s16, 0
      %p146 = por %p144, %p145
      %p147 = scmp.ne.s32.totalorder %s139, %s141
      %p148 = scmp.eq.s32.totalorder %s21, 3
      %p149 = por %p147, %p148
      %p150 = scmp.ne.s32.totalorder %s141, %s142
      %p151 = scmp.eq.s32.totalorder %s21, 0
      %p152 = por %p150, %p151
      %p153 = scmp.ne.s32.totalorder %s141, %s142
      %p154 = scmp.eq.s32.totalorder %s22, 3
      %p155 = por %p153, %p154
      %p157 = scmp.ne.s32.totalorder %s142, %s156
      %p158 = scmp.eq.s32.totalorder %s22, 0
      %p159 = por %p157, %p158
      %p160 = scmp.le.s32.totalorder 1, %s16
      %p161 = scmp.lt.s32.totalorder %s16, 5
      %p162 = pnand %p160, %p161
      %p163 = pneg %p162
      // Predicated region
      $region9: #{tpu_custom_call.1} parent=5 // pred_check
        _
      $region10: #{tpu_custom_call.1} parent=5 // pred_check_branch
        %165 = sbr.rel (%p162) target = $region12
      $region11: #{tpu_custom_call.1} parent=5 // pred_region
        %s166 = ssub.s32 %s16, 1
        // Predicated region
        $region13: #{tpu_custom_call.1} parent=11 // pred_check
          %p167 = pneg %p37
        $region14: #{tpu_custom_call.1} parent=11 // pred_check_branch
          %169 = sbr.rel (%p167) target = $region16
        $region15: #{tpu_custom_call.1} parent=11 // pred_region
          _
        $region16: #{tpu_custom_call.1} parent=11 // pred_fallthru
          _
        // Predicated region
        $region17: #{tpu_custom_call.1} parent=11 // pred_check
          %p170 = pneg %p110
        $region18: #{tpu_custom_call.1} parent=11 // pred_check_branch
          %172 = sbr.rel (%p170) target = $region20
        $region19: #{tpu_custom_call.1} parent=11 // pred_region
          _
        $region20: #{tpu_custom_call.1} parent=11 // pred_fallthru
          _
        // Predicated region
        $region21: #{tpu_custom_call.1} parent=11 // pred_check
          %p173 = pneg %p131
        $region22: #{tpu_custom_call.1} parent=11 // pred_check_branch
          %175 = sbr.rel (%p173) target = $region24
        $region23: #{tpu_custom_call.1} parent=11 // pred_region
          %s177 = ssub.s32 256, 256
          %178 = vsyncadd [#allocation8], %s177
          %s180 = sshll.u32 [#allocation7], 4
          %s181 = int_to_ptr.vmem [resolvable:$true] %s180
          %183 = dma.hbm_to_vmem [thread:$0]  %s4, 256, %s181, [#allocation8]
        $region24: #{tpu_custom_call.1} parent=11 // pred_fallthru
          _
      $region12: #{tpu_custom_call.1} parent=5 // pred_fallthru
        _
      %p184 = scmp.lt.s32.totalorder %s16, 4
      // Predicated region
      $region25: #{tpu_custom_call.1} parent=5 // pred_check
        %p185 = pneg %p184
      $region26: #{tpu_custom_call.1} parent=5 // pred_check_branch
        %187 = sbr.rel (%p185) target = $region28
      $region27: #{tpu_custom_call.1} parent=5 // pred_region
        // Predicated region
        $region29: #{tpu_custom_call.1} parent=27 // pred_check
          %p188 = pneg %p57
        $region30: #{tpu_custom_call.1} parent=27 // pred_check_branch
          %190 = sbr.rel (%p188) target = $region32
        $region31: #{tpu_custom_call.1} parent=27 // pred_region
          %s191 = sand.u32 %s47, 1
          %s192 = sand.u32 %s47, 1
          %s193 = smul.addr %s192, 512
          %s194 = scalar_lea.vmem [#allocation3], %s193
          %s195 = smul.u32 64, %s16
          %s196 = smul.addr %s195, 4
          %s197 = scalar_lea.vmem %s1, %s196
          // Predicated region
          $region33: #{tpu_custom_call.1} parent=31 // pred_check
            _
          $region34: #{tpu_custom_call.1} parent=31 // pred_check_branch
            %199 = sbr.rel (0) target = $region36
          $region35: #{tpu_custom_call.1} parent=31 // pred_region
            // Predicated region
            $region37: #{tpu_custom_call.1} parent=35 // pred_check
              _
            $region38: #{tpu_custom_call.1} parent=35 // pred_check_branch
              %201 = sbr.rel target = $region40
            $region39: #{tpu_custom_call.1} parent=35 // pred_region
              // Predicated region
              $region52: #{tpu_custom_call.1} parent=39 // pred_check
                _
              $region53: #{tpu_custom_call.1} parent=39 // pred_check_branch
                %470 = sbr.rel (0) target = $region55
              $region54: #{tpu_custom_call.1} parent=39 // pred_region
                loop: start=0, step=1, limit=1
                $region56: #{tpu_custom_call.1} parent=54 // loop_pre_header
                  _
                $region57: #{tpu_custom_call.1} parent=54 // loop_header
                  %s472 = sphi 0, %s476
                  %p473 = scmp.ge.s32.totalorder %s472, 1
                  %s477 = sphi %s197, %s197
                  %s478 = sphi %s194, %s194
                $region58: #{tpu_custom_call.1} parent=54 // loop_header_branch
                  %475 = sbr.rel (%p473) target = $region62
                $region59: #{tpu_custom_call.1} parent=54 // loop_body
                  _
                $region60: #{tpu_custom_call.1} parent=54 // loop_footer
                  %s476 = sadd.s32 1, %s472
                $region61: #{tpu_custom_call.1} parent=54 // loop_footer_branch
                  %471 = sbr.rel target = $region57
                $region62: #{tpu_custom_call.1} parent=54 // loop_exit
                  _
                loop: start=0, step=1, limit=1
                $region63: #{tpu_custom_call.1} parent=54 // loop_pre_header
                  _
                $region64: #{tpu_custom_call.1} parent=54 // loop_header
                  %s481 = sphi 0, %s485
                  %p482 = scmp.ge.s32.totalorder %s481, 1
                  %s486 = sphi %s197, %s197
                  %s487 = sphi %s194, %s194
                $region65: #{tpu_custom_call.1} parent=54 // loop_header_branch
                  %484 = sbr.rel (%p482) target = $region69
                $region66: #{tpu_custom_call.1} parent=54 // loop_body
                  %v488 = vld [vmem:[%s486] sm:$0xf]
                  %489 = vst [vmem:[%s487] sm:$0xf] %v488
                  %v490 = vld [vmem:[%s486 + $0x4] sm:$0xf]
                  %491 = vst [vmem:[%s487 + $0x4] sm:$0xf] %v490
                  %v492 = vld [vmem:[%s486 + $0x8] sm:$0xf]
                  %493 = vst [vmem:[%s487 + $0x8] sm:$0xf] %v492
                  %v494 = vld [vmem:[%s486 + $0xc] sm:$0xf]
                  %495 = vst [vmem:[%s487 + $0xc] sm:$0xf] %v494
                  %v496 = vld [vmem:[%s486 + $0x10] sm:$0xf]
                  %497 = vst [vmem:[%s487 + $0x10] sm:$0xf] %v496
                  %v498 = vld [vmem:[%s486 + $0x14] sm:$0xf]
                  %499 = vst [vmem:[%s487 + $0x14] sm:$0xf] %v498
                  %v500 = vld [vmem:[%s486 + $0x18] sm:$0xf]
                  %501 = vst [vmem:[%s487 + $0x18] sm:$0xf] %v500
                  %v502 = vld [vmem:[%s486 + $0x1c] sm:$0xf]
                  %503 = vst [vmem:[%s487 + $0x1c] sm:$0xf] %v502
                  %v504 = vld [vmem:[%s486 + $0x20] sm:$0xf]
                  %505 = vst [vmem:[%s487 + $0x20] sm:$0xf] %v504
                  %v506 = vld [vmem:[%s486 + $0x24] sm:$0xf]
                  %507 = vst [vmem:[%s487 + $0x24] sm:$0xf] %v506
                  %v508 = vld [vmem:[%s486 + $0x28] sm:$0xf]
                  %509 = vst [vmem:[%s487 + $0x28] sm:$0xf] %v508
                  %v510 = vld [vmem:[%s486 + $0x2c] sm:$0xf]
                  %511 = vst [vmem:[%s487 + $0x2c] sm:$0xf] %v510
                  %v512 = vld [vmem:[%s486 + $0x30] sm:$0xf]
                  %513 = vst [vmem:[%s487 + $0x30] sm:$0xf] %v512
                  %v514 = vld [vmem:[%s486 + $0x34] sm:$0xf]
                  %515 = vst [vmem:[%s487 + $0x34] sm:$0xf] %v514
                  %v516 = vld [vmem:[%s486 + $0x38] sm:$0xf]
                  %517 = vst [vmem:[%s487 + $0x38] sm:$0xf] %v516
                  %v518 = vld [vmem:[%s486 + $0x3c] sm:$0xf]
                  %519 = vst [vmem:[%s487 + $0x3c] sm:$0xf] %v518
                  %v520 = vld [vmem:[%s486 + $0x40] sm:$0xf]
                  %521 = vst [vmem:[%s487 + $0x40] sm:$0xf] %v520
                  %v522 = vld [vmem:[%s486 + $0x44] sm:$0xf]
                  %523 = vst [vmem:[%s487 + $0x44] sm:$0xf] %v522
                  %v524 = vld [vmem:[%s486 + $0x48] sm:$0xf]
                  %525 = vst [vmem:[%s487 + $0x48] sm:$0xf] %v524
                  %v526 = vld [vmem:[%s486 + $0x4c] sm:$0xf]
                  %527 = vst [vmem:[%s487 + $0x4c] sm:$0xf] %v526
                  %v528 = vld [vmem:[%s486 + $0x50] sm:$0xf]
                  %529 = vst [vmem:[%s487 + $0x50] sm:$0xf] %v528
                  %v530 = vld [vmem:[%s486 + $0x54] sm:$0xf]
                  %531 = vst [vmem:[%s487 + $0x54] sm:$0xf] %v530
                  %v532 = vld [vmem:[%s486 + $0x58] sm:$0xf]
                  %533 = vst [vmem:[%s487 + $0x58] sm:$0xf] %v532
                  %v534 = vld [vmem:[%s486 + $0x5c] sm:$0xf]
                  %535 = vst [vmem:[%s487 + $0x5c] sm:$0xf] %v534
                  %v536 = vld [vmem:[%s486 + $0x60] sm:$0xf]
                  %537 = vst [vmem:[%s487 + $0x60] sm:$0xf] %v536
                  %v538 = vld [vmem:[%s486 + $0x64] sm:$0xf]
                  %539 = vst [vmem:[%s487 + $0x64] sm:$0xf] %v538
                  %v540 = vld [vmem:[%s486 + $0x68] sm:$0xf]
                  %541 = vst [vmem:[%s487 + $0x68] sm:$0xf] %v540
                  %v542 = vld [vmem:[%s486 + $0x6c] sm:$0xf]
                  %543 = vst [vmem:[%s487 + $0x6c] sm:$0xf] %v542
                  %v544 = vld [vmem:[%s486 + $0x70] sm:$0xf]
                  %545 = vst [vmem:[%s487 + $0x70] sm:$0xf] %v544
                  %v546 = vld [vmem:[%s486 + $0x74] sm:$0xf]
                  %547 = vst [vmem:[%s487 + $0x74] sm:$0xf] %v546
                  %v548 = vld [vmem:[%s486 + $0x78] sm:$0xf]
                  %549 = vst [vmem:[%s487 + $0x78] sm:$0xf] %v548
                  %v550 = vld [vmem:[%s486 + $0x7c] sm:$0xf]
                  %551 = vst [vmem:[%s487 + $0x7c] sm:$0xf] %v550
                  %v552 = vld [vmem:[%s486 + $0x80] sm:$0xf]
                  %553 = vst [vmem:[%s487 + $0x80] sm:$0xf] %v552
                  %v554 = vld [vmem:[%s486 + $0x84] sm:$0xf]
                  %555 = vst [vmem:[%s487 + $0x84] sm:$0xf] %v554
                  %v556 = vld [vmem:[%s486 + $0x88] sm:$0xf]
                  %557 = vst [vmem:[%s487 + $0x88] sm:$0xf] %v556
                  %v558 = vld [vmem:[%s486 + $0x8c] sm:$0xf]
                  %559 = vst [vmem:[%s487 + $0x8c] sm:$0xf] %v558
                  %v560 = vld [vmem:[%s486 + $0x90] sm:$0xf]
                  %561 = vst [vmem:[%s487 + $0x90] sm:$0xf] %v560
                  %v562 = vld [vmem:[%s486 + $0x94] sm:$0xf]
                  %563 = vst [vmem:[%s487 + $0x94] sm:$0xf] %v562
                  %v564 = vld [vmem:[%s486 + $0x98] sm:$0xf]
                  %565 = vst [vmem:[%s487 + $0x98] sm:$0xf] %v564
                  %v566 = vld [vmem:[%s486 + $0x9c] sm:$0xf]
                  %567 = vst [vmem:[%s487 + $0x9c] sm:$0xf] %v566
                  %v568 = vld [vmem:[%s486 + $0xa0] sm:$0xf]
                  %569 = vst [vmem:[%s487 + $0xa0] sm:$0xf] %v568
                  %v570 = vld [vmem:[%s486 + $0xa4] sm:$0xf]
                  %571 = vst [vmem:[%s487 + $0xa4] sm:$0xf] %v570
                  %v572 = vld [vmem:[%s486 + $0xa8] sm:$0xf]
                  %573 = vst [vmem:[%s487 + $0xa8] sm:$0xf] %v572
                  %v574 = vld [vmem:[%s486 + $0xac] sm:$0xf]
                  %575 = vst [vmem:[%s487 + $0xac] sm:$0xf] %v574
                  %v576 = vld [vmem:[%s486 + $0xb0] sm:$0xf]
                  %577 = vst [vmem:[%s487 + $0xb0] sm:$0xf] %v576
                  %v578 = vld [vmem:[%s486 + $0xb4] sm:$0xf]
                  %579 = vst [vmem:[%s487 + $0xb4] sm:$0xf] %v578
                  %v580 = vld [vmem:[%s486 + $0xb8] sm:$0xf]
                  %581 = vst [vmem:[%s487 + $0xb8] sm:$0xf] %v580
                  %v582 = vld [vmem:[%s486 + $0xbc] sm:$0xf]
                  %583 = vst [vmem:[%s487 + $0xbc] sm:$0xf] %v582
                  %v584 = vld [vmem:[%s486 + $0xc0] sm:$0xf]
                  %585 = vst [vmem:[%s487 + $0xc0] sm:$0xf] %v584
                  %v586 = vld [vmem:[%s486 + $0xc4] sm:$0xf]
                  %587 = vst [vmem:[%s487 + $0xc4] sm:$0xf] %v586
                  %v588 = vld [vmem:[%s486 + $0xc8] sm:$0xf]
                  %589 = vst [vmem:[%s487 + $0xc8] sm:$0xf] %v588
                  %v590 = vld [vmem:[%s486 + $0xcc] sm:$0xf]
                  %591 = vst [vmem:[%s487 + $0xcc] sm:$0xf] %v590
                  %v592 = vld [vmem:[%s486 + $0xd0] sm:$0xf]
                  %593 = vst [vmem:[%s487 + $0xd0] sm:$0xf] %v592
                  %v594 = vld [vmem:[%s486 + $0xd4] sm:$0xf]
                  %595 = vst [vmem:[%s487 + $0xd4] sm:$0xf] %v594
                  %v596 = vld [vmem:[%s486 + $0xd8] sm:$0xf]
                  %597 = vst [vmem:[%s487 + $0xd8] sm:$0xf] %v596
                  %v598 = vld [vmem:[%s486 + $0xdc] sm:$0xf]
                  %599 = vst [vmem:[%s487 + $0xdc] sm:$0xf] %v598
                  %v600 = vld [vmem:[%s486 + $0xe0] sm:$0xf]
                  %601 = vst [vmem:[%s487 + $0xe0] sm:$0xf] %v600
                  %v602 = vld [vmem:[%s486 + $0xe4] sm:$0xf]
                  %603 = vst [vmem:[%s487 + $0xe4] sm:$0xf] %v602
                  %v604 = vld [vmem:[%s486 + $0xe8] sm:$0xf]
                  %605 = vst [vmem:[%s487 + $0xe8] sm:$0xf] %v604
                  %v606 = vld [vmem:[%s486 + $0xec] sm:$0xf]
                  %607 = vst [vmem:[%s487 + $0xec] sm:$0xf] %v606
                  %v608 = vld [vmem:[%s486 + $0xf0] sm:$0xf]
                  %609 = vst [vmem:[%s487 + $0xf0] sm:$0xf] %v608
                  %v610 = vld [vmem:[%s486 + $0xf4] sm:$0xf]
                  %611 = vst [vmem:[%s487 + $0xf4] sm:$0xf] %v610
                  %v612 = vld [vmem:[%s486 + $0xf8] sm:$0xf]
                  %613 = vst [vmem:[%s487 + $0xf8] sm:$0xf] %v612
                  %v614 = vld [vmem:[%s486 + $0xfc] sm:$0xf]
                  %615 = vst [vmem:[%s487 + $0xfc] sm:$0xf] %v614
                  %v616 = vld [vmem:[%s486 + $0x400] sm:$0xf]
                  %617 = vst [vmem:[%s487 + $0x100] sm:$0xf] %v616
                  %v618 = vld [vmem:[%s486 + $0x404] sm:$0xf]
                  %619 = vst [vmem:[%s487 + $0x104] sm:$0xf] %v618
                  %v620 = vld [vmem:[%s486 + $0x408] sm:$0xf]
                  %621 = vst [vmem:[%s487 + $0x108] sm:$0xf] %v620
                  %v622 = vld [vmem:[%s486 + $0x40c] sm:$0xf]
                  %623 = vst [vmem:[%s487 + $0x10c] sm:$0xf] %v622
                  %v624 = vld [vmem:[%s486 + $0x410] sm:$0xf]
                  %625 = vst [vmem:[%s487 + $0x110] sm:$0xf] %v624
                  %v626 = vld [vmem:[%s486 + $0x414] sm:$0xf]
                  %627 = vst [vmem:[%s487 + $0x114] sm:$0xf] %v626
                  %v628 = vld [vmem:[%s486 + $0x418] sm:$0xf]
                  %629 = vst [vmem:[%s487 + $0x118] sm:$0xf] %v628
                  %v630 = vld [vmem:[%s486 + $0x41c] sm:$0xf]
                  %631 = vst [vmem:[%s487 + $0x11c] sm:$0xf] %v630
                  %v632 = vld [vmem:[%s486 + $0x420] sm:$0xf]
                  %633 = vst [vmem:[%s487 + $0x120] sm:$0xf] %v632
                  %v634 = vld [vmem:[%s486 + $0x424] sm:$0xf]
                  %635 = vst [vmem:[%s487 + $0x124] sm:$0xf] %v634
                  %v636 = vld [vmem:[%s486 + $0x428] sm:$0xf]
                  %637 = vst [vmem:[%s487 + $0x128] sm:$0xf] %v636
                  %v638 = vld [vmem:[%s486 + $0x42c] sm:$0xf]
                  %639 = vst [vmem:[%s487 + $0x12c] sm:$0xf] %v638
                  %v640 = vld [vmem:[%s486 + $0x430] sm:$0xf]
                  %641 = vst [vmem:[%s487 + $0x130] sm:$0xf] %v640
                  %v642 = vld [vmem:[%s486 + $0x434] sm:$0xf]
                  %643 = vst [vmem:[%s487 + $0x134] sm:$0xf] %v642
                  %v644 = vld [vmem:[%s486 + $0x438] sm:$0xf]
                  %645 = vst [vmem:[%s487 + $0x138] sm:$0xf] %v644
                  %v646 = vld [vmem:[%s486 + $0x43c] sm:$0xf]
                  %647 = vst [vmem:[%s487 + $0x13c] sm:$0xf] %v646
                  %v648 = vld [vmem:[%s486 + $0x440] sm:$0xf]
                  %649 = vst [vmem:[%s487 + $0x140] sm:$0xf] %v648
                  %v650 = vld [vmem:[%s486 + $0x444] sm:$0xf]
                  %651 = vst [vmem:[%s487 + $0x144] sm:$0xf] %v650
                  %v652 = vld [vmem:[%s486 + $0x448] sm:$0xf]
                  %653 = vst [vmem:[%s487 + $0x148] sm:$0xf] %v652
                  %v654 = vld [vmem:[%s486 + $0x44c] sm:$0xf]
                  %655 = vst [vmem:[%s487 + $0x14c] sm:$0xf] %v654
                  %v656 = vld [vmem:[%s486 + $0x450] sm:$0xf]
                  %657 = vst [vmem:[%s487 + $0x150] sm:$0xf] %v656
                  %v658 = vld [vmem:[%s486 + $0x454] sm:$0xf]
                  %659 = vst [vmem:[%s487 + $0x154] sm:$0xf] %v658
                  %v660 = vld [vmem:[%s486 + $0x458] sm:$0xf]
                  %661 = vst [vmem:[%s487 + $0x158] sm:$0xf] %v660
                  %v662 = vld [vmem:[%s486 + $0x45c] sm:$0xf]
                  %663 = vst [vmem:[%s487 + $0x15c] sm:$0xf] %v662
                  %v664 = vld [vmem:[%s486 + $0x460] sm:$0xf]
                  %665 = vst [vmem:[%s487 + $0x160] sm:$0xf] %v664
                  %v666 = vld [vmem:[%s486 + $0x464] sm:$0xf]
                  %667 = vst [vmem:[%s487 + $0x164] sm:$0xf] %v666
                  %v668 = vld [vmem:[%s486 + $0x468] sm:$0xf]
                  %669 = vst [vmem:[%s487 + $0x168] sm:$0xf] %v668
                  %v670 = vld [vmem:[%s486 + $0x46c] sm:$0xf]
                  %671 = vst [vmem:[%s487 + $0x16c] sm:$0xf] %v670
                  %v672 = vld [vmem:[%s486 + $0x470] sm:$0xf]
                  %673 = vst [vmem:[%s487 + $0x170] sm:$0xf] %v672
                  %v674 = vld [vmem:[%s486 + $0x474] sm:$0xf]
                  %675 = vst [vmem:[%s487 + $0x174] sm:$0xf] %v674
                  %v676 = vld [vmem:[%s486 + $0x478] sm:$0xf]
                  %677 = vst [vmem:[%s487 + $0x178] sm:$0xf] %v676
                  %v678 = vld [vmem:[%s486 + $0x47c] sm:$0xf]
                  %679 = vst [vmem:[%s487 + $0x17c] sm:$0xf] %v678
                  %v680 = vld [vmem:[%s486 + $0x480] sm:$0xf]
                  %681 = vst [vmem:[%s487 + $0x180] sm:$0xf] %v680
                  %v682 = vld [vmem:[%s486 + $0x484] sm:$0xf]
                  %683 = vst [vmem:[%s487 + $0x184] sm:$0xf] %v682
                  %v684 = vld [vmem:[%s486 + $0x488] sm:$0xf]
                  %685 = vst [vmem:[%s487 + $0x188] sm:$0xf] %v684
                  %v686 = vld [vmem:[%s486 + $0x48c] sm:$0xf]
                  %687 = vst [vmem:[%s487 + $0x18c] sm:$0xf] %v686
                  %v688 = vld [vmem:[%s486 + $0x490] sm:$0xf]
                  %689 = vst [vmem:[%s487 + $0x190] sm:$0xf] %v688
                  %v690 = vld [vmem:[%s486 + $0x494] sm:$0xf]
                  %691 = vst [vmem:[%s487 + $0x194] sm:$0xf] %v690
                  %v692 = vld [vmem:[%s486 + $0x498] sm:$0xf]
                  %693 = vst [vmem:[%s487 + $0x198] sm:$0xf] %v692
                  %v694 = vld [vmem:[%s486 + $0x49c] sm:$0xf]
                  %695 = vst [vmem:[%s487 + $0x19c] sm:$0xf] %v694
                  %v696 = vld [vmem:[%s486 + $0x4a0] sm:$0xf]
                  %697 = vst [vmem:[%s487 + $0x1a0] sm:$0xf] %v696
                  %v698 = vld [vmem:[%s486 + $0x4a4] sm:$0xf]
                  %699 = vst [vmem:[%s487 + $0x1a4] sm:$0xf] %v698
                  %v700 = vld [vmem:[%s486 + $0x4a8] sm:$0xf]
                  %701 = vst [vmem:[%s487 + $0x1a8] sm:$0xf] %v700
                  %v702 = vld [vmem:[%s486 + $0x4ac] sm:$0xf]
                  %703 = vst [vmem:[%s487 + $0x1ac] sm:$0xf] %v702
                  %v704 = vld [vmem:[%s486 + $0x4b0] sm:$0xf]
                  %705 = vst [vmem:[%s487 + $0x1b0] sm:$0xf] %v704
                  %v706 = vld [vmem:[%s486 + $0x4b4] sm:$0xf]
                  %707 = vst [vmem:[%s487 + $0x1b4] sm:$0xf] %v706
                  %v708 = vld [vmem:[%s486 + $0x4b8] sm:$0xf]
                  %709 = vst [vmem:[%s487 + $0x1b8] sm:$0xf] %v708
                  %v710 = vld [vmem:[%s486 + $0x4bc] sm:$0xf]
                  %711 = vst [vmem:[%s487 + $0x1bc] sm:$0xf] %v710
                  %v712 = vld [vmem:[%s486 + $0x4c0] sm:$0xf]
                  %713 = vst [vmem:[%s487 + $0x1c0] sm:$0xf] %v712
                  %v714 = vld [vmem:[%s486 + $0x4c4] sm:$0xf]
                  %715 = vst [vmem:[%s487 + $0x1c4] sm:$0xf] %v714
                  %v716 = vld [vmem:[%s486 + $0x4c8] sm:$0xf]
                  %717 = vst [vmem:[%s487 + $0x1c8] sm:$0xf] %v716
                  %v718 = vld [vmem:[%s486 + $0x4cc] sm:$0xf]
                  %719 = vst [vmem:[%s487 + $0x1cc] sm:$0xf] %v718
                  %v720 = vld [vmem:[%s486 + $0x4d0] sm:$0xf]
                  %721 = vst [vmem:[%s487 + $0x1d0] sm:$0xf] %v720
                  %v722 = vld [vmem:[%s486 + $0x4d4] sm:$0xf]
                  %723 = vst [vmem:[%s487 + $0x1d4] sm:$0xf] %v722
                  %v724 = vld [vmem:[%s486 + $0x4d8] sm:$0xf]
                  %725 = vst [vmem:[%s487 + $0x1d8] sm:$0xf] %v724
                  %v726 = vld [vmem:[%s486 + $0x4dc] sm:$0xf]
                  %727 = vst [vmem:[%s487 + $0x1dc] sm:$0xf] %v726
                  %v728 = vld [vmem:[%s486 + $0x4e0] sm:$0xf]
                  %729 = vst [vmem:[%s487 + $0x1e0] sm:$0xf] %v728
                  %v730 = vld [vmem:[%s486 + $0x4e4] sm:$0xf]
                  %731 = vst [vmem:[%s487 + $0x1e4] sm:$0xf] %v730
                  %v732 = vld [vmem:[%s486 + $0x4e8] sm:$0xf]
                  %733 = vst [vmem:[%s487 + $0x1e8] sm:$0xf] %v732
                  %v734 = vld [vmem:[%s486 + $0x4ec] sm:$0xf]
                  %735 = vst [vmem:[%s487 + $0x1ec] sm:$0xf] %v734
                  %v736 = vld [vmem:[%s486 + $0x4f0] sm:$0xf]
                  %737 = vst [vmem:[%s487 + $0x1f0] sm:$0xf] %v736
                  %v738 = vld [vmem:[%s486 + $0x4f4] sm:$0xf]
                  %739 = vst [vmem:[%s487 + $0x1f4] sm:$0xf] %v738
                  %v740 = vld [vmem:[%s486 + $0x4f8] sm:$0xf]
                  %741 = vst [vmem:[%s487 + $0x1f8] sm:$0xf] %v740
                  %v742 = vld [vmem:[%s486 + $0x4fc] sm:$0xf]
                  %743 = vst [vmem:[%s487 + $0x1fc] sm:$0xf] %v742
                $region67: #{tpu_custom_call.1} parent=54 // loop_footer
                  %s485 = sadd.s32 1, %s481
                $region68: #{tpu_custom_call.1} parent=54 // loop_footer_branch
                  %480 = sbr.rel target = $region64
                $region69: #{tpu_custom_call.1} parent=54 // loop_exit
                  _
              $region55: #{tpu_custom_call.1} parent=39 // pred_fallthru
                _
            $region40: #{tpu_custom_call.1} parent=35 // pred_fallthru
              _
            // Predicated region
            $region41: #{tpu_custom_call.1} parent=35 // pred_check
              _
            $region42: #{tpu_custom_call.1} parent=35 // pred_check_branch
              %203 = sbr.rel (0) target = $region44
            $region43: #{tpu_custom_call.1} parent=35 // pred_region
              loop: start=0, step=1, limit=1
              $region45: #{tpu_custom_call.1} parent=43 // loop_pre_header
                _
              $region46: #{tpu_custom_call.1} parent=43 // loop_header
                %s206 = sphi 0, %s210
                %p207 = scmp.ge.s32.totalorder %s206, 1
                %s211 = sphi %s197, %s197
                %s212 = sphi %s194, %s194
              $region47: #{tpu_custom_call.1} parent=43 // loop_header_branch
                %209 = sbr.rel (%p207) target = $region51
              $region48: #{tpu_custom_call.1} parent=43 // loop_body
                %v213 = vld [vmem:[%s211] sm:$0xf]
                %214 = vst [vmem:[%s212] sm:$0xf] %v213
                %v215 = vld [vmem:[%s211 + $0x4] sm:$0xf]
                %216 = vst [vmem:[%s212 + $0x4] sm:$0xf] %v215
                %v217 = vld [vmem:[%s211 + $0x8] sm:$0xf]
                %218 = vst [vmem:[%s212 + $0x8] sm:$0xf] %v217
                %v219 = vld [vmem:[%s211 + $0xc] sm:$0xf]
                %220 = vst [vmem:[%s212 + $0xc] sm:$0xf] %v219
                %v221 = vld [vmem:[%s211 + $0x10] sm:$0xf]
                %222 = vst [vmem:[%s212 + $0x10] sm:$0xf] %v221
                %v223 = vld [vmem:[%s211 + $0x14] sm:$0xf]
                %224 = vst [vmem:[%s212 + $0x14] sm:$0xf] %v223
                %v225 = vld [vmem:[%s211 + $0x18] sm:$0xf]
                %226 = vst [vmem:[%s212 + $0x18] sm:$0xf] %v225
                %v227 = vld [vmem:[%s211 + $0x1c] sm:$0xf]
                %228 = vst [vmem:[%s212 + $0x1c] sm:$0xf] %v227
                %v229 = vld [vmem:[%s211 + $0x20] sm:$0xf]
                %230 = vst [vmem:[%s212 + $0x20] sm:$0xf] %v229
                %v231 = vld [vmem:[%s211 + $0x24] sm:$0xf]
                %232 = vst [vmem:[%s212 + $0x24] sm:$0xf] %v231
                %v233 = vld [vmem:[%s211 + $0x28] sm:$0xf]
                %234 = vst [vmem:[%s212 + $0x28] sm:$0xf] %v233
                %v235 = vld [vmem:[%s211 + $0x2c] sm:$0xf]
                %236 = vst [vmem:[%s212 + $0x2c] sm:$0xf] %v235
                %v237 = vld [vmem:[%s211 + $0x30] sm:$0xf]
                %238 = vst [vmem:[%s212 + $0x30] sm:$0xf] %v237
                %v239 = vld [vmem:[%s211 + $0x34] sm:$0xf]
                %240 = vst [vmem:[%s212 + $0x34] sm:$0xf] %v239
                %v241 = vld [vmem:[%s211 + $0x38] sm:$0xf]
                %242 = vst [vmem:[%s212 + $0x38] sm:$0xf] %v241
                %v243 = vld [vmem:[%s211 + $0x3c] sm:$0xf]
                %244 = vst [vmem:[%s212 + $0x3c] sm:$0xf] %v243
                %v245 = vld [vmem:[%s211 + $0x40] sm:$0xf]
                %246 = vst [vmem:[%s212 + $0x40] sm:$0xf] %v245
                %v247 = vld [vmem:[%s211 + $0x44] sm:$0xf]
                %248 = vst [vmem:[%s212 + $0x44] sm:$0xf] %v247
                %v249 = vld [vmem:[%s211 + $0x48] sm:$0xf]
                %250 = vst [vmem:[%s212 + $0x48] sm:$0xf] %v249
                %v251 = vld [vmem:[%s211 + $0x4c] sm:$0xf]
                %252 = vst [vmem:[%s212 + $0x4c] sm:$0xf] %v251
                %v253 = vld [vmem:[%s211 + $0x50] sm:$0xf]
                %254 = vst [vmem:[%s212 + $0x50] sm:$0xf] %v253
                %v255 = vld [vmem:[%s211 + $0x54] sm:$0xf]
                %256 = vst [vmem:[%s212 + $0x54] sm:$0xf] %v255
                %v257 = vld [vmem:[%s211 + $0x58] sm:$0xf]
                %258 = vst [vmem:[%s212 + $0x58] sm:$0xf] %v257
                %v259 = vld [vmem:[%s211 + $0x5c] sm:$0xf]
                %260 = vst [vmem:[%s212 + $0x5c] sm:$0xf] %v259
                %v261 = vld [vmem:[%s211 + $0x60] sm:$0xf]
                %262 = vst [vmem:[%s212 + $0x60] sm:$0xf] %v261
                %v263 = vld [vmem:[%s211 + $0x64] sm:$0xf]
                %264 = vst [vmem:[%s212 + $0x64] sm:$0xf] %v263
                %v265 = vld [vmem:[%s211 + $0x68] sm:$0xf]
                %266 = vst [vmem:[%s212 + $0x68] sm:$0xf] %v265
                %v267 = vld [vmem:[%s211 + $0x6c] sm:$0xf]
                %268 = vst [vmem:[%s212 + $0x6c] sm:$0xf] %v267
                %v269 = vld [vmem:[%s211 + $0x70] sm:$0xf]
                %270 = vst [vmem:[%s212 + $0x70] sm:$0xf] %v269
                %v271 = vld [vmem:[%s211 + $0x74] sm:$0xf]
                %272 = vst [vmem:[%s212 + $0x74] sm:$0xf] %v271
                %v273 = vld [vmem:[%s211 + $0x78] sm:$0xf]
                %274 = vst [vmem:[%s212 + $0x78] sm:$0xf] %v273
                %v275 = vld [vmem:[%s211 + $0x7c] sm:$0xf]
                %276 = vst [vmem:[%s212 + $0x7c] sm:$0xf] %v275
                %v277 = vld [vmem:[%s211 + $0x80] sm:$0xf]
                %278 = vst [vmem:[%s212 + $0x80] sm:$0xf] %v277
                %v279 = vld [vmem:[%s211 + $0x84] sm:$0xf]
                %280 = vst [vmem:[%s212 + $0x84] sm:$0xf] %v279
                %v281 = vld [vmem:[%s211 + $0x88] sm:$0xf]
                %282 = vst [vmem:[%s212 + $0x88] sm:$0xf] %v281
                %v283 = vld [vmem:[%s211 + $0x8c] sm:$0xf]
                %284 = vst [vmem:[%s212 + $0x8c] sm:$0xf] %v283
                %v285 = vld [vmem:[%s211 + $0x90] sm:$0xf]
                %286 = vst [vmem:[%s212 + $0x90] sm:$0xf] %v285
                %v287 = vld [vmem:[%s211 + $0x94] sm:$0xf]
                %288 = vst [vmem:[%s212 + $0x94] sm:$0xf] %v287
                %v289 = vld [vmem:[%s211 + $0x98] sm:$0xf]
                %290 = vst [vmem:[%s212 + $0x98] sm:$0xf] %v289
                %v291 = vld [vmem:[%s211 + $0x9c] sm:$0xf]
                %292 = vst [vmem:[%s212 + $0x9c] sm:$0xf] %v291
                %v293 = vld [vmem:[%s211 + $0xa0] sm:$0xf]
                %294 = vst [vmem:[%s212 + $0xa0] sm:$0xf] %v293
                %v295 = vld [vmem:[%s211 + $0xa4] sm:$0xf]
                %296 = vst [vmem:[%s212 + $0xa4] sm:$0xf] %v295
                %v297 = vld [vmem:[%s211 + $0xa8] sm:$0xf]
                %298 = vst [vmem:[%s212 + $0xa8] sm:$0xf] %v297
                %v299 = vld [vmem:[%s211 + $0xac] sm:$0xf]
                %300 = vst [vmem:[%s212 + $0xac] sm:$0xf] %v299
                %v301 = vld [vmem:[%s211 + $0xb0] sm:$0xf]
                %302 = vst [vmem:[%s212 + $0xb0] sm:$0xf] %v301
                %v303 = vld [vmem:[%s211 + $0xb4] sm:$0xf]
                %304 = vst [vmem:[%s212 + $0xb4] sm:$0xf] %v303
                %v305 = vld [vmem:[%s211 + $0xb8] sm:$0xf]
                %306 = vst [vmem:[%s212 + $0xb8] sm:$0xf] %v305
                %v307 = vld [vmem:[%s211 + $0xbc] sm:$0xf]
                %308 = vst [vmem:[%s212 + $0xbc] sm:$0xf] %v307
                %v309 = vld [vmem:[%s211 + $0xc0] sm:$0xf]
                %310 = vst [vmem:[%s212 + $0xc0] sm:$0xf] %v309
                %v311 = vld [vmem:[%s211 + $0xc4] sm:$0xf]
                %312 = vst [vmem:[%s212 + $0xc4] sm:$0xf] %v311
                %v313 = vld [vmem:[%s211 + $0xc8] sm:$0xf]
                %314 = vst [vmem:[%s212 + $0xc8] sm:$0xf] %v313
                %v315 = vld [vmem:[%s211 + $0xcc] sm:$0xf]
                %316 = vst [vmem:[%s212 + $0xcc] sm:$0xf] %v315
                %v317 = vld [vmem:[%s211 + $0xd0] sm:$0xf]
                %318 = vst [vmem:[%s212 + $0xd0] sm:$0xf] %v317
                %v319 = vld [vmem:[%s211 + $0xd4] sm:$0xf]
                %320 = vst [vmem:[%s212 + $0xd4] sm:$0xf] %v319
                %v321 = vld [vmem:[%s211 + $0xd8] sm:$0xf]
                %322 = vst [vmem:[%s212 + $0xd8] sm:$0xf] %v321
                %v323 = vld [vmem:[%s211 + $0xdc] sm:$0xf]
                %324 = vst [vmem:[%s212 + $0xdc] sm:$0xf] %v323
                %v325 = vld [vmem:[%s211 + $0xe0] sm:$0xf]
                %326 = vst [vmem:[%s212 + $0xe0] sm:$0xf] %v325
                %v327 = vld [vmem:[%s211 + $0xe4] sm:$0xf]
                %328 = vst [vmem:[%s212 + $0xe4] sm:$0xf] %v327
                %v329 = vld [vmem:[%s211 + $0xe8] sm:$0xf]
                %330 = vst [vmem:[%s212 + $0xe8] sm:$0xf] %v329
                %v331 = vld [vmem:[%s211 + $0xec] sm:$0xf]
                %332 = vst [vmem:[%s212 + $0xec] sm:$0xf] %v331
                %v333 = vld [vmem:[%s211 + $0xf0] sm:$0xf]
                %334 = vst [vmem:[%s212 + $0xf0] sm:$0xf] %v333
                %v335 = vld [vmem:[%s211 + $0xf4] sm:$0xf]
                %336 = vst [vmem:[%s212 + $0xf4] sm:$0xf] %v335
                %v337 = vld [vmem:[%s211 + $0xf8] sm:$0xf]
                %338 = vst [vmem:[%s212 + $0xf8] sm:$0xf] %v337
                %v339 = vld [vmem:[%s211 + $0xfc] sm:$0xf]
                %340 = vst [vmem:[%s212 + $0xfc] sm:$0xf] %v339
                %v341 = vld [vmem:[%s211 + $0x400] sm:$0xf]
                %342 = vst [vmem:[%s212 + $0x100] sm:$0xf] %v341
                %v343 = vld [vmem:[%s211 + $0x404] sm:$0xf]
                %344 = vst [vmem:[%s212 + $0x104] sm:$0xf] %v343
                %v345 = vld [vmem:[%s211 + $0x408] sm:$0xf]
                %346 = vst [vmem:[%s212 + $0x108] sm:$0xf] %v345
                %v347 = vld [vmem:[%s211 + $0x40c] sm:$0xf]
                %348 = vst [vmem:[%s212 + $0x10c] sm:$0xf] %v347
                %v349 = vld [vmem:[%s211 + $0x410] sm:$0xf]
                %350 = vst [vmem:[%s212 + $0x110] sm:$0xf] %v349
                %v351 = vld [vmem:[%s211 + $0x414] sm:$0xf]
                %352 = vst [vmem:[%s212 + $0x114] sm:$0xf] %v351
                %v353 = vld [vmem:[%s211 + $0x418] sm:$0xf]
                %354 = vst [vmem:[%s212 + $0x118] sm:$0xf] %v353
                %v355 = vld [vmem:[%s211 + $0x41c] sm:$0xf]
                %356 = vst [vmem:[%s212 + $0x11c] sm:$0xf] %v355
                %v357 = vld [vmem:[%s211 + $0x420] sm:$0xf]
                %358 = vst [vmem:[%s212 + $0x120] sm:$0xf] %v357
                %v359 = vld [vmem:[%s211 + $0x424] sm:$0xf]
                %360 = vst [vmem:[%s212 + $0x124] sm:$0xf] %v359
                %v361 = vld [vmem:[%s211 + $0x428] sm:$0xf]
                %362 = vst [vmem:[%s212 + $0x128] sm:$0xf] %v361
                %v363 = vld [vmem:[%s211 + $0x42c] sm:$0xf]
                %364 = vst [vmem:[%s212 + $0x12c] sm:$0xf] %v363
                %v365 = vld [vmem:[%s211 + $0x430] sm:$0xf]
                %366 = vst [vmem:[%s212 + $0x130] sm:$0xf] %v365
                %v367 = vld [vmem:[%s211 + $0x434] sm:$0xf]
                %368 = vst [vmem:[%s212 + $0x134] sm:$0xf] %v367
                %v369 = vld [vmem:[%s211 + $0x438] sm:$0xf]
                %370 = vst [vmem:[%s212 + $0x138] sm:$0xf] %v369
                %v371 = vld [vmem:[%s211 + $0x43c] sm:$0xf]
                %372 = vst [vmem:[%s212 + $0x13c] sm:$0xf] %v371
                %v373 = vld [vmem:[%s211 + $0x440] sm:$0xf]
                %374 = vst [vmem:[%s212 + $0x140] sm:$0xf] %v373
                %v375 = vld [vmem:[%s211 + $0x444] sm:$0xf]
                %376 = vst [vmem:[%s212 + $0x144] sm:$0xf] %v375
                %v377 = vld [vmem:[%s211 + $0x448] sm:$0xf]
                %378 = vst [vmem:[%s212 + $0x148] sm:$0xf] %v377
                %v379 = vld [vmem:[%s211 + $0x44c] sm:$0xf]
                %380 = vst [vmem:[%s212 + $0x14c] sm:$0xf] %v379
                %v381 = vld [vmem:[%s211 + $0x450] sm:$0xf]
                %382 = vst [vmem:[%s212 + $0x150] sm:$0xf] %v381
                %v383 = vld [vmem:[%s211 + $0x454] sm:$0xf]
                %384 = vst [vmem:[%s212 + $0x154] sm:$0xf] %v383
                %v385 = vld [vmem:[%s211 + $0x458] sm:$0xf]
                %386 = vst [vmem:[%s212 + $0x158] sm:$0xf] %v385
                %v387 = vld [vmem:[%s211 + $0x45c] sm:$0xf]
                %388 = vst [vmem:[%s212 + $0x15c] sm:$0xf] %v387
                %v389 = vld [vmem:[%s211 + $0x460] sm:$0xf]
                %390 = vst [vmem:[%s212 + $0x160] sm:$0xf] %v389
                %v391 = vld [vmem:[%s211 + $0x464] sm:$0xf]
                %392 = vst [vmem:[%s212 + $0x164] sm:$0xf] %v391
                %v393 = vld [vmem:[%s211 + $0x468] sm:$0xf]
                %394 = vst [vmem:[%s212 + $0x168] sm:$0xf] %v393
                %v395 = vld [vmem:[%s211 + $0x46c] sm:$0xf]
                %396 = vst [vmem:[%s212 + $0x16c] sm:$0xf] %v395
                %v397 = vld [vmem:[%s211 + $0x470] sm:$0xf]
                %398 = vst [vmem:[%s212 + $0x170] sm:$0xf] %v397
                %v399 = vld [vmem:[%s211 + $0x474] sm:$0xf]
                %400 = vst [vmem:[%s212 + $0x174] sm:$0xf] %v399
                %v401 = vld [vmem:[%s211 + $0x478] sm:$0xf]
                %402 = vst [vmem:[%s212 + $0x178] sm:$0xf] %v401
                %v403 = vld [vmem:[%s211 + $0x47c] sm:$0xf]
                %404 = vst [vmem:[%s212 + $0x17c] sm:$0xf] %v403
                %v405 = vld [vmem:[%s211 + $0x480] sm:$0xf]
                %406 = vst [vmem:[%s212 + $0x180] sm:$0xf] %v405
                %v407 = vld [vmem:[%s211 + $0x484] sm:$0xf]
                %408 = vst [vmem:[%s212 + $0x184] sm:$0xf] %v407
                %v409 = vld [vmem:[%s211 + $0x488] sm:$0xf]
                %410 = vst [vmem:[%s212 + $0x188] sm:$0xf] %v409
                %v411 = vld [vmem:[%s211 + $0x48c] sm:$0xf]
                %412 = vst [vmem:[%s212 + $0x18c] sm:$0xf] %v411
                %v413 = vld [vmem:[%s211 + $0x490] sm:$0xf]
                %414 = vst [vmem:[%s212 + $0x190] sm:$0xf] %v413
                %v415 = vld [vmem:[%s211 + $0x494] sm:$0xf]
                %416 = vst [vmem:[%s212 + $0x194] sm:$0xf] %v415
                %v417 = vld [vmem:[%s211 + $0x498] sm:$0xf]
                %418 = vst [vmem:[%s212 + $0x198] sm:$0xf] %v417
                %v419 = vld [vmem:[%s211 + $0x49c] sm:$0xf]
                %420 = vst [vmem:[%s212 + $0x19c] sm:$0xf] %v419
                %v421 = vld [vmem:[%s211 + $0x4a0] sm:$0xf]
                %422 = vst [vmem:[%s212 + $0x1a0] sm:$0xf] %v421
                %v423 = vld [vmem:[%s211 + $0x4a4] sm:$0xf]
                %424 = vst [vmem:[%s212 + $0x1a4] sm:$0xf] %v423
                %v425 = vld [vmem:[%s211 + $0x4a8] sm:$0xf]
                %426 = vst [vmem:[%s212 + $0x1a8] sm:$0xf] %v425
                %v427 = vld [vmem:[%s211 + $0x4ac] sm:$0xf]
                %428 = vst [vmem:[%s212 + $0x1ac] sm:$0xf] %v427
                %v429 = vld [vmem:[%s211 + $0x4b0] sm:$0xf]
                %430 = vst [vmem:[%s212 + $0x1b0] sm:$0xf] %v429
                %v431 = vld [vmem:[%s211 + $0x4b4] sm:$0xf]
                %432 = vst [vmem:[%s212 + $0x1b4] sm:$0xf] %v431
                %v433 = vld [vmem:[%s211 + $0x4b8] sm:$0xf]
                %434 = vst [vmem:[%s212 + $0x1b8] sm:$0xf] %v433
                %v435 = vld [vmem:[%s211 + $0x4bc] sm:$0xf]
                %436 = vst [vmem:[%s212 + $0x1bc] sm:$0xf] %v435
                %v437 = vld [vmem:[%s211 + $0x4c0] sm:$0xf]
                %438 = vst [vmem:[%s212 + $0x1c0] sm:$0xf] %v437
                %v439 = vld [vmem:[%s211 + $0x4c4] sm:$0xf]
                %440 = vst [vmem:[%s212 + $0x1c4] sm:$0xf] %v439
                %v441 = vld [vmem:[%s211 + $0x4c8] sm:$0xf]
                %442 = vst [vmem:[%s212 + $0x1c8] sm:$0xf] %v441
                %v443 = vld [vmem:[%s211 + $0x4cc] sm:$0xf]
                %444 = vst [vmem:[%s212 + $0x1cc] sm:$0xf] %v443
                %v445 = vld [vmem:[%s211 + $0x4d0] sm:$0xf]
                %446 = vst [vmem:[%s212 + $0x1d0] sm:$0xf] %v445
                %v447 = vld [vmem:[%s211 + $0x4d4] sm:$0xf]
                %448 = vst [vmem:[%s212 + $0x1d4] sm:$0xf] %v447
                %v449 = vld [vmem:[%s211 + $0x4d8] sm:$0xf]
                %450 = vst [vmem:[%s212 + $0x1d8] sm:$0xf] %v449
                %v451 = vld [vmem:[%s211 + $0x4dc] sm:$0xf]
                %452 = vst [vmem:[%s212 + $0x1dc] sm:$0xf] %v451
                %v453 = vld [vmem:[%s211 + $0x4e0] sm:$0xf]
                %454 = vst [vmem:[%s212 + $0x1e0] sm:$0xf] %v453
                %v455 = vld [vmem:[%s211 + $0x4e4] sm:$0xf]
                %456 = vst [vmem:[%s212 + $0x1e4] sm:$0xf] %v455
                %v457 = vld [vmem:[%s211 + $0x4e8] sm:$0xf]
                %458 = vst [vmem:[%s212 + $0x1e8] sm:$0xf] %v457
                %v459 = vld [vmem:[%s211 + $0x4ec] sm:$0xf]
                %460 = vst [vmem:[%s212 + $0x1ec] sm:$0xf] %v459
                %v461 = vld [vmem:[%s211 + $0x4f0] sm:$0xf]
                %462 = vst [vmem:[%s212 + $0x1f0] sm:$0xf] %v461
                %v463 = vld [vmem:[%s211 + $0x4f4] sm:$0xf]
                %464 = vst [vmem:[%s212 + $0x1f4] sm:$0xf] %v463
                %v465 = vld [vmem:[%s211 + $0x4f8] sm:$0xf]
                %466 = vst [vmem:[%s212 + $0x1f8] sm:$0xf] %v465
                %v467 = vld [vmem:[%s211 + $0x4fc] sm:$0xf]
                %468 = vst [vmem:[%s212 + $0x1fc] sm:$0xf] %v467
              $region49: #{tpu_custom_call.1} parent=43 // loop_footer
                %s210 = sadd.s32 1, %s206
              $region50: #{tpu_custom_call.1} parent=43 // loop_footer_branch
                %205 = sbr.rel target = $region46
              $region51: #{tpu_custom_call.1} parent=43 // loop_exit
                _
            $region44: #{tpu_custom_call.1} parent=35 // pred_fallthru
              _
          $region36: #{tpu_custom_call.1} parent=31 // pred_fallthru
            _
          %744 = vnop
        $region32: #{tpu_custom_call.1} parent=27 // pred_fallthru
          _
        // Predicated region
        $region70: #{tpu_custom_call.1} parent=27 // pred_check
          %p745 = pneg %p83
        $region71: #{tpu_custom_call.1} parent=27 // pred_check_branch
          %747 = sbr.rel (%p745) target = $region73
        $region72: #{tpu_custom_call.1} parent=27 // pred_region
          %s748 = sand.u32 %s73, 1
          %s749 = scalar_lea.sflag [#allocation5], %s748
          %s750 = sand.u32 %s73, 1
          %s751 = smul.addr %s750, 1024
          %s752 = scalar_lea.vmem [#allocation4], %s751
          %s753 = smul.u32 64, %s16
          %s755 = ssub.s32 16384, 16384
          %756 = vsyncadd %s749, %s755
          %s757 = smul.addr %s753, 4
          %s758 = smul.addr %s757, 64
          %s759 = scalar_lea.hbm %s2, %s758
          %s760 = sshll.u32 %s752, 4
          %s761 = int_to_ptr.vmem [resolvable:$true] %s760
          %766 = dma.hbm_to_vmem [thread:$0]  %s759, 16384, %s761, %s749, 256, 256, 16
        $region73: #{tpu_custom_call.1} parent=27 // pred_fallthru
          _
      $region28: #{tpu_custom_call.1} parent=5 // pred_fallthru
        _
      %p767 = scmp.le.s32.totalorder 1, %s16
      %p768 = scmp.lt.s32.totalorder %s16, 5
      %p769 = pnand %p767, %p768
      %p770 = pneg %p769
      // Predicated region
      $region74: #{tpu_custom_call.1} parent=5 // pred_check
        _
      $region75: #{tpu_custom_call.1} parent=5 // pred_check_branch
        %772 = sbr.rel (%p769) target = $region77
      $region76: #{tpu_custom_call.1} parent=5 // pred_region
        %s773 = ssub.s32 %s16, 1
        %s774 = sand.u32 %s50, 1
        %s775 = sand.u32 %s50, 1
        %s776 = smul.addr %s775, 512
        %s777 = scalar_lea.vmem [#allocation3], %s776
        // Predicated region
        $region78: #{tpu_custom_call.1} parent=76 // pred_check
          %p778 = pneg %p63
        $region79: #{tpu_custom_call.1} parent=76 // pred_check_branch
          %780 = sbr.rel (%p778) target = $region81
        $region80: #{tpu_custom_call.1} parent=76 // pred_region
          _
        $region81: #{tpu_custom_call.1} parent=76 // pred_fallthru
          _
        %s781 = sand.u32 %s76, 1
        %s782 = scalar_lea.sflag [#allocation5], %s781
        %s783 = sand.u32 %s76, 1
        %s784 = smul.addr %s783, 1024
        %s785 = scalar_lea.vmem [#allocation4], %s784
        // Predicated region
        $region82: #{tpu_custom_call.1} parent=76 // pred_check
          %p786 = pneg %p89
        $region83: #{tpu_custom_call.1} parent=76 // pred_check_branch
          %788 = sbr.rel (%p786) target = $region85
        $region84: #{tpu_custom_call.1} parent=76 // pred_region
          %789 = dma.done %s782, 16384
        $region85: #{tpu_custom_call.1} parent=76 // pred_fallthru
          _
        // Predicated region
        $region86: #{tpu_custom_call.1} parent=76 // pred_check
          %p790 = pneg %p131
        $region87: #{tpu_custom_call.1} parent=76 // pred_check_branch
          %792 = sbr.rel (%p790) target = $region89
        $region88: #{tpu_custom_call.1} parent=76 // pred_region
          %793 = dma.done [#allocation8], 256
        $region89: #{tpu_custom_call.1} parent=76 // pred_fallthru
          _
        %p794 = pneg %p37
        %p795 = pneg %p34
        %s796 = sand.u32 %s50, 1
        %s797 = sand.u32 %s50, 1
        %s798 = smul.addr %s797, 512
        %s799 = scalar_lea.vmem [#allocation3], %s798
        %p800 = pneg %p63
        %p801 = pneg %p60
        %s802 = sand.u32 %s76, 1
        %s803 = scalar_lea.sflag [#allocation5], %s802
        %s804 = sand.u32 %s76, 1
        %s805 = smul.addr %s804, 1024
        %s806 = scalar_lea.vmem [#allocation4], %s805
        %p807 = pneg %p89
        %p808 = pneg %p86
        %p809 = pneg %p110
        %p810 = pneg %p107
        %p811 = pneg %p131
        %p812 = pneg %p128
        %p813 = pneg %p152
        %p814 = pneg %p149
        %s815 = smul.u32 64, %s21
        %s816 = smul.u32 64, %s21
        %p817 = scmp.eq.s32.totalorder %s21, 0
        // Predicated region
        $region90: #{tpu_custom_call.1} parent=76 // pred_check
          %p818 = pneg %p817
        $region91: #{tpu_custom_call.1} parent=76 // pred_check_branch
          %820 = sbr.rel (%p818) target = $region93
        $region92: #{tpu_custom_call.1} parent=76 // pred_region
          %821 = vst [vmem:[#allocation2] sm:$0xff] 0.0
        $region93: #{tpu_custom_call.1} parent=76 // pred_fallthru
          _
        %v822 = vld [vmem:[%s777] sm:$0xf]
        %v823 = vld [vmem:[%s777 + $0x4] sm:$0xf]
        %v824 = vld [vmem:[%s777 + $0x8] sm:$0xf]
        %v825 = vld [vmem:[%s777 + $0xc] sm:$0xf]
        %v826 = vld [vmem:[%s777 + $0x10] sm:$0xf]
        %v827 = vld [vmem:[%s777 + $0x14] sm:$0xf]
        %v828 = vld [vmem:[%s777 + $0x18] sm:$0xf]
        %v829 = vld [vmem:[%s777 + $0x1c] sm:$0xf]
        %v830 = vld [vmem:[%s777 + $0x20] sm:$0xf]
        %v831 = vld [vmem:[%s777 + $0x24] sm:$0xf]
        %v832 = vld [vmem:[%s777 + $0x28] sm:$0xf]
        %v833 = vld [vmem:[%s777 + $0x2c] sm:$0xf]
        %v834 = vld [vmem:[%s777 + $0x30] sm:$0xf]
        %v835 = vld [vmem:[%s777 + $0x34] sm:$0xf]
        %v836 = vld [vmem:[%s777 + $0x38] sm:$0xf]
        %v837 = vld [vmem:[%s777 + $0x3c] sm:$0xf]
        %v838 = vld [vmem:[%s777 + $0x40] sm:$0xf]
        %v839 = vld [vmem:[%s777 + $0x44] sm:$0xf]
        %v840 = vld [vmem:[%s777 + $0x48] sm:$0xf]
        %v841 = vld [vmem:[%s777 + $0x4c] sm:$0xf]
        %v842 = vld [vmem:[%s777 + $0x50] sm:$0xf]
        %v843 = vld [vmem:[%s777 + $0x54] sm:$0xf]
        %v844 = vld [vmem:[%s777 + $0x58] sm:$0xf]
        %v845 = vld [vmem:[%s777 + $0x5c] sm:$0xf]
        %v846 = vld [vmem:[%s777 + $0x60] sm:$0xf]
        %v847 = vld [vmem:[%s777 + $0x64] sm:$0xf]
        %v848 = vld [vmem:[%s777 + $0x68] sm:$0xf]
        %v849 = vld [vmem:[%s777 + $0x6c] sm:$0xf]
        %v850 = vld [vmem:[%s777 + $0x70] sm:$0xf]
        %v851 = vld [vmem:[%s777 + $0x74] sm:$0xf]
        %v852 = vld [vmem:[%s777 + $0x78] sm:$0xf]
        %v853 = vld [vmem:[%s777 + $0x7c] sm:$0xf]
        %v854 = vld [vmem:[%s777 + $0x80] sm:$0xf]
        %v855 = vld [vmem:[%s777 + $0x84] sm:$0xf]
        %v856 = vld [vmem:[%s777 + $0x88] sm:$0xf]
        %v857 = vld [vmem:[%s777 + $0x8c] sm:$0xf]
        %v858 = vld [vmem:[%s777 + $0x90] sm:$0xf]
        %v859 = vld [vmem:[%s777 + $0x94] sm:$0xf]
        %v860 = vld [vmem:[%s777 + $0x98] sm:$0xf]
        %v861 = vld [vmem:[%s777 + $0x9c] sm:$0xf]
        %v862 = vld [vmem:[%s777 + $0xa0] sm:$0xf]
        %v863 = vld [vmem:[%s777 + $0xa4] sm:$0xf]
        %v864 = vld [vmem:[%s777 + $0xa8] sm:$0xf]
        %v865 = vld [vmem:[%s777 + $0xac] sm:$0xf]
        %v866 = vld [vmem:[%s777 + $0xb0] sm:$0xf]
        %v867 = vld [vmem:[%s777 + $0xb4] sm:$0xf]
        %v868 = vld [vmem:[%s777 + $0xb8] sm:$0xf]
        %v869 = vld [vmem:[%s777 + $0xbc] sm:$0xf]
        %v870 = vld [vmem:[%s777 + $0xc0] sm:$0xf]
        %v871 = vld [vmem:[%s777 + $0xc4] sm:$0xf]
        %v872 = vld [vmem:[%s777 + $0xc8] sm:$0xf]
        %v873 = vld [vmem:[%s777 + $0xcc] sm:$0xf]
        %v874 = vld [vmem:[%s777 + $0xd0] sm:$0xf]
        %v875 = vld [vmem:[%s777 + $0xd4] sm:$0xf]
        %v876 = vld [vmem:[%s777 + $0xd8] sm:$0xf]
        %v877 = vld [vmem:[%s777 + $0xdc] sm:$0xf]
        %v878 = vld [vmem:[%s777 + $0xe0] sm:$0xf]
        %v879 = vld [vmem:[%s777 + $0xe4] sm:$0xf]
        %v880 = vld [vmem:[%s777 + $0xe8] sm:$0xf]
        %v881 = vld [vmem:[%s777 + $0xec] sm:$0xf]
        %v882 = vld [vmem:[%s777 + $0xf0] sm:$0xf]
        %v883 = vld [vmem:[%s777 + $0xf4] sm:$0xf]
        %v884 = vld [vmem:[%s777 + $0xf8] sm:$0xf]
        %v885 = vld [vmem:[%s777 + $0xfc] sm:$0xf]
        %v886 = vld [vmem:[%s777 + $0x100] sm:$0xf]
        %v887 = vld [vmem:[%s777 + $0x104] sm:$0xf]
        %v888 = vld [vmem:[%s777 + $0x108] sm:$0xf]
        %v889 = vld [vmem:[%s777 + $0x10c] sm:$0xf]
        %v890 = vld [vmem:[%s777 + $0x110] sm:$0xf]
        %v891 = vld [vmem:[%s777 + $0x114] sm:$0xf]
        %v892 = vld [vmem:[%s777 + $0x118] sm:$0xf]
        %v893 = vld [vmem:[%s777 + $0x11c] sm:$0xf]
        %v894 = vld [vmem:[%s777 + $0x120] sm:$0xf]
        %v895 = vld [vmem:[%s777 + $0x124] sm:$0xf]
        %v896 = vld [vmem:[%s777 + $0x128] sm:$0xf]
        %v897 = vld [vmem:[%s777 + $0x12c] sm:$0xf]
        %v898 = vld [vmem:[%s777 + $0x130] sm:$0xf]
        %v899 = vld [vmem:[%s777 + $0x134] sm:$0xf]
        %v900 = vld [vmem:[%s777 + $0x138] sm:$0xf]
        %v901 = vld [vmem:[%s777 + $0x13c] sm:$0xf]
        %v902 = vld [vmem:[%s777 + $0x140] sm:$0xf]
        %v903 = vld [vmem:[%s777 + $0x144] sm:$0xf]
        %v904 = vld [vmem:[%s777 + $0x148] sm:$0xf]
        %v905 = vld [vmem:[%s777 + $0x14c] sm:$0xf]
        %v906 = vld [vmem:[%s777 + $0x150] sm:$0xf]
        %v907 = vld [vmem:[%s777 + $0x154] sm:$0xf]
        %v908 = vld [vmem:[%s777 + $0x158] sm:$0xf]
        %v909 = vld [vmem:[%s777 + $0x15c] sm:$0xf]
        %v910 = vld [vmem:[%s777 + $0x160] sm:$0xf]
        %v911 = vld [vmem:[%s777 + $0x164] sm:$0xf]
        %v912 = vld [vmem:[%s777 + $0x168] sm:$0xf]
        %v913 = vld [vmem:[%s777 + $0x16c] sm:$0xf]
        %v914 = vld [vmem:[%s777 + $0x170] sm:$0xf]
        %v915 = vld [vmem:[%s777 + $0x174] sm:$0xf]
        %v916 = vld [vmem:[%s777 + $0x178] sm:$0xf]
        %v917 = vld [vmem:[%s777 + $0x17c] sm:$0xf]
        %v918 = vld [vmem:[%s777 + $0x180] sm:$0xf]
        %v919 = vld [vmem:[%s777 + $0x184] sm:$0xf]
        %v920 = vld [vmem:[%s777 + $0x188] sm:$0xf]
        %v921 = vld [vmem:[%s777 + $0x18c] sm:$0xf]
        %v922 = vld [vmem:[%s777 + $0x190] sm:$0xf]
        %v923 = vld [vmem:[%s777 + $0x194] sm:$0xf]
        %v924 = vld [vmem:[%s777 + $0x198] sm:$0xf]
        %v925 = vld [vmem:[%s777 + $0x19c] sm:$0xf]
        %v926 = vld [vmem:[%s777 + $0x1a0] sm:$0xf]
        %v927 = vld [vmem:[%s777 + $0x1a4] sm:$0xf]
        %v928 = vld [vmem:[%s777 + $0x1a8] sm:$0xf]
        %v929 = vld [vmem:[%s777 + $0x1ac] sm:$0xf]
        %v930 = vld [vmem:[%s777 + $0x1b0] sm:$0xf]
        %v931 = vld [vmem:[%s777 + $0x1b4] sm:$0xf]
        %v932 = vld [vmem:[%s777 + $0x1b8] sm:$0xf]
        %v933 = vld [vmem:[%s777 + $0x1bc] sm:$0xf]
        %v934 = vld [vmem:[%s777 + $0x1c0] sm:$0xf]
        %v935 = vld [vmem:[%s777 + $0x1c4] sm:$0xf]
        %v936 = vld [vmem:[%s777 + $0x1c8] sm:$0xf]
        %v937 = vld [vmem:[%s777 + $0x1cc] sm:$0xf]
        %v938 = vld [vmem:[%s777 + $0x1d0] sm:$0xf]
        %v939 = vld [vmem:[%s777 + $0x1d4] sm:$0xf]
        %v940 = vld [vmem:[%s777 + $0x1d8] sm:$0xf]
        %v941 = vld [vmem:[%s777 + $0x1dc] sm:$0xf]
        %v942 = vld [vmem:[%s777 + $0x1e0] sm:$0xf]
        %v943 = vld [vmem:[%s777 + $0x1e4] sm:$0xf]
        %v944 = vld [vmem:[%s777 + $0x1e8] sm:$0xf]
        %v945 = vld [vmem:[%s777 + $0x1ec] sm:$0xf]
        %v946 = vld [vmem:[%s777 + $0x1f0] sm:$0xf]
        %v947 = vld [vmem:[%s777 + $0x1f4] sm:$0xf]
        %v948 = vld [vmem:[%s777 + $0x1f8] sm:$0xf]
        %v949 = vld [vmem:[%s777 + $0x1fc] sm:$0xf]
        %v950 = vunpack.c.l.bf16 %v822
        %v951 = vunpack.c.l.bf16 %v823
        %v952 = vunpack.c.l.bf16 %v824
        %v953 = vunpack.c.l.bf16 %v825
        %v954 = vunpack.c.l.bf16 %v826
        %v955 = vunpack.c.l.bf16 %v827
        %v956 = vunpack.c.l.bf16 %v828
        %v957 = vunpack.c.l.bf16 %v829
        %v958 = vunpack.c.l.bf16 %v830
        %v959 = vunpack.c.l.bf16 %v831
        %v960 = vunpack.c.l.bf16 %v832
        %v961 = vunpack.c.l.bf16 %v833
        %v962 = vunpack.c.l.bf16 %v834
        %v963 = vunpack.c.l.bf16 %v835
        %v964 = vunpack.c.l.bf16 %v836
        %v965 = vunpack.c.l.bf16 %v837
        %v966 = vunpack.c.l.bf16 %v838
        %v967 = vunpack.c.l.bf16 %v839
        %v968 = vunpack.c.l.bf16 %v840
        %v969 = vunpack.c.l.bf16 %v841
        %v970 = vunpack.c.l.bf16 %v842
        %v971 = vunpack.c.l.bf16 %v843
        %v972 = vunpack.c.l.bf16 %v844
        %v973 = vunpack.c.l.bf16 %v845
        %v974 = vunpack.c.l.bf16 %v846
        %v975 = vunpack.c.l.bf16 %v847
        %v976 = vunpack.c.l.bf16 %v848
        %v977 = vunpack.c.l.bf16 %v849
        %v978 = vunpack.c.l.bf16 %v850
        %v979 = vunpack.c.l.bf16 %v851
        %v980 = vunpack.c.l.bf16 %v852
        %v981 = vunpack.c.l.bf16 %v853
        %v982 = vunpack.c.l.bf16 %v854
        %v983 = vunpack.c.l.bf16 %v855
        %v984 = vunpack.c.l.bf16 %v856
        %v985 = vunpack.c.l.bf16 %v857
        %v986 = vunpack.c.l.bf16 %v858
        %v987 = vunpack.c.l.bf16 %v859
        %v988 = vunpack.c.l.bf16 %v860
        %v989 = vunpack.c.l.bf16 %v861
        %v990 = vunpack.c.l.bf16 %v862
        %v991 = vunpack.c.l.bf16 %v863
        %v992 = vunpack.c.l.bf16 %v864
        %v993 = vunpack.c.l.bf16 %v865
        %v994 = vunpack.c.l.bf16 %v866
        %v995 = vunpack.c.l.bf16 %v867
        %v996 = vunpack.c.l.bf16 %v868
        %v997 = vunpack.c.l.bf16 %v869
        %v998 = vunpack.c.l.bf16 %v870
        %v999 = vunpack.c.l.bf16 %v871
        %v1000 = vunpack.c.l.bf16 %v872
        %v1001 = vunpack.c.l.bf16 %v873
        %v1002 = vunpack.c.l.bf16 %v874
        %v1003 = vunpack.c.l.bf16 %v875
        %v1004 = vunpack.c.l.bf16 %v876
        %v1005 = vunpack.c.l.bf16 %v877
        %v1006 = vunpack.c.l.bf16 %v878
        %v1007 = vunpack.c.l.bf16 %v879
        %v1008 = vunpack.c.l.bf16 %v880
        %v1009 = vunpack.c.l.bf16 %v881
        %v1010 = vunpack.c.l.bf16 %v882
        %v1011 = vunpack.c.l.bf16 %v883
        %v1012 = vunpack.c.l.bf16 %v884
        %v1013 = vunpack.c.l.bf16 %v885
        %v1014 = vunpack.c.l.bf16 %v886
        %v1015 = vunpack.c.l.bf16 %v887
        %v1016 = vunpack.c.l.bf16 %v888
        %v1017 = vunpack.c.l.bf16 %v889
        %v1018 = vunpack.c.l.bf16 %v890
        %v1019 = vunpack.c.l.bf16 %v891
        %v1020 = vunpack.c.l.bf16 %v892
        %v1021 = vunpack.c.l.bf16 %v893
        %v1022 = vunpack.c.l.bf16 %v894
        %v1023 = vunpack.c.l.bf16 %v895
        %v1024 = vunpack.c.l.bf16 %v896
        %v1025 = vunpack.c.l.bf16 %v897
        %v1026 = vunpack.c.l.bf16 %v898
        %v1027 = vunpack.c.l.bf16 %v899
        %v1028 = vunpack.c.l.bf16 %v900
        %v1029 = vunpack.c.l.bf16 %v901
        %v1030 = vunpack.c.l.bf16 %v902
        %v1031 = vunpack.c.l.bf16 %v903
        %v1032 = vunpack.c.l.bf16 %v904
        %v1033 = vunpack.c.l.bf16 %v905
        %v1034 = vunpack.c.l.bf16 %v906
        %v1035 = vunpack.c.l.bf16 %v907
        %v1036 = vunpack.c.l.bf16 %v908
        %v1037 = vunpack.c.l.bf16 %v909
        %v1038 = vunpack.c.l.bf16 %v910
        %v1039 = vunpack.c.l.bf16 %v911
        %v1040 = vunpack.c.l.bf16 %v912
        %v1041 = vunpack.c.l.bf16 %v913
        %v1042 = vunpack.c.l.bf16 %v914
        %v1043 = vunpack.c.l.bf16 %v915
        %v1044 = vunpack.c.l.bf16 %v916
        %v1045 = vunpack.c.l.bf16 %v917
        %v1046 = vunpack.c.l.bf16 %v918
        %v1047 = vunpack.c.l.bf16 %v919
        %v1048 = vunpack.c.l.bf16 %v920
        %v1049 = vunpack.c.l.bf16 %v921
        %v1050 = vunpack.c.l.bf16 %v922
        %v1051 = vunpack.c.l.bf16 %v923
        %v1052 = vunpack.c.l.bf16 %v924
        %v1053 = vunpack.c.l.bf16 %v925
        %v1054 = vunpack.c.l.bf16 %v926
        %v1055 = vunpack.c.l.bf16 %v927
        %v1056 = vunpack.c.l.bf16 %v928
        %v1057 = vunpack.c.l.bf16 %v929
        %v1058 = vunpack.c.l.bf16 %v930
        %v1059 = vunpack.c.l.bf16 %v931
        %v1060 = vunpack.c.l.bf16 %v932
        %v1061 = vunpack.c.l.bf16 %v933
        %v1062 = vunpack.c.l.bf16 %v934
        %v1063 = vunpack.c.l.bf16 %v935
        %v1064 = vunpack.c.l.bf16 %v936
        %v1065 = vunpack.c.l.bf16 %v937
        %v1066 = vunpack.c.l.bf16 %v938
        %v1067 = vunpack.c.l.bf16 %v939
        %v1068 = vunpack.c.l.bf16 %v940
        %v1069 = vunpack.c.l.bf16 %v941
        %v1070 = vunpack.c.l.bf16 %v942
        %v1071 = vunpack.c.l.bf16 %v943
        %v1072 = vunpack.c.l.bf16 %v944
        %v1073 = vunpack.c.l.bf16 %v945
        %v1074 = vunpack.c.l.bf16 %v946
        %v1075 = vunpack.c.l.bf16 %v947
        %v1076 = vunpack.c.l.bf16 %v948
        %v1077 = vunpack.c.l.bf16 %v949
        %vm1078 = vcmask 523264
        %v1079 = vsel %vm1078, %v950, 0.0
        %1080 = vadd.xlane.f32.xlu0 %v1079
        %v1081 = vpop.xlane.xlu0 %1080
        %v1082 = vsel %vm1078, %v951, 0.0
        %1083 = vadd.xlane.f32.xlu0 %v1082
        %v1084 = vpop.xlane.xlu0 %1083
        %v1085 = vsel %vm1078, %v952, 0.0
        %1086 = vadd.xlane.f32.xlu0 %v1085
        %v1087 = vpop.xlane.xlu0 %1086
        %v1088 = vsel %vm1078, %v953, 0.0
        %1089 = vadd.xlane.f32.xlu0 %v1088
        %v1090 = vpop.xlane.xlu0 %1089
        %v1091 = vsel %vm1078, %v954, 0.0
        %1092 = vadd.xlane.f32.xlu0 %v1091
        %v1093 = vpop.xlane.xlu0 %1092
        %v1094 = vsel %vm1078, %v955, 0.0
        %1095 = vadd.xlane.f32.xlu0 %v1094
        %v1096 = vpop.xlane.xlu0 %1095
        %v1097 = vsel %vm1078, %v956, 0.0
        %1098 = vadd.xlane.f32.xlu0 %v1097
        %v1099 = vpop.xlane.xlu0 %1098
        %v1100 = vsel %vm1078, %v957, 0.0
        %1101 = vadd.xlane.f32.xlu0 %v1100
        %v1102 = vpop.xlane.xlu0 %1101
        %v1103 = vsel %vm1078, %v958, 0.0
        %1104 = vadd.xlane.f32.xlu0 %v1103
        %v1105 = vpop.xlane.xlu0 %1104
        %v1106 = vsel %vm1078, %v959, 0.0
        %1107 = vadd.xlane.f32.xlu0 %v1106
        %v1108 = vpop.xlane.xlu0 %1107
        %v1109 = vsel %vm1078, %v960, 0.0
        %1110 = vadd.xlane.f32.xlu0 %v1109
        %v1111 = vpop.xlane.xlu0 %1110
        %v1112 = vsel %vm1078, %v961, 0.0
        %1113 = vadd.xlane.f32.xlu0 %v1112
        %v1114 = vpop.xlane.xlu0 %1113
        %v1115 = vsel %vm1078, %v962, 0.0
        %1116 = vadd.xlane.f32.xlu0 %v1115
        %v1117 = vpop.xlane.xlu0 %1116
        %v1118 = vsel %vm1078, %v963, 0.0
        %1119 = vadd.xlane.f32.xlu0 %v1118
        %v1120 = vpop.xlane.xlu0 %1119
        %v1121 = vsel %vm1078, %v964, 0.0
        %1122 = vadd.xlane.f32.xlu0 %v1121
        %v1123 = vpop.xlane.xlu0 %1122
        %v1124 = vsel %vm1078, %v965, 0.0
        %1125 = vadd.xlane.f32.xlu0 %v1124
        %v1126 = vpop.xlane.xlu0 %1125
        %v1127 = vsel %vm1078, %v966, 0.0
        %1128 = vadd.xlane.f32.xlu0 %v1127
        %v1129 = vpop.xlane.xlu0 %1128
        %v1130 = vsel %vm1078, %v967, 0.0
        %1131 = vadd.xlane.f32.xlu0 %v1130
        %v1132 = vpop.xlane.xlu0 %1131
        %v1133 = vsel %vm1078, %v968, 0.0
        %1134 = vadd.xlane.f32.xlu0 %v1133
        %v1135 = vpop.xlane.xlu0 %1134
        %v1136 = vsel %vm1078, %v969, 0.0
        %1137 = vadd.xlane.f32.xlu0 %v1136
        %v1138 = vpop.xlane.xlu0 %1137
        %v1139 = vsel %vm1078, %v970, 0.0
        %1140 = vadd.xlane.f32.xlu0 %v1139
        %v1141 = vpop.xlane.xlu0 %1140
        %v1142 = vsel %vm1078, %v971, 0.0
        %1143 = vadd.xlane.f32.xlu0 %v1142
        %v1144 = vpop.xlane.xlu0 %1143
        %v1145 = vsel %vm1078, %v972, 0.0
        %1146 = vadd.xlane.f32.xlu0 %v1145
        %v1147 = vpop.xlane.xlu0 %1146
        %v1148 = vsel %vm1078, %v973, 0.0
        %1149 = vadd.xlane.f32.xlu0 %v1148
        %v1150 = vpop.xlane.xlu0 %1149
        %v1151 = vsel %vm1078, %v974, 0.0
        %1152 = vadd.xlane.f32.xlu0 %v1151
        %v1153 = vpop.xlane.xlu0 %1152
        %v1154 = vsel %vm1078, %v975, 0.0
        %1155 = vadd.xlane.f32.xlu0 %v1154
        %v1156 = vpop.xlane.xlu0 %1155
        %v1157 = vsel %vm1078, %v976, 0.0
        %1158 = vadd.xlane.f32.xlu0 %v1157
        %v1159 = vpop.xlane.xlu0 %1158
        %v1160 = vsel %vm1078, %v977, 0.0
        %1161 = vadd.xlane.f32.xlu0 %v1160
        %v1162 = vpop.xlane.xlu0 %1161
        %v1163 = vsel %vm1078, %v978, 0.0
        %1164 = vadd.xlane.f32.xlu0 %v1163
        %v1165 = vpop.xlane.xlu0 %1164
        %v1166 = vsel %vm1078, %v979, 0.0
        %1167 = vadd.xlane.f32.xlu0 %v1166
        %v1168 = vpop.xlane.xlu0 %1167
        %v1169 = vsel %vm1078, %v980, 0.0
        %1170 = vadd.xlane.f32.xlu0 %v1169
        %v1171 = vpop.xlane.xlu0 %1170
        %v1172 = vsel %vm1078, %v981, 0.0
        %1173 = vadd.xlane.f32.xlu0 %v1172
        %v1174 = vpop.xlane.xlu0 %1173
        %v1175 = vsel %vm1078, %v982, 0.0
        %1176 = vadd.xlane.f32.xlu0 %v1175
        %v1177 = vpop.xlane.xlu0 %1176
        %v1178 = vsel %vm1078, %v983, 0.0
        %1179 = vadd.xlane.f32.xlu0 %v1178
        %v1180 = vpop.xlane.xlu0 %1179
        %v1181 = vsel %vm1078, %v984, 0.0
        %1182 = vadd.xlane.f32.xlu0 %v1181
        %v1183 = vpop.xlane.xlu0 %1182
        %v1184 = vsel %vm1078, %v985, 0.0
        %1185 = vadd.xlane.f32.xlu0 %v1184
        %v1186 = vpop.xlane.xlu0 %1185
        %v1187 = vsel %vm1078, %v986, 0.0
        %1188 = vadd.xlane.f32.xlu0 %v1187
        %v1189 = vpop.xlane.xlu0 %1188
        %v1190 = vsel %vm1078, %v987, 0.0
        %1191 = vadd.xlane.f32.xlu0 %v1190
        %v1192 = vpop.xlane.xlu0 %1191
        %v1193 = vsel %vm1078, %v988, 0.0
        %1194 = vadd.xlane.f32.xlu0 %v1193
        %v1195 = vpop.xlane.xlu0 %1194
        %v1196 = vsel %vm1078, %v989, 0.0
        %1197 = vadd.xlane.f32.xlu0 %v1196
        %v1198 = vpop.xlane.xlu0 %1197
        %v1199 = vsel %vm1078, %v990, 0.0
        %1200 = vadd.xlane.f32.xlu0 %v1199
        %v1201 = vpop.xlane.xlu0 %1200
        %v1202 = vsel %vm1078, %v991, 0.0
        %1203 = vadd.xlane.f32.xlu0 %v1202
        %v1204 = vpop.xlane.xlu0 %1203
        %v1205 = vsel %vm1078, %v992, 0.0
        %1206 = vadd.xlane.f32.xlu0 %v1205
        %v1207 = vpop.xlane.xlu0 %1206
        %v1208 = vsel %vm1078, %v993, 0.0
        %1209 = vadd.xlane.f32.xlu0 %v1208
        %v1210 = vpop.xlane.xlu0 %1209
        %v1211 = vsel %vm1078, %v994, 0.0
        %1212 = vadd.xlane.f32.xlu0 %v1211
        %v1213 = vpop.xlane.xlu0 %1212
        %v1214 = vsel %vm1078, %v995, 0.0
        %1215 = vadd.xlane.f32.xlu0 %v1214
        %v1216 = vpop.xlane.xlu0 %1215
        %v1217 = vsel %vm1078, %v996, 0.0
        %1218 = vadd.xlane.f32.xlu0 %v1217
        %v1219 = vpop.xlane.xlu0 %1218
        %v1220 = vsel %vm1078, %v997, 0.0
        %1221 = vadd.xlane.f32.xlu0 %v1220
        %v1222 = vpop.xlane.xlu0 %1221
        %v1223 = vsel %vm1078, %v998, 0.0
        %1224 = vadd.xlane.f32.xlu0 %v1223
        %v1225 = vpop.xlane.xlu0 %1224
        %v1226 = vsel %vm1078, %v999, 0.0
        %1227 = vadd.xlane.f32.xlu0 %v1226
        %v1228 = vpop.xlane.xlu0 %1227
        %v1229 = vsel %vm1078, %v1000, 0.0
        %1230 = vadd.xlane.f32.xlu0 %v1229
        %v1231 = vpop.xlane.xlu0 %1230
        %v1232 = vsel %vm1078, %v1001, 0.0
        %1233 = vadd.xlane.f32.xlu0 %v1232
        %v1234 = vpop.xlane.xlu0 %1233
        %v1235 = vsel %vm1078, %v1002, 0.0
        %1236 = vadd.xlane.f32.xlu0 %v1235
        %v1237 = vpop.xlane.xlu0 %1236
        %v1238 = vsel %vm1078, %v1003, 0.0
        %1239 = vadd.xlane.f32.xlu0 %v1238
        %v1240 = vpop.xlane.xlu0 %1239
        %v1241 = vsel %vm1078, %v1004, 0.0
        %1242 = vadd.xlane.f32.xlu0 %v1241
        %v1243 = vpop.xlane.xlu0 %1242
        %v1244 = vsel %vm1078, %v1005, 0.0
        %1245 = vadd.xlane.f32.xlu0 %v1244
        %v1246 = vpop.xlane.xlu0 %1245
        %v1247 = vsel %vm1078, %v1006, 0.0
        %1248 = vadd.xlane.f32.xlu0 %v1247
        %v1249 = vpop.xlane.xlu0 %1248
        %v1250 = vsel %vm1078, %v1007, 0.0
        %1251 = vadd.xlane.f32.xlu0 %v1250
        %v1252 = vpop.xlane.xlu0 %1251
        %v1253 = vsel %vm1078, %v1008, 0.0
        %1254 = vadd.xlane.f32.xlu0 %v1253
        %v1255 = vpop.xlane.xlu0 %1254
        %v1256 = vsel %vm1078, %v1009, 0.0
        %1257 = vadd.xlane.f32.xlu0 %v1256
        %v1258 = vpop.xlane.xlu0 %1257
        %v1259 = vsel %vm1078, %v1010, 0.0
        %1260 = vadd.xlane.f32.xlu0 %v1259
        %v1261 = vpop.xlane.xlu0 %1260
        %v1262 = vsel %vm1078, %v1011, 0.0
        %1263 = vadd.xlane.f32.xlu0 %v1262
        %v1264 = vpop.xlane.xlu0 %1263
        %v1265 = vsel %vm1078, %v1012, 0.0
        %1266 = vadd.xlane.f32.xlu0 %v1265
        %v1267 = vpop.xlane.xlu0 %1266
        %v1268 = vsel %vm1078, %v1013, 0.0
        %1269 = vadd.xlane.f32.xlu0 %v1268
        %v1270 = vpop.xlane.xlu0 %1269
        %v1271 = vsel %vm1078, %v1014, 0.0
        %1272 = vadd.xlane.f32.xlu0 %v1271
        %v1273 = vpop.xlane.xlu0 %1272
        %v1274 = vsel %vm1078, %v1015, 0.0
        %1275 = vadd.xlane.f32.xlu0 %v1274
        %v1276 = vpop.xlane.xlu0 %1275
        %v1277 = vsel %vm1078, %v1016, 0.0
        %1278 = vadd.xlane.f32.xlu0 %v1277
        %v1279 = vpop.xlane.xlu0 %1278
        %v1280 = vsel %vm1078, %v1017, 0.0
        %1281 = vadd.xlane.f32.xlu0 %v1280
        %v1282 = vpop.xlane.xlu0 %1281
        %v1283 = vsel %vm1078, %v1018, 0.0
        %1284 = vadd.xlane.f32.xlu0 %v1283
        %v1285 = vpop.xlane.xlu0 %1284
        %v1286 = vsel %vm1078, %v1019, 0.0
        %1287 = vadd.xlane.f32.xlu0 %v1286
        %v1288 = vpop.xlane.xlu0 %1287
        %v1289 = vsel %vm1078, %v1020, 0.0
        %1290 = vadd.xlane.f32.xlu0 %v1289
        %v1291 = vpop.xlane.xlu0 %1290
        %v1292 = vsel %vm1078, %v1021, 0.0
        %1293 = vadd.xlane.f32.xlu0 %v1292
        %v1294 = vpop.xlane.xlu0 %1293
        %v1295 = vsel %vm1078, %v1022, 0.0
        %1296 = vadd.xlane.f32.xlu0 %v1295
        %v1297 = vpop.xlane.xlu0 %1296
        %v1298 = vsel %vm1078, %v1023, 0.0
        %1299 = vadd.xlane.f32.xlu0 %v1298
        %v1300 = vpop.xlane.xlu0 %1299
        %v1301 = vsel %vm1078, %v1024, 0.0
        %1302 = vadd.xlane.f32.xlu0 %v1301
        %v1303 = vpop.xlane.xlu0 %1302
        %v1304 = vsel %vm1078, %v1025, 0.0
        %1305 = vadd.xlane.f32.xlu0 %v1304
        %v1306 = vpop.xlane.xlu0 %1305
        %v1307 = vsel %vm1078, %v1026, 0.0
        %1308 = vadd.xlane.f32.xlu0 %v1307
        %v1309 = vpop.xlane.xlu0 %1308
        %v1310 = vsel %vm1078, %v1027, 0.0
        %1311 = vadd.xlane.f32.xlu0 %v1310
        %v1312 = vpop.xlane.xlu0 %1311
        %v1313 = vsel %vm1078, %v1028, 0.0
        %1314 = vadd.xlane.f32.xlu0 %v1313
        %v1315 = vpop.xlane.xlu0 %1314
        %v1316 = vsel %vm1078, %v1029, 0.0
        %1317 = vadd.xlane.f32.xlu0 %v1316
        %v1318 = vpop.xlane.xlu0 %1317
        %v1319 = vsel %vm1078, %v1030, 0.0
        %1320 = vadd.xlane.f32.xlu0 %v1319
        %v1321 = vpop.xlane.xlu0 %1320
        %v1322 = vsel %vm1078, %v1031, 0.0
        %1323 = vadd.xlane.f32.xlu0 %v1322
        %v1324 = vpop.xlane.xlu0 %1323
        %v1325 = vsel %vm1078, %v1032, 0.0
        %1326 = vadd.xlane.f32.xlu0 %v1325
        %v1327 = vpop.xlane.xlu0 %1326
        %v1328 = vsel %vm1078, %v1033, 0.0
        %1329 = vadd.xlane.f32.xlu0 %v1328
        %v1330 = vpop.xlane.xlu0 %1329
        %v1331 = vsel %vm1078, %v1034, 0.0
        %1332 = vadd.xlane.f32.xlu0 %v1331
        %v1333 = vpop.xlane.xlu0 %1332
        %v1334 = vsel %vm1078, %v1035, 0.0
        %1335 = vadd.xlane.f32.xlu0 %v1334
        %v1336 = vpop.xlane.xlu0 %1335
        %v1337 = vsel %vm1078, %v1036, 0.0
        %1338 = vadd.xlane.f32.xlu0 %v1337
        %v1339 = vpop.xlane.xlu0 %1338
        %v1340 = vsel %vm1078, %v1037, 0.0
        %1341 = vadd.xlane.f32.xlu0 %v1340
        %v1342 = vpop.xlane.xlu0 %1341
        %v1343 = vsel %vm1078, %v1038, 0.0
        %1344 = vadd.xlane.f32.xlu0 %v1343
        %v1345 = vpop.xlane.xlu0 %1344
        %v1346 = vsel %vm1078, %v1039, 0.0
        %1347 = vadd.xlane.f32.xlu0 %v1346
        %v1348 = vpop.xlane.xlu0 %1347
        %v1349 = vsel %vm1078, %v1040, 0.0
        %1350 = vadd.xlane.f32.xlu0 %v1349
        %v1351 = vpop.xlane.xlu0 %1350
        %v1352 = vsel %vm1078, %v1041, 0.0
        %1353 = vadd.xlane.f32.xlu0 %v1352
        %v1354 = vpop.xlane.xlu0 %1353
        %v1355 = vsel %vm1078, %v1042, 0.0
        %1356 = vadd.xlane.f32.xlu0 %v1355
        %v1357 = vpop.xlane.xlu0 %1356
        %v1358 = vsel %vm1078, %v1043, 0.0
        %1359 = vadd.xlane.f32.xlu0 %v1358
        %v1360 = vpop.xlane.xlu0 %1359
        %v1361 = vsel %vm1078, %v1044, 0.0
        %1362 = vadd.xlane.f32.xlu0 %v1361
        %v1363 = vpop.xlane.xlu0 %1362
        %v1364 = vsel %vm1078, %v1045, 0.0
        %1365 = vadd.xlane.f32.xlu0 %v1364
        %v1366 = vpop.xlane.xlu0 %1365
        %v1367 = vsel %vm1078, %v1046, 0.0
        %1368 = vadd.xlane.f32.xlu0 %v1367
        %v1369 = vpop.xlane.xlu0 %1368
        %v1370 = vsel %vm1078, %v1047, 0.0
        %1371 = vadd.xlane.f32.xlu0 %v1370
        %v1372 = vpop.xlane.xlu0 %1371
        %v1373 = vsel %vm1078, %v1048, 0.0
        %1374 = vadd.xlane.f32.xlu0 %v1373
        %v1375 = vpop.xlane.xlu0 %1374
        %v1376 = vsel %vm1078, %v1049, 0.0
        %1377 = vadd.xlane.f32.xlu0 %v1376
        %v1378 = vpop.xlane.xlu0 %1377
        %v1379 = vsel %vm1078, %v1050, 0.0
        %1380 = vadd.xlane.f32.xlu0 %v1379
        %v1381 = vpop.xlane.xlu0 %1380
        %v1382 = vsel %vm1078, %v1051, 0.0
        %1383 = vadd.xlane.f32.xlu0 %v1382
        %v1384 = vpop.xlane.xlu0 %1383
        %v1385 = vsel %vm1078, %v1052, 0.0
        %1386 = vadd.xlane.f32.xlu0 %v1385
        %v1387 = vpop.xlane.xlu0 %1386
        %v1388 = vsel %vm1078, %v1053, 0.0
        %1389 = vadd.xlane.f32.xlu0 %v1388
        %v1390 = vpop.xlane.xlu0 %1389
        %v1391 = vsel %vm1078, %v1054, 0.0
        %1392 = vadd.xlane.f32.xlu0 %v1391
        %v1393 = vpop.xlane.xlu0 %1392
        %v1394 = vsel %vm1078, %v1055, 0.0
        %1395 = vadd.xlane.f32.xlu0 %v1394
        %v1396 = vpop.xlane.xlu0 %1395
        %v1397 = vsel %vm1078, %v1056, 0.0
        %1398 = vadd.xlane.f32.xlu0 %v1397
        %v1399 = vpop.xlane.xlu0 %1398
        %v1400 = vsel %vm1078, %v1057, 0.0
        %1401 = vadd.xlane.f32.xlu0 %v1400
        %v1402 = vpop.xlane.xlu0 %1401
        %v1403 = vsel %vm1078, %v1058, 0.0
        %1404 = vadd.xlane.f32.xlu0 %v1403
        %v1405 = vpop.xlane.xlu0 %1404
        %v1406 = vsel %vm1078, %v1059, 0.0
        %1407 = vadd.xlane.f32.xlu0 %v1406
        %v1408 = vpop.xlane.xlu0 %1407
        %v1409 = vsel %vm1078, %v1060, 0.0
        %1410 = vadd.xlane.f32.xlu0 %v1409
        %v1411 = vpop.xlane.xlu0 %1410
        %v1412 = vsel %vm1078, %v1061, 0.0
        %1413 = vadd.xlane.f32.xlu0 %v1412
        %v1414 = vpop.xlane.xlu0 %1413
        %v1415 = vsel %vm1078, %v1062, 0.0
        %1416 = vadd.xlane.f32.xlu0 %v1415
        %v1417 = vpop.xlane.xlu0 %1416
        %v1418 = vsel %vm1078, %v1063, 0.0
        %1419 = vadd.xlane.f32.xlu0 %v1418
        %v1420 = vpop.xlane.xlu0 %1419
        %v1421 = vsel %vm1078, %v1064, 0.0
        %1422 = vadd.xlane.f32.xlu0 %v1421
        %v1423 = vpop.xlane.xlu0 %1422
        %v1424 = vsel %vm1078, %v1065, 0.0
        %1425 = vadd.xlane.f32.xlu0 %v1424
        %v1426 = vpop.xlane.xlu0 %1425
        %v1427 = vsel %vm1078, %v1066, 0.0
        %1428 = vadd.xlane.f32.xlu0 %v1427
        %v1429 = vpop.xlane.xlu0 %1428
        %v1430 = vsel %vm1078, %v1067, 0.0
        %1431 = vadd.xlane.f32.xlu0 %v1430
        %v1432 = vpop.xlane.xlu0 %1431
        %v1433 = vsel %vm1078, %v1068, 0.0
        %1434 = vadd.xlane.f32.xlu0 %v1433
        %v1435 = vpop.xlane.xlu0 %1434
        %v1436 = vsel %vm1078, %v1069, 0.0
        %1437 = vadd.xlane.f32.xlu0 %v1436
        %v1438 = vpop.xlane.xlu0 %1437
        %v1439 = vsel %vm1078, %v1070, 0.0
        %1440 = vadd.xlane.f32.xlu0 %v1439
        %v1441 = vpop.xlane.xlu0 %1440
        %v1442 = vsel %vm1078, %v1071, 0.0
        %1443 = vadd.xlane.f32.xlu0 %v1442
        %v1444 = vpop.xlane.xlu0 %1443
        %v1445 = vsel %vm1078, %v1072, 0.0
        %1446 = vadd.xlane.f32.xlu0 %v1445
        %v1447 = vpop.xlane.xlu0 %1446
        %v1448 = vsel %vm1078, %v1073, 0.0
        %1449 = vadd.xlane.f32.xlu0 %v1448
        %v1450 = vpop.xlane.xlu0 %1449
        %v1451 = vsel %vm1078, %v1074, 0.0
        %1452 = vadd.xlane.f32.xlu0 %v1451
        %v1453 = vpop.xlane.xlu0 %1452
        %v1454 = vsel %vm1078, %v1075, 0.0
        %1455 = vadd.xlane.f32.xlu0 %v1454
        %v1456 = vpop.xlane.xlu0 %1455
        %v1457 = vsel %vm1078, %v1076, 0.0
        %1458 = vadd.xlane.f32.xlu0 %v1457
        %v1459 = vpop.xlane.xlu0 %1458
        %v1460 = vsel %vm1078, %v1077, 0.0
        %1461 = vadd.xlane.f32.xlu0 %v1460
        %v1462 = vpop.xlane.xlu0 %1461
        %v1463 = vmul.f32 %v1081, 0.015625
        %v1464 = vmul.f32 %v1084, 0.015625
        %v1465 = vmul.f32 %v1087, 0.015625
        %v1466 = vmul.f32 %v1090, 0.015625
        %v1467 = vmul.f32 %v1093, 0.015625
        %v1468 = vmul.f32 %v1096, 0.015625
        %v1469 = vmul.f32 %v1099, 0.015625
        %v1470 = vmul.f32 %v1102, 0.015625
        %v1471 = vmul.f32 %v1105, 0.015625
        %v1472 = vmul.f32 %v1108, 0.015625
        %v1473 = vmul.f32 %v1111, 0.015625
        %v1474 = vmul.f32 %v1114, 0.015625
        %v1475 = vmul.f32 %v1117, 0.015625
        %v1476 = vmul.f32 %v1120, 0.015625
        %v1477 = vmul.f32 %v1123, 0.015625
        %v1478 = vmul.f32 %v1126, 0.015625
        %v1479 = vmul.f32 %v1129, 0.015625
        %v1480 = vmul.f32 %v1132, 0.015625
        %v1481 = vmul.f32 %v1135, 0.015625
        %v1482 = vmul.f32 %v1138, 0.015625
        %v1483 = vmul.f32 %v1141, 0.015625
        %v1484 = vmul.f32 %v1144, 0.015625
        %v1485 = vmul.f32 %v1147, 0.015625
        %v1486 = vmul.f32 %v1150, 0.015625
        %v1487 = vmul.f32 %v1153, 0.015625
        %v1488 = vmul.f32 %v1156, 0.015625
        %v1489 = vmul.f32 %v1159, 0.015625
        %v1490 = vmul.f32 %v1162, 0.015625
        %v1491 = vmul.f32 %v1165, 0.015625
        %v1492 = vmul.f32 %v1168, 0.015625
        %v1493 = vmul.f32 %v1171, 0.015625
        %v1494 = vmul.f32 %v1174, 0.015625
        %v1495 = vmul.f32 %v1177, 0.015625
        %v1496 = vmul.f32 %v1180, 0.015625
        %v1497 = vmul.f32 %v1183, 0.015625
        %v1498 = vmul.f32 %v1186, 0.015625
        %v1499 = vmul.f32 %v1189, 0.015625
        %v1500 = vmul.f32 %v1192, 0.015625
        %v1501 = vmul.f32 %v1195, 0.015625
        %v1502 = vmul.f32 %v1198, 0.015625
        %v1503 = vmul.f32 %v1201, 0.015625
        %v1504 = vmul.f32 %v1204, 0.015625
        %v1505 = vmul.f32 %v1207, 0.015625
        %v1506 = vmul.f32 %v1210, 0.015625
        %v1507 = vmul.f32 %v1213, 0.015625
        %v1508 = vmul.f32 %v1216, 0.015625
        %v1509 = vmul.f32 %v1219, 0.015625
        %v1510 = vmul.f32 %v1222, 0.015625
        %v1511 = vmul.f32 %v1225, 0.015625
        %v1512 = vmul.f32 %v1228, 0.015625
        %v1513 = vmul.f32 %v1231, 0.015625
        %v1514 = vmul.f32 %v1234, 0.015625
        %v1515 = vmul.f32 %v1237, 0.015625
        %v1516 = vmul.f32 %v1240, 0.015625
        %v1517 = vmul.f32 %v1243, 0.015625
        %v1518 = vmul.f32 %v1246, 0.015625
        %v1519 = vmul.f32 %v1249, 0.015625
        %v1520 = vmul.f32 %v1252, 0.015625
        %v1521 = vmul.f32 %v1255, 0.015625
        %v1522 = vmul.f32 %v1258, 0.015625
        %v1523 = vmul.f32 %v1261, 0.015625
        %v1524 = vmul.f32 %v1264, 0.015625
        %v1525 = vmul.f32 %v1267, 0.015625
        %v1526 = vmul.f32 %v1270, 0.015625
        %v1527 = vmul.f32 %v1273, 0.015625
        %v1528 = vmul.f32 %v1276, 0.015625
        %v1529 = vmul.f32 %v1279, 0.015625
        %v1530 = vmul.f32 %v1282, 0.015625
        %v1531 = vmul.f32 %v1285, 0.015625
        %v1532 = vmul.f32 %v1288, 0.015625
        %v1533 = vmul.f32 %v1291, 0.015625
        %v1534 = vmul.f32 %v1294, 0.015625
        %v1535 = vmul.f32 %v1297, 0.015625
        %v1536 = vmul.f32 %v1300, 0.015625
        %v1537 = vmul.f32 %v1303, 0.015625
        %v1538 = vmul.f32 %v1306, 0.015625
        %v1539 = vmul.f32 %v1309, 0.015625
        %v1540 = vmul.f32 %v1312, 0.015625
        %v1541 = vmul.f32 %v1315, 0.015625
        %v1542 = vmul.f32 %v1318, 0.015625
        %v1543 = vmul.f32 %v1321, 0.015625
        %v1544 = vmul.f32 %v1324, 0.015625
        %v1545 = vmul.f32 %v1327, 0.015625
        %v1546 = vmul.f32 %v1330, 0.015625
        %v1547 = vmul.f32 %v1333, 0.015625
        %v1548 = vmul.f32 %v1336, 0.015625
        %v1549 = vmul.f32 %v1339, 0.015625
        %v1550 = vmul.f32 %v1342, 0.015625
        %v1551 = vmul.f32 %v1345, 0.015625
        %v1552 = vmul.f32 %v1348, 0.015625
        %v1553 = vmul.f32 %v1351, 0.015625
        %v1554 = vmul.f32 %v1354, 0.015625
        %v1555 = vmul.f32 %v1357, 0.015625
        %v1556 = vmul.f32 %v1360, 0.015625
        %v1557 = vmul.f32 %v1363, 0.015625
        %v1558 = vmul.f32 %v1366, 0.015625
        %v1559 = vmul.f32 %v1369, 0.015625
        %v1560 = vmul.f32 %v1372, 0.015625
        %v1561 = vmul.f32 %v1375, 0.015625
        %v1562 = vmul.f32 %v1378, 0.015625
        %v1563 = vmul.f32 %v1381, 0.015625
        %v1564 = vmul.f32 %v1384, 0.015625
        %v1565 = vmul.f32 %v1387, 0.015625
        %v1566 = vmul.f32 %v1390, 0.015625
        %v1567 = vmul.f32 %v1393, 0.015625
        %v1568 = vmul.f32 %v1396, 0.015625
        %v1569 = vmul.f32 %v1399, 0.015625
        %v1570 = vmul.f32 %v1402, 0.015625
        %v1571 = vmul.f32 %v1405, 0.015625
        %v1572 = vmul.f32 %v1408, 0.015625
        %v1573 = vmul.f32 %v1411, 0.015625
        %v1574 = vmul.f32 %v1414, 0.015625
        %v1575 = vmul.f32 %v1417, 0.015625
        %v1576 = vmul.f32 %v1420, 0.015625
        %v1577 = vmul.f32 %v1423, 0.015625
        %v1578 = vmul.f32 %v1426, 0.015625
        %v1579 = vmul.f32 %v1429, 0.015625
        %v1580 = vmul.f32 %v1432, 0.015625
        %v1581 = vmul.f32 %v1435, 0.015625
        %v1582 = vmul.f32 %v1438, 0.015625
        %v1583 = vmul.f32 %v1441, 0.015625
        %v1584 = vmul.f32 %v1444, 0.015625
        %v1585 = vmul.f32 %v1447, 0.015625
        %v1586 = vmul.f32 %v1450, 0.015625
        %v1587 = vmul.f32 %v1453, 0.015625
        %v1588 = vmul.f32 %v1456, 0.015625
        %v1589 = vmul.f32 %v1459, 0.015625
        %v1590 = vmul.f32 %v1462, 0.015625
        %v1591 = vld [vmem:[#allocation2] sm:$0xff]
        %v1592 = vpack.c.bf16 %v1464, %v1463
        %v1593 = vpack.c.bf16 %v1466, %v1465
        %v1594 = vpack.c.bf16 %v1468, %v1467
        %v1595 = vpack.c.bf16 %v1470, %v1469
        %v1596 = vpack.c.bf16 %v1472, %v1471
        %v1597 = vpack.c.bf16 %v1474, %v1473
        %v1598 = vpack.c.bf16 %v1476, %v1475
        %v1599 = vpack.c.bf16 %v1478, %v1477
        %v1600 = vpack.c.bf16 %v1480, %v1479
        %v1601 = vpack.c.bf16 %v1482, %v1481
        %v1602 = vpack.c.bf16 %v1484, %v1483
        %v1603 = vpack.c.bf16 %v1486, %v1485
        %v1604 = vpack.c.bf16 %v1488, %v1487
        %v1605 = vpack.c.bf16 %v1490, %v1489
        %v1606 = vpack.c.bf16 %v1492, %v1491
        %v1607 = vpack.c.bf16 %v1494, %v1493
        %v1608 = vpack.c.bf16 %v1496, %v1495
        %v1609 = vpack.c.bf16 %v1498, %v1497
        %v1610 = vpack.c.bf16 %v1500, %v1499
        %v1611 = vpack.c.bf16 %v1502, %v1501
        %v1612 = vpack.c.bf16 %v1504, %v1503
        %v1613 = vpack.c.bf16 %v1506, %v1505
        %v1614 = vpack.c.bf16 %v1508, %v1507
        %v1615 = vpack.c.bf16 %v1510, %v1509
        %v1616 = vpack.c.bf16 %v1512, %v1511
        %v1617 = vpack.c.bf16 %v1514, %v1513
        %v1618 = vpack.c.bf16 %v1516, %v1515
        %v1619 = vpack.c.bf16 %v1518, %v1517
        %v1620 = vpack.c.bf16 %v1520, %v1519
        %v1621 = vpack.c.bf16 %v1522, %v1521
        %v1622 = vpack.c.bf16 %v1524, %v1523
        %v1623 = vpack.c.bf16 %v1526, %v1525
        %v1624 = vpack.c.bf16 %v1528, %v1527
        %v1625 = vpack.c.bf16 %v1530, %v1529
        %v1626 = vpack.c.bf16 %v1532, %v1531
        %v1627 = vpack.c.bf16 %v1534, %v1533
        %v1628 = vpack.c.bf16 %v1536, %v1535
        %v1629 = vpack.c.bf16 %v1538, %v1537
        %v1630 = vpack.c.bf16 %v1540, %v1539
        %v1631 = vpack.c.bf16 %v1542, %v1541
        %v1632 = vpack.c.bf16 %v1544, %v1543
        %v1633 = vpack.c.bf16 %v1546, %v1545
        %v1634 = vpack.c.bf16 %v1548, %v1547
        %v1635 = vpack.c.bf16 %v1550, %v1549
        %v1636 = vpack.c.bf16 %v1552, %v1551
        %v1637 = vpack.c.bf16 %v1554, %v1553
        %v1638 = vpack.c.bf16 %v1556, %v1555
        %v1639 = vpack.c.bf16 %v1558, %v1557
        %v1640 = vpack.c.bf16 %v1560, %v1559
        %v1641 = vpack.c.bf16 %v1562, %v1561
        %v1642 = vpack.c.bf16 %v1564, %v1563
        %v1643 = vpack.c.bf16 %v1566, %v1565
        %v1644 = vpack.c.bf16 %v1568, %v1567
        %v1645 = vpack.c.bf16 %v1570, %v1569
        %v1646 = vpack.c.bf16 %v1572, %v1571
        %v1647 = vpack.c.bf16 %v1574, %v1573
        %v1648 = vpack.c.bf16 %v1576, %v1575
        %v1649 = vpack.c.bf16 %v1578, %v1577
        %v1650 = vpack.c.bf16 %v1580, %v1579
        %v1651 = vpack.c.bf16 %v1582, %v1581
        %v1652 = vpack.c.bf16 %v1584, %v1583
        %v1653 = vpack.c.bf16 %v1586, %v1585
        %v1654 = vpack.c.bf16 %v1588, %v1587
        %v1655 = vpack.c.bf16 %v1590, %v1589
        %v1656 = vld [vmem:[%s785] sm:$0xff]
        %v1657 = vld [vmem:[%s785 + $0x8] sm:$0xff]
        %v1658 = vld [vmem:[%s785 + $0x10] sm:$0xff]
        %v1659 = vld [vmem:[%s785 + $0x18] sm:$0xff]
        %v1660 = vld [vmem:[%s785 + $0x20] sm:$0xff]
        %v1661 = vld [vmem:[%s785 + $0x28] sm:$0xff]
        %v1662 = vld [vmem:[%s785 + $0x30] sm:$0xff]
        %v1663 = vld [vmem:[%s785 + $0x38] sm:$0xff]
        %v1664 = vld [vmem:[%s785 + $0x40] sm:$0xff]
        %v1665 = vld [vmem:[%s785 + $0x48] sm:$0xff]
        %v1666 = vld [vmem:[%s785 + $0x50] sm:$0xff]
        %v1667 = vld [vmem:[%s785 + $0x58] sm:$0xff]
        %v1668 = vld [vmem:[%s785 + $0x60] sm:$0xff]
        %v1669 = vld [vmem:[%s785 + $0x68] sm:$0xff]
        %v1670 = vld [vmem:[%s785 + $0x70] sm:$0xff]
        %v1671 = vld [vmem:[%s785 + $0x78] sm:$0xff]
        %v1672 = vld [vmem:[%s785 + $0x80] sm:$0xff]
        %v1673 = vld [vmem:[%s785 + $0x88] sm:$0xff]
        %v1674 = vld [vmem:[%s785 + $0x90] sm:$0xff]
        %v1675 = vld [vmem:[%s785 + $0x98] sm:$0xff]
        %v1676 = vld [vmem:[%s785 + $0xa0] sm:$0xff]
        %v1677 = vld [vmem:[%s785 + $0xa8] sm:$0xff]
        %v1678 = vld [vmem:[%s785 + $0xb0] sm:$0xff]
        %v1679 = vld [vmem:[%s785 + $0xb8] sm:$0xff]
        %v1680 = vld [vmem:[%s785 + $0xc0] sm:$0xff]
        %v1681 = vld [vmem:[%s785 + $0xc8] sm:$0xff]
        %v1682 = vld [vmem:[%s785 + $0xd0] sm:$0xff]
        %v1683 = vld [vmem:[%s785 + $0xd8] sm:$0xff]
        %v1684 = vld [vmem:[%s785 + $0xe0] sm:$0xff]
        %v1685 = vld [vmem:[%s785 + $0xe8] sm:$0xff]
        %v1686 = vld [vmem:[%s785 + $0xf0] sm:$0xff]
        %v1687 = vld [vmem:[%s785 + $0xf8] sm:$0xff]
        %v1688 = vld [vmem:[%s785 + $0x100] sm:$0xff]
        %v1689 = vld [vmem:[%s785 + $0x108] sm:$0xff]
        %v1690 = vld [vmem:[%s785 + $0x110] sm:$0xff]
        %v1691 = vld [vmem:[%s785 + $0x118] sm:$0xff]
        %v1692 = vld [vmem:[%s785 + $0x120] sm:$0xff]
        %v1693 = vld [vmem:[%s785 + $0x128] sm:$0xff]
        %v1694 = vld [vmem:[%s785 + $0x130] sm:$0xff]
        %v1695 = vld [vmem:[%s785 + $0x138] sm:$0xff]
        %v1696 = vld [vmem:[%s785 + $0x140] sm:$0xff]
        %v1697 = vld [vmem:[%s785 + $0x148] sm:$0xff]
        %v1698 = vld [vmem:[%s785 + $0x150] sm:$0xff]
        %v1699 = vld [vmem:[%s785 + $0x158] sm:$0xff]
        %v1700 = vld [vmem:[%s785 + $0x160] sm:$0xff]
        %v1701 = vld [vmem:[%s785 + $0x168] sm:$0xff]
        %v1702 = vld [vmem:[%s785 + $0x170] sm:$0xff]
        %v1703 = vld [vmem:[%s785 + $0x178] sm:$0xff]
        %v1704 = vld [vmem:[%s785 + $0x180] sm:$0xff]
        %v1705 = vld [vmem:[%s785 + $0x188] sm:$0xff]
        %v1706 = vld [vmem:[%s785 + $0x190] sm:$0xff]
        %v1707 = vld [vmem:[%s785 + $0x198] sm:$0xff]
        %v1708 = vld [vmem:[%s785 + $0x1a0] sm:$0xff]
        %v1709 = vld [vmem:[%s785 + $0x1a8] sm:$0xff]
        %v1710 = vld [vmem:[%s785 + $0x1b0] sm:$0xff]
        %v1711 = vld [vmem:[%s785 + $0x1b8] sm:$0xff]
        %v1712 = vld [vmem:[%s785 + $0x1c0] sm:$0xff]
        %v1713 = vld [vmem:[%s785 + $0x1c8] sm:$0xff]
        %v1714 = vld [vmem:[%s785 + $0x1d0] sm:$0xff]
        %v1715 = vld [vmem:[%s785 + $0x1d8] sm:$0xff]
        %v1716 = vld [vmem:[%s785 + $0x1e0] sm:$0xff]
        %v1717 = vld [vmem:[%s785 + $0x1e8] sm:$0xff]
        %v1718 = vld [vmem:[%s785 + $0x1f0] sm:$0xff]
        %v1719 = vld [vmem:[%s785 + $0x1f8] sm:$0xff]
        %v1720 = vld [vmem:[%s785 + $0x200] sm:$0xff]
        %v1721 = vld [vmem:[%s785 + $0x208] sm:$0xff]
        %v1722 = vld [vmem:[%s785 + $0x210] sm:$0xff]
        %v1723 = vld [vmem:[%s785 + $0x218] sm:$0xff]
        %v1724 = vld [vmem:[%s785 + $0x220] sm:$0xff]
        %v1725 = vld [vmem:[%s785 + $0x228] sm:$0xff]
        %v1726 = vld [vmem:[%s785 + $0x230] sm:$0xff]
        %v1727 = vld [vmem:[%s785 + $0x238] sm:$0xff]
        %v1728 = vld [vmem:[%s785 + $0x240] sm:$0xff]
        %v1729 = vld [vmem:[%s785 + $0x248] sm:$0xff]
        %v1730 = vld [vmem:[%s785 + $0x250] sm:$0xff]
        %v1731 = vld [vmem:[%s785 + $0x258] sm:$0xff]
        %v1732 = vld [vmem:[%s785 + $0x260] sm:$0xff]
        %v1733 = vld [vmem:[%s785 + $0x268] sm:$0xff]
        %v1734 = vld [vmem:[%s785 + $0x270] sm:$0xff]
        %v1735 = vld [vmem:[%s785 + $0x278] sm:$0xff]
        %v1736 = vld [vmem:[%s785 + $0x280] sm:$0xff]
        %v1737 = vld [vmem:[%s785 + $0x288] sm:$0xff]
        %v1738 = vld [vmem:[%s785 + $0x290] sm:$0xff]
        %v1739 = vld [vmem:[%s785 + $0x298] sm:$0xff]
        %v1740 = vld [vmem:[%s785 + $0x2a0] sm:$0xff]
        %v1741 = vld [vmem:[%s785 + $0x2a8] sm:$0xff]
        %v1742 = vld [vmem:[%s785 + $0x2b0] sm:$0xff]
        %v1743 = vld [vmem:[%s785 + $0x2b8] sm:$0xff]
        %v1744 = vld [vmem:[%s785 + $0x2c0] sm:$0xff]
        %v1745 = vld [vmem:[%s785 + $0x2c8] sm:$0xff]
        %v1746 = vld [vmem:[%s785 + $0x2d0] sm:$0xff]
        %v1747 = vld [vmem:[%s785 + $0x2d8] sm:$0xff]
        %v1748 = vld [vmem:[%s785 + $0x2e0] sm:$0xff]
        %v1749 = vld [vmem:[%s785 + $0x2e8] sm:$0xff]
        %v1750 = vld [vmem:[%s785 + $0x2f0] sm:$0xff]
        %v1751 = vld [vmem:[%s785 + $0x2f8] sm:$0xff]
        %v1752 = vld [vmem:[%s785 + $0x300] sm:$0xff]
        %v1753 = vld [vmem:[%s785 + $0x308] sm:$0xff]
        %v1754 = vld [vmem:[%s785 + $0x310] sm:$0xff]
        %v1755 = vld [vmem:[%s785 + $0x318] sm:$0xff]
        %v1756 = vld [vmem:[%s785 + $0x320] sm:$0xff]
        %v1757 = vld [vmem:[%s785 + $0x328] sm:$0xff]
        %v1758 = vld [vmem:[%s785 + $0x330] sm:$0xff]
        %v1759 = vld [vmem:[%s785 + $0x338] sm:$0xff]
        %v1760 = vld [vmem:[%s785 + $0x340] sm:$0xff]
        %v1761 = vld [vmem:[%s785 + $0x348] sm:$0xff]
        %v1762 = vld [vmem:[%s785 + $0x350] sm:$0xff]
        %v1763 = vld [vmem:[%s785 + $0x358] sm:$0xff]
        %v1764 = vld [vmem:[%s785 + $0x360] sm:$0xff]
        %v1765 = vld [vmem:[%s785 + $0x368] sm:$0xff]
        %v1766 = vld [vmem:[%s785 + $0x370] sm:$0xff]
        %v1767 = vld [vmem:[%s785 + $0x378] sm:$0xff]
        %v1768 = vld [vmem:[%s785 + $0x380] sm:$0xff]
        %v1769 = vld [vmem:[%s785 + $0x388] sm:$0xff]
        %v1770 = vld [vmem:[%s785 + $0x390] sm:$0xff]
        %v1771 = vld [vmem:[%s785 + $0x398] sm:$0xff]
        %v1772 = vld [vmem:[%s785 + $0x3a0] sm:$0xff]
        %v1773 = vld [vmem:[%s785 + $0x3a8] sm:$0xff]
        %v1774 = vld [vmem:[%s785 + $0x3b0] sm:$0xff]
        %v1775 = vld [vmem:[%s785 + $0x3b8] sm:$0xff]
        %v1776 = vld [vmem:[%s785 + $0x3c0] sm:$0xff]
        %v1777 = vld [vmem:[%s785 + $0x3c8] sm:$0xff]
        %v1778 = vld [vmem:[%s785 + $0x3d0] sm:$0xff]
        %v1779 = vld [vmem:[%s785 + $0x3d8] sm:$0xff]
        %v1780 = vld [vmem:[%s785 + $0x3e0] sm:$0xff]
        %v1781 = vld [vmem:[%s785 + $0x3e8] sm:$0xff]
        %v1782 = vld [vmem:[%s785 + $0x3f0] sm:$0xff]
        %v1783 = vld [vmem:[%s785 + $0x3f8] sm:$0xff]
        %v1848 = vunpack.c.l.b16 %v1592
        %v1849 = vunpack.c.h.b16 %v1592
        %v1850 = vunpack.c.l.b16 %v1593
        %v1851 = vunpack.c.h.b16 %v1593
        %v1852 = vunpack.c.l.b16 %v1594
        %v1853 = vunpack.c.h.b16 %v1594
        %v1854 = vunpack.c.l.b16 %v1595
        %v1855 = vunpack.c.h.b16 %v1595
        %v1856 = vunpack.c.l.b16 %v1596
        %v1857 = vunpack.c.h.b16 %v1596
        %v1858 = vunpack.c.l.b16 %v1597
        %v1859 = vunpack.c.h.b16 %v1597
        %v1860 = vunpack.c.l.b16 %v1598
        %v1861 = vunpack.c.h.b16 %v1598
        %v1862 = vunpack.c.l.b16 %v1599
        %v1863 = vunpack.c.h.b16 %v1599
        %v1864 = vunpack.c.l.b16 %v1600
        %v1865 = vunpack.c.h.b16 %v1600
        %v1866 = vunpack.c.l.b16 %v1601
        %v1867 = vunpack.c.h.b16 %v1601
        %v1868 = vunpack.c.l.b16 %v1602
        %v1869 = vunpack.c.h.b16 %v1602
        %v1870 = vunpack.c.l.b16 %v1603
        %v1871 = vunpack.c.h.b16 %v1603
        %v1872 = vunpack.c.l.b16 %v1604
        %v1873 = vunpack.c.h.b16 %v1604
        %v1874 = vunpack.c.l.b16 %v1605
        %v1875 = vunpack.c.h.b16 %v1605
        %v1876 = vunpack.c.l.b16 %v1606
        %v1877 = vunpack.c.h.b16 %v1606
        %v1878 = vunpack.c.l.b16 %v1607
        %v1879 = vunpack.c.h.b16 %v1607
        %v1880 = vunpack.c.l.b16 %v1608
        %v1881 = vunpack.c.h.b16 %v1608
        %v1882 = vunpack.c.l.b16 %v1609
        %v1883 = vunpack.c.h.b16 %v1609
        %v1884 = vunpack.c.l.b16 %v1610
        %v1885 = vunpack.c.h.b16 %v1610
        %v1886 = vunpack.c.l.b16 %v1611
        %v1887 = vunpack.c.h.b16 %v1611
        %v1888 = vunpack.c.l.b16 %v1612
        %v1889 = vunpack.c.h.b16 %v1612
        %v1890 = vunpack.c.l.b16 %v1613
        %v1891 = vunpack.c.h.b16 %v1613
        %v1892 = vunpack.c.l.b16 %v1614
        %v1893 = vunpack.c.h.b16 %v1614
        %v1894 = vunpack.c.l.b16 %v1615
        %v1895 = vunpack.c.h.b16 %v1615
        %v1896 = vunpack.c.l.b16 %v1616
        %v1897 = vunpack.c.h.b16 %v1616
        %v1898 = vunpack.c.l.b16 %v1617
        %v1899 = vunpack.c.h.b16 %v1617
        %v1900 = vunpack.c.l.b16 %v1618
        %v1901 = vunpack.c.h.b16 %v1618
        %v1902 = vunpack.c.l.b16 %v1619
        %v1903 = vunpack.c.h.b16 %v1619
        %v1904 = vunpack.c.l.b16 %v1620
        %v1905 = vunpack.c.h.b16 %v1620
        %v1906 = vunpack.c.l.b16 %v1621
        %v1907 = vunpack.c.h.b16 %v1621
        %v1908 = vunpack.c.l.b16 %v1622
        %v1909 = vunpack.c.h.b16 %v1622
        %v1910 = vunpack.c.l.b16 %v1623
        %v1911 = vunpack.c.h.b16 %v1623
        %v1912 = vunpack.c.l.b16 %v1624
        %v1913 = vunpack.c.h.b16 %v1624
        %v1914 = vunpack.c.l.b16 %v1625
        %v1915 = vunpack.c.h.b16 %v1625
        %v1916 = vunpack.c.l.b16 %v1626
        %v1917 = vunpack.c.h.b16 %v1626
        %v1918 = vunpack.c.l.b16 %v1627
        %v1919 = vunpack.c.h.b16 %v1627
        %v1920 = vunpack.c.l.b16 %v1628
        %v1921 = vunpack.c.h.b16 %v1628
        %v1922 = vunpack.c.l.b16 %v1629
        %v1923 = vunpack.c.h.b16 %v1629
        %v1924 = vunpack.c.l.b16 %v1630
        %v1925 = vunpack.c.h.b16 %v1630
        %v1926 = vunpack.c.l.b16 %v1631
        %v1927 = vunpack.c.h.b16 %v1631
        %v1928 = vunpack.c.l.b16 %v1632
        %v1929 = vunpack.c.h.b16 %v1632
        %v1930 = vunpack.c.l.b16 %v1633
        %v1931 = vunpack.c.h.b16 %v1633
        %v1932 = vunpack.c.l.b16 %v1634
        %v1933 = vunpack.c.h.b16 %v1634
        %v1934 = vunpack.c.l.b16 %v1635
        %v1935 = vunpack.c.h.b16 %v1635
        %v1936 = vunpack.c.l.b16 %v1636
        %v1937 = vunpack.c.h.b16 %v1636
        %v1938 = vunpack.c.l.b16 %v1637
        %v1939 = vunpack.c.h.b16 %v1637
        %v1940 = vunpack.c.l.b16 %v1638
        %v1941 = vunpack.c.h.b16 %v1638
        %v1942 = vunpack.c.l.b16 %v1639
        %v1943 = vunpack.c.h.b16 %v1639
        %v1944 = vunpack.c.l.b16 %v1640
        %v1945 = vunpack.c.h.b16 %v1640
        %v1946 = vunpack.c.l.b16 %v1641
        %v1947 = vunpack.c.h.b16 %v1641
        %v1948 = vunpack.c.l.b16 %v1642
        %v1949 = vunpack.c.h.b16 %v1642
        %v1950 = vunpack.c.l.b16 %v1643
        %v1951 = vunpack.c.h.b16 %v1643
        %v1952 = vunpack.c.l.b16 %v1644
        %v1953 = vunpack.c.h.b16 %v1644
        %v1954 = vunpack.c.l.b16 %v1645
        %v1955 = vunpack.c.h.b16 %v1645
        %v1956 = vunpack.c.l.b16 %v1646
        %v1957 = vunpack.c.h.b16 %v1646
        %v1958 = vunpack.c.l.b16 %v1647
        %v1959 = vunpack.c.h.b16 %v1647
        %v1960 = vunpack.c.l.b16 %v1648
        %v1961 = vunpack.c.h.b16 %v1648
        %v1962 = vunpack.c.l.b16 %v1649
        %v1963 = vunpack.c.h.b16 %v1649
        %v1964 = vunpack.c.l.b16 %v1650
        %v1965 = vunpack.c.h.b16 %v1650
        %v1966 = vunpack.c.l.b16 %v1651
        %v1967 = vunpack.c.h.b16 %v1651
        %v1968 = vunpack.c.l.b16 %v1652
        %v1969 = vunpack.c.h.b16 %v1652
        %v1970 = vunpack.c.l.b16 %v1653
        %v1971 = vunpack.c.h.b16 %v1653
        %v1972 = vunpack.c.l.b16 %v1654
        %v1973 = vunpack.c.h.b16 %v1654
        %v1974 = vunpack.c.l.b16 %v1655
        %v1975 = vunpack.c.h.b16 %v1655
        %v1976 = vlaneseq
        %v1977 = vand.u32 %v1976, 127
        %v1978 = vlaneseq
        %v1979 = vshrl.u32 %v1978, 7
        %v1980 = vsub.s32 %v1977, %v1979
        %v1981 = vrot.slane %v1848, %v1980
        %v1982 = vadd.s32 %v1977, 4294967288
        %v1983 = vlaneseq
        %v1984 = vshrl.u32 %v1983, 7
        %v1985 = vsub.s32 %v1982, %v1984
        %v1986 = vrot.slane %v1849, %v1985
        %vm1987 = vcmask 130112
        %v1988 = vsel %vm1987, %v1986, %v1981
        %v1989 = vadd.s32 %v1977, 4294967280
        %v1990 = vlaneseq
        %v1991 = vshrl.u32 %v1990, 7
        %v1992 = vsub.s32 %v1989, %v1991
        %v1993 = vrot.slane %v1850, %v1992
        %vm1994 = vcmask 195712
        %v1995 = vsel %vm1994, %v1993, %v1988
        %v1996 = vadd.s32 %v1977, 4294967272
        %v1997 = vlaneseq
        %v1998 = vshrl.u32 %v1997, 7
        %v1999 = vsub.s32 %v1996, %v1998
        %v2000 = vrot.slane %v1851, %v1999
        %vm2001 = vcmask 261312
        %v2002 = vsel %vm2001, %v2000, %v1995
        %v2003 = vadd.s32 %v1977, 4294967264
        %v2004 = vlaneseq
        %v2005 = vshrl.u32 %v2004, 7
        %v2006 = vsub.s32 %v2003, %v2005
        %v2007 = vrot.slane %v1852, %v2006
        %vm2008 = vcmask 326912
        %v2009 = vsel %vm2008, %v2007, %v2002
        %v2010 = vadd.s32 %v1977, 4294967256
        %v2011 = vlaneseq
        %v2012 = vshrl.u32 %v2011, 7
        %v2013 = vsub.s32 %v2010, %v2012
        %v2014 = vrot.slane %v1853, %v2013
        %vm2015 = vcmask 392512
        %v2016 = vsel %vm2015, %v2014, %v2009
        %v2017 = vadd.s32 %v1977, 4294967248
        %v2018 = vlaneseq
        %v2019 = vshrl.u32 %v2018, 7
        %v2020 = vsub.s32 %v2017, %v2019
        %v2021 = vrot.slane %v1854, %v2020
        %vm2022 = vcmask 458112
        %v2023 = vsel %vm2022, %v2021, %v2016
        %v2024 = vadd.s32 %v1977, 4294967240
        %v2025 = vlaneseq
        %v2026 = vshrl.u32 %v2025, 7
        %v2027 = vsub.s32 %v2024, %v2026
        %v2028 = vrot.slane %v1855, %v2027
        %vm2029 = vcmask 523712
        %v2030 = vsel %vm2029, %v2028, %v2023
        %v2031 = vadd.s32 %v1977, 4294967232
        %v2032 = vlaneseq
        %v2033 = vshrl.u32 %v2032, 7
        %v2034 = vsub.s32 %v2031, %v2033
        %v2035 = vrot.slane %v1856, %v2034
        %vm2036 = vcmask 589312
        %v2037 = vsel %vm2036, %v2035, %v2030
        %v2038 = vadd.s32 %v1977, 4294967224
        %v2039 = vlaneseq
        %v2040 = vshrl.u32 %v2039, 7
        %v2041 = vsub.s32 %v2038, %v2040
        %v2042 = vrot.slane %v1857, %v2041
        %vm2043 = vcmask 654912
        %v2044 = vsel %vm2043, %v2042, %v2037
        %v2045 = vadd.s32 %v1977, 4294967216
        %v2046 = vlaneseq
        %v2047 = vshrl.u32 %v2046, 7
        %v2048 = vsub.s32 %v2045, %v2047
        %v2049 = vrot.slane %v1858, %v2048
        %vm2050 = vcmask 720512
        %v2051 = vsel %vm2050, %v2049, %v2044
        %v2052 = vadd.s32 %v1977, 4294967208
        %v2053 = vlaneseq
        %v2054 = vshrl.u32 %v2053, 7
        %v2055 = vsub.s32 %v2052, %v2054
        %v2056 = vrot.slane %v1859, %v2055
        %vm2057 = vcmask 786112
        %v2058 = vsel %vm2057, %v2056, %v2051
        %v2059 = vadd.s32 %v1977, 4294967200
        %v2060 = vlaneseq
        %v2061 = vshrl.u32 %v2060, 7
        %v2062 = vsub.s32 %v2059, %v2061
        %v2063 = vrot.slane %v1860, %v2062
        %vm2064 = vcmask 851712
        %v2065 = vsel %vm2064, %v2063, %v2058
        %v2066 = vadd.s32 %v1977, 4294967192
        %v2067 = vlaneseq
        %v2068 = vshrl.u32 %v2067, 7
        %v2069 = vsub.s32 %v2066, %v2068
        %v2070 = vrot.slane %v1861, %v2069
        %vm2071 = vcmask 917312
        %v2072 = vsel %vm2071, %v2070, %v2065
        %v2073 = vadd.s32 %v1977, 4294967184
        %v2074 = vlaneseq
        %v2075 = vshrl.u32 %v2074, 7
        %v2076 = vsub.s32 %v2073, %v2075
        %v2077 = vrot.slane %v1862, %v2076
        %vm2078 = vcmask 982912
        %v2079 = vsel %vm2078, %v2077, %v2072
        %v2080 = vadd.s32 %v1977, 4294967176
        %v2081 = vlaneseq
        %v2082 = vshrl.u32 %v2081, 7
        %v2083 = vsub.s32 %v2080, %v2082
        %v2084 = vrot.slane %v1863, %v2083
        %vm2085 = vcmask 1048512
        %v2086 = vsel %vm2085, %v2084, %v2079
        %v2087 = vlaneseq
        %v2088 = vshrl.u32 %v2087, 7
        %v2089 = vsub.s32 %v1977, %v2088
        %v2090 = vrot.slane %v1864, %v2089
        %v2091 = vlaneseq
        %v2092 = vshrl.u32 %v2091, 7
        %v2093 = vsub.s32 %v1982, %v2092
        %v2094 = vrot.slane %v1865, %v2093
        %v2095 = vsel %vm1987, %v2094, %v2090
        %v2096 = vlaneseq
        %v2097 = vshrl.u32 %v2096, 7
        %v2098 = vsub.s32 %v1989, %v2097
        %v2099 = vrot.slane %v1866, %v2098
        %v2100 = vsel %vm1994, %v2099, %v2095
        %v2101 = vlaneseq
        %v2102 = vshrl.u32 %v2101, 7
        %v2103 = vsub.s32 %v1996, %v2102
        %v2104 = vrot.slane %v1867, %v2103
        %v2105 = vsel %vm2001, %v2104, %v2100
        %v2106 = vlaneseq
        %v2107 = vshrl.u32 %v2106, 7
        %v2108 = vsub.s32 %v2003, %v2107
        %v2109 = vrot.slane %v1868, %v2108
        %v2110 = vsel %vm2008, %v2109, %v2105
        %v2111 = vlaneseq
        %v2112 = vshrl.u32 %v2111, 7
        %v2113 = vsub.s32 %v2010, %v2112
        %v2114 = vrot.slane %v1869, %v2113
        %v2115 = vsel %vm2015, %v2114, %v2110
        %v2116 = vlaneseq
        %v2117 = vshrl.u32 %v2116, 7
        %v2118 = vsub.s32 %v2017, %v2117
        %v2119 = vrot.slane %v1870, %v2118
        %v2120 = vsel %vm2022, %v2119, %v2115
        %v2121 = vlaneseq
        %v2122 = vshrl.u32 %v2121, 7
        %v2123 = vsub.s32 %v2024, %v2122
        %v2124 = vrot.slane %v1871, %v2123
        %v2125 = vsel %vm2029, %v2124, %v2120
        %v2126 = vlaneseq
        %v2127 = vshrl.u32 %v2126, 7
        %v2128 = vsub.s32 %v2031, %v2127
        %v2129 = vrot.slane %v1872, %v2128
        %v2130 = vsel %vm2036, %v2129, %v2125
        %v2131 = vlaneseq
        %v2132 = vshrl.u32 %v2131, 7
        %v2133 = vsub.s32 %v2038, %v2132
        %v2134 = vrot.slane %v1873, %v2133
        %v2135 = vsel %vm2043, %v2134, %v2130
        %v2136 = vlaneseq
        %v2137 = vshrl.u32 %v2136, 7
        %v2138 = vsub.s32 %v2045, %v2137
        %v2139 = vrot.slane %v1874, %v2138
        %v2140 = vsel %vm2050, %v2139, %v2135
        %v2141 = vlaneseq
        %v2142 = vshrl.u32 %v2141, 7
        %v2143 = vsub.s32 %v2052, %v2142
        %v2144 = vrot.slane %v1875, %v2143
        %v2145 = vsel %vm2057, %v2144, %v2140
        %v2146 = vlaneseq
        %v2147 = vshrl.u32 %v2146, 7
        %v2148 = vsub.s32 %v2059, %v2147
        %v2149 = vrot.slane %v1876, %v2148
        %v2150 = vsel %vm2064, %v2149, %v2145
        %v2151 = vlaneseq
        %v2152 = vshrl.u32 %v2151, 7
        %v2153 = vsub.s32 %v2066, %v2152
        %v2154 = vrot.slane %v1877, %v2153
        %v2155 = vsel %vm2071, %v2154, %v2150
        %v2156 = vlaneseq
        %v2157 = vshrl.u32 %v2156, 7
        %v2158 = vsub.s32 %v2073, %v2157
        %v2159 = vrot.slane %v1878, %v2158
        %v2160 = vsel %vm2078, %v2159, %v2155
        %v2161 = vlaneseq
        %v2162 = vshrl.u32 %v2161, 7
        %v2163 = vsub.s32 %v2080, %v2162
        %v2164 = vrot.slane %v1879, %v2163
        %v2165 = vsel %vm2085, %v2164, %v2160
        %v2166 = vlaneseq
        %v2167 = vshrl.u32 %v2166, 7
        %v2168 = vsub.s32 %v1977, %v2167
        %v2169 = vrot.slane %v1880, %v2168
        %v2170 = vlaneseq
        %v2171 = vshrl.u32 %v2170, 7
        %v2172 = vsub.s32 %v1982, %v2171
        %v2173 = vrot.slane %v1881, %v2172
        %v2174 = vsel %vm1987, %v2173, %v2169
        %v2175 = vlaneseq
        %v2176 = vshrl.u32 %v2175, 7
        %v2177 = vsub.s32 %v1989, %v2176
        %v2178 = vrot.slane %v1882, %v2177
        %v2179 = vsel %vm1994, %v2178, %v2174
        %v2180 = vlaneseq
        %v2181 = vshrl.u32 %v2180, 7
        %v2182 = vsub.s32 %v1996, %v2181
        %v2183 = vrot.slane %v1883, %v2182
        %v2184 = vsel %vm2001, %v2183, %v2179
        %v2185 = vlaneseq
        %v2186 = vshrl.u32 %v2185, 7
        %v2187 = vsub.s32 %v2003, %v2186
        %v2188 = vrot.slane %v1884, %v2187
        %v2189 = vsel %vm2008, %v2188, %v2184
        %v2190 = vlaneseq
        %v2191 = vshrl.u32 %v2190, 7
        %v2192 = vsub.s32 %v2010, %v2191
        %v2193 = vrot.slane %v1885, %v2192
        %v2194 = vsel %vm2015, %v2193, %v2189
        %v2195 = vlaneseq
        %v2196 = vshrl.u32 %v2195, 7
        %v2197 = vsub.s32 %v2017, %v2196
        %v2198 = vrot.slane %v1886, %v2197
        %v2199 = vsel %vm2022, %v2198, %v2194
        %v2200 = vlaneseq
        %v2201 = vshrl.u32 %v2200, 7
        %v2202 = vsub.s32 %v2024, %v2201
        %v2203 = vrot.slane %v1887, %v2202
        %v2204 = vsel %vm2029, %v2203, %v2199
        %v2205 = vlaneseq
        %v2206 = vshrl.u32 %v2205, 7
        %v2207 = vsub.s32 %v2031, %v2206
        %v2208 = vrot.slane %v1888, %v2207
        %v2209 = vsel %vm2036, %v2208, %v2204
        %v2210 = vlaneseq
        %v2211 = vshrl.u32 %v2210, 7
        %v2212 = vsub.s32 %v2038, %v2211
        %v2213 = vrot.slane %v1889, %v2212
        %v2214 = vsel %vm2043, %v2213, %v2209
        %v2215 = vlaneseq
        %v2216 = vshrl.u32 %v2215, 7
        %v2217 = vsub.s32 %v2045, %v2216
        %v2218 = vrot.slane %v1890, %v2217
        %v2219 = vsel %vm2050, %v2218, %v2214
        %v2220 = vlaneseq
        %v2221 = vshrl.u32 %v2220, 7
        %v2222 = vsub.s32 %v2052, %v2221
        %v2223 = vrot.slane %v1891, %v2222
        %v2224 = vsel %vm2057, %v2223, %v2219
        %v2225 = vlaneseq
        %v2226 = vshrl.u32 %v2225, 7
        %v2227 = vsub.s32 %v2059, %v2226
        %v2228 = vrot.slane %v1892, %v2227
        %v2229 = vsel %vm2064, %v2228, %v2224
        %v2230 = vlaneseq
        %v2231 = vshrl.u32 %v2230, 7
        %v2232 = vsub.s32 %v2066, %v2231
        %v2233 = vrot.slane %v1893, %v2232
        %v2234 = vsel %vm2071, %v2233, %v2229
        %v2235 = vlaneseq
        %v2236 = vshrl.u32 %v2235, 7
        %v2237 = vsub.s32 %v2073, %v2236
        %v2238 = vrot.slane %v1894, %v2237
        %v2239 = vsel %vm2078, %v2238, %v2234
        %v2240 = vlaneseq
        %v2241 = vshrl.u32 %v2240, 7
        %v2242 = vsub.s32 %v2080, %v2241
        %v2243 = vrot.slane %v1895, %v2242
        %v2244 = vsel %vm2085, %v2243, %v2239
        %v2245 = vlaneseq
        %v2246 = vshrl.u32 %v2245, 7
        %v2247 = vsub.s32 %v1977, %v2246
        %v2248 = vrot.slane %v1896, %v2247
        %v2249 = vlaneseq
        %v2250 = vshrl.u32 %v2249, 7
        %v2251 = vsub.s32 %v1982, %v2250
        %v2252 = vrot.slane %v1897, %v2251
        %v2253 = vsel %vm1987, %v2252, %v2248
        %v2254 = vlaneseq
        %v2255 = vshrl.u32 %v2254, 7
        %v2256 = vsub.s32 %v1989, %v2255
        %v2257 = vrot.slane %v1898, %v2256
        %v2258 = vsel %vm1994, %v2257, %v2253
        %v2259 = vlaneseq
        %v2260 = vshrl.u32 %v2259, 7
        %v2261 = vsub.s32 %v1996, %v2260
        %v2262 = vrot.slane %v1899, %v2261
        %v2263 = vsel %vm2001, %v2262, %v2258
        %v2264 = vlaneseq
        %v2265 = vshrl.u32 %v2264, 7
        %v2266 = vsub.s32 %v2003, %v2265
        %v2267 = vrot.slane %v1900, %v2266
        %v2268 = vsel %vm2008, %v2267, %v2263
        %v2269 = vlaneseq
        %v2270 = vshrl.u32 %v2269, 7
        %v2271 = vsub.s32 %v2010, %v2270
        %v2272 = vrot.slane %v1901, %v2271
        %v2273 = vsel %vm2015, %v2272, %v2268
        %v2274 = vlaneseq
        %v2275 = vshrl.u32 %v2274, 7
        %v2276 = vsub.s32 %v2017, %v2275
        %v2277 = vrot.slane %v1902, %v2276
        %v2278 = vsel %vm2022, %v2277, %v2273
        %v2279 = vlaneseq
        %v2280 = vshrl.u32 %v2279, 7
        %v2281 = vsub.s32 %v2024, %v2280
        %v2282 = vrot.slane %v1903, %v2281
        %v2283 = vsel %vm2029, %v2282, %v2278
        %v2284 = vlaneseq
        %v2285 = vshrl.u32 %v2284, 7
        %v2286 = vsub.s32 %v2031, %v2285
        %v2287 = vrot.slane %v1904, %v2286
        %v2288 = vsel %vm2036, %v2287, %v2283
        %v2289 = vlaneseq
        %v2290 = vshrl.u32 %v2289, 7
        %v2291 = vsub.s32 %v2038, %v2290
        %v2292 = vrot.slane %v1905, %v2291
        %v2293 = vsel %vm2043, %v2292, %v2288
        %v2294 = vlaneseq
        %v2295 = vshrl.u32 %v2294, 7
        %v2296 = vsub.s32 %v2045, %v2295
        %v2297 = vrot.slane %v1906, %v2296
        %v2298 = vsel %vm2050, %v2297, %v2293
        %v2299 = vlaneseq
        %v2300 = vshrl.u32 %v2299, 7
        %v2301 = vsub.s32 %v2052, %v2300
        %v2302 = vrot.slane %v1907, %v2301
        %v2303 = vsel %vm2057, %v2302, %v2298
        %v2304 = vlaneseq
        %v2305 = vshrl.u32 %v2304, 7
        %v2306 = vsub.s32 %v2059, %v2305
        %v2307 = vrot.slane %v1908, %v2306
        %v2308 = vsel %vm2064, %v2307, %v2303
        %v2309 = vlaneseq
        %v2310 = vshrl.u32 %v2309, 7
        %v2311 = vsub.s32 %v2066, %v2310
        %v2312 = vrot.slane %v1909, %v2311
        %v2313 = vsel %vm2071, %v2312, %v2308
        %v2314 = vlaneseq
        %v2315 = vshrl.u32 %v2314, 7
        %v2316 = vsub.s32 %v2073, %v2315
        %v2317 = vrot.slane %v1910, %v2316
        %v2318 = vsel %vm2078, %v2317, %v2313
        %v2319 = vlaneseq
        %v2320 = vshrl.u32 %v2319, 7
        %v2321 = vsub.s32 %v2080, %v2320
        %v2322 = vrot.slane %v1911, %v2321
        %v2323 = vsel %vm2085, %v2322, %v2318
        %v2324 = vlaneseq
        %v2325 = vshrl.u32 %v2324, 7
        %v2326 = vsub.s32 %v1977, %v2325
        %v2327 = vrot.slane %v1912, %v2326
        %v2328 = vlaneseq
        %v2329 = vshrl.u32 %v2328, 7
        %v2330 = vsub.s32 %v1982, %v2329
        %v2331 = vrot.slane %v1913, %v2330
        %v2332 = vsel %vm1987, %v2331, %v2327
        %v2333 = vlaneseq
        %v2334 = vshrl.u32 %v2333, 7
        %v2335 = vsub.s32 %v1989, %v2334
        %v2336 = vrot.slane %v1914, %v2335
        %v2337 = vsel %vm1994, %v2336, %v2332
        %v2338 = vlaneseq
        %v2339 = vshrl.u32 %v2338, 7
        %v2340 = vsub.s32 %v1996, %v2339
        %v2341 = vrot.slane %v1915, %v2340
        %v2342 = vsel %vm2001, %v2341, %v2337
        %v2343 = vlaneseq
        %v2344 = vshrl.u32 %v2343, 7
        %v2345 = vsub.s32 %v2003, %v2344
        %v2346 = vrot.slane %v1916, %v2345
        %v2347 = vsel %vm2008, %v2346, %v2342
        %v2348 = vlaneseq
        %v2349 = vshrl.u32 %v2348, 7
        %v2350 = vsub.s32 %v2010, %v2349
        %v2351 = vrot.slane %v1917, %v2350
        %v2352 = vsel %vm2015, %v2351, %v2347
        %v2353 = vlaneseq
        %v2354 = vshrl.u32 %v2353, 7
        %v2355 = vsub.s32 %v2017, %v2354
        %v2356 = vrot.slane %v1918, %v2355
        %v2357 = vsel %vm2022, %v2356, %v2352
        %v2358 = vlaneseq
        %v2359 = vshrl.u32 %v2358, 7
        %v2360 = vsub.s32 %v2024, %v2359
        %v2361 = vrot.slane %v1919, %v2360
        %v2362 = vsel %vm2029, %v2361, %v2357
        %v2363 = vlaneseq
        %v2364 = vshrl.u32 %v2363, 7
        %v2365 = vsub.s32 %v2031, %v2364
        %v2366 = vrot.slane %v1920, %v2365
        %v2367 = vsel %vm2036, %v2366, %v2362
        %v2368 = vlaneseq
        %v2369 = vshrl.u32 %v2368, 7
        %v2370 = vsub.s32 %v2038, %v2369
        %v2371 = vrot.slane %v1921, %v2370
        %v2372 = vsel %vm2043, %v2371, %v2367
        %v2373 = vlaneseq
        %v2374 = vshrl.u32 %v2373, 7
        %v2375 = vsub.s32 %v2045, %v2374
        %v2376 = vrot.slane %v1922, %v2375
        %v2377 = vsel %vm2050, %v2376, %v2372
        %v2378 = vlaneseq
        %v2379 = vshrl.u32 %v2378, 7
        %v2380 = vsub.s32 %v2052, %v2379
        %v2381 = vrot.slane %v1923, %v2380
        %v2382 = vsel %vm2057, %v2381, %v2377
        %v2383 = vlaneseq
        %v2384 = vshrl.u32 %v2383, 7
        %v2385 = vsub.s32 %v2059, %v2384
        %v2386 = vrot.slane %v1924, %v2385
        %v2387 = vsel %vm2064, %v2386, %v2382
        %v2388 = vlaneseq
        %v2389 = vshrl.u32 %v2388, 7
        %v2390 = vsub.s32 %v2066, %v2389
        %v2391 = vrot.slane %v1925, %v2390
        %v2392 = vsel %vm2071, %v2391, %v2387
        %v2393 = vlaneseq
        %v2394 = vshrl.u32 %v2393, 7
        %v2395 = vsub.s32 %v2073, %v2394
        %v2396 = vrot.slane %v1926, %v2395
        %v2397 = vsel %vm2078, %v2396, %v2392
        %v2398 = vlaneseq
        %v2399 = vshrl.u32 %v2398, 7
        %v2400 = vsub.s32 %v2080, %v2399
        %v2401 = vrot.slane %v1927, %v2400
        %v2402 = vsel %vm2085, %v2401, %v2397
        %v2403 = vlaneseq
        %v2404 = vshrl.u32 %v2403, 7
        %v2405 = vsub.s32 %v1977, %v2404
        %v2406 = vrot.slane %v1928, %v2405
        %v2407 = vlaneseq
        %v2408 = vshrl.u32 %v2407, 7
        %v2409 = vsub.s32 %v1982, %v2408
        %v2410 = vrot.slane %v1929, %v2409
        %v2411 = vsel %vm1987, %v2410, %v2406
        %v2412 = vlaneseq
        %v2413 = vshrl.u32 %v2412, 7
        %v2414 = vsub.s32 %v1989, %v2413
        %v2415 = vrot.slane %v1930, %v2414
        %v2416 = vsel %vm1994, %v2415, %v2411
        %v2417 = vlaneseq
        %v2418 = vshrl.u32 %v2417, 7
        %v2419 = vsub.s32 %v1996, %v2418
        %v2420 = vrot.slane %v1931, %v2419
        %v2421 = vsel %vm2001, %v2420, %v2416
        %v2422 = vlaneseq
        %v2423 = vshrl.u32 %v2422, 7
        %v2424 = vsub.s32 %v2003, %v2423
        %v2425 = vrot.slane %v1932, %v2424
        %v2426 = vsel %vm2008, %v2425, %v2421
        %v2427 = vlaneseq
        %v2428 = vshrl.u32 %v2427, 7
        %v2429 = vsub.s32 %v2010, %v2428
        %v2430 = vrot.slane %v1933, %v2429
        %v2431 = vsel %vm2015, %v2430, %v2426
        %v2432 = vlaneseq
        %v2433 = vshrl.u32 %v2432, 7
        %v2434 = vsub.s32 %v2017, %v2433
        %v2435 = vrot.slane %v1934, %v2434
        %v2436 = vsel %vm2022, %v2435, %v2431
        %v2437 = vlaneseq
        %v2438 = vshrl.u32 %v2437, 7
        %v2439 = vsub.s32 %v2024, %v2438
        %v2440 = vrot.slane %v1935, %v2439
        %v2441 = vsel %vm2029, %v2440, %v2436
        %v2442 = vlaneseq
        %v2443 = vshrl.u32 %v2442, 7
        %v2444 = vsub.s32 %v2031, %v2443
        %v2445 = vrot.slane %v1936, %v2444
        %v2446 = vsel %vm2036, %v2445, %v2441
        %v2447 = vlaneseq
        %v2448 = vshrl.u32 %v2447, 7
        %v2449 = vsub.s32 %v2038, %v2448
        %v2450 = vrot.slane %v1937, %v2449
        %v2451 = vsel %vm2043, %v2450, %v2446
        %v2452 = vlaneseq
        %v2453 = vshrl.u32 %v2452, 7
        %v2454 = vsub.s32 %v2045, %v2453
        %v2455 = vrot.slane %v1938, %v2454
        %v2456 = vsel %vm2050, %v2455, %v2451
        %v2457 = vlaneseq
        %v2458 = vshrl.u32 %v2457, 7
        %v2459 = vsub.s32 %v2052, %v2458
        %v2460 = vrot.slane %v1939, %v2459
        %v2461 = vsel %vm2057, %v2460, %v2456
        %v2462 = vlaneseq
        %v2463 = vshrl.u32 %v2462, 7
        %v2464 = vsub.s32 %v2059, %v2463
        %v2465 = vrot.slane %v1940, %v2464
        %v2466 = vsel %vm2064, %v2465, %v2461
        %v2467 = vlaneseq
        %v2468 = vshrl.u32 %v2467, 7
        %v2469 = vsub.s32 %v2066, %v2468
        %v2470 = vrot.slane %v1941, %v2469
        %v2471 = vsel %vm2071, %v2470, %v2466
        %v2472 = vlaneseq
        %v2473 = vshrl.u32 %v2472, 7
        %v2474 = vsub.s32 %v2073, %v2473
        %v2475 = vrot.slane %v1942, %v2474
        %v2476 = vsel %vm2078, %v2475, %v2471
        %v2477 = vlaneseq
        %v2478 = vshrl.u32 %v2477, 7
        %v2479 = vsub.s32 %v2080, %v2478
        %v2480 = vrot.slane %v1943, %v2479
        %v2481 = vsel %vm2085, %v2480, %v2476
        %v2482 = vlaneseq
        %v2483 = vshrl.u32 %v2482, 7
        %v2484 = vsub.s32 %v1977, %v2483
        %v2485 = vrot.slane %v1944, %v2484
        %v2486 = vlaneseq
        %v2487 = vshrl.u32 %v2486, 7
        %v2488 = vsub.s32 %v1982, %v2487
        %v2489 = vrot.slane %v1945, %v2488
        %v2490 = vsel %vm1987, %v2489, %v2485
        %v2491 = vlaneseq
        %v2492 = vshrl.u32 %v2491, 7
        %v2493 = vsub.s32 %v1989, %v2492
        %v2494 = vrot.slane %v1946, %v2493
        %v2495 = vsel %vm1994, %v2494, %v2490
        %v2496 = vlaneseq
        %v2497 = vshrl.u32 %v2496, 7
        %v2498 = vsub.s32 %v1996, %v2497
        %v2499 = vrot.slane %v1947, %v2498
        %v2500 = vsel %vm2001, %v2499, %v2495
        %v2501 = vlaneseq
        %v2502 = vshrl.u32 %v2501, 7
        %v2503 = vsub.s32 %v2003, %v2502
        %v2504 = vrot.slane %v1948, %v2503
        %v2505 = vsel %vm2008, %v2504, %v2500
        %v2506 = vlaneseq
        %v2507 = vshrl.u32 %v2506, 7
        %v2508 = vsub.s32 %v2010, %v2507
        %v2509 = vrot.slane %v1949, %v2508
        %v2510 = vsel %vm2015, %v2509, %v2505
        %v2511 = vlaneseq
        %v2512 = vshrl.u32 %v2511, 7
        %v2513 = vsub.s32 %v2017, %v2512
        %v2514 = vrot.slane %v1950, %v2513
        %v2515 = vsel %vm2022, %v2514, %v2510
        %v2516 = vlaneseq
        %v2517 = vshrl.u32 %v2516, 7
        %v2518 = vsub.s32 %v2024, %v2517
        %v2519 = vrot.slane %v1951, %v2518
        %v2520 = vsel %vm2029, %v2519, %v2515
        %v2521 = vlaneseq
        %v2522 = vshrl.u32 %v2521, 7
        %v2523 = vsub.s32 %v2031, %v2522
        %v2524 = vrot.slane %v1952, %v2523
        %v2525 = vsel %vm2036, %v2524, %v2520
        %v2526 = vlaneseq
        %v2527 = vshrl.u32 %v2526, 7
        %v2528 = vsub.s32 %v2038, %v2527
        %v2529 = vrot.slane %v1953, %v2528
        %v2530 = vsel %vm2043, %v2529, %v2525
        %v2531 = vlaneseq
        %v2532 = vshrl.u32 %v2531, 7
        %v2533 = vsub.s32 %v2045, %v2532
        %v2534 = vrot.slane %v1954, %v2533
        %v2535 = vsel %vm2050, %v2534, %v2530
        %v2536 = vlaneseq
        %v2537 = vshrl.u32 %v2536, 7
        %v2538 = vsub.s32 %v2052, %v2537
        %v2539 = vrot.slane %v1955, %v2538
        %v2540 = vsel %vm2057, %v2539, %v2535
        %v2541 = vlaneseq
        %v2542 = vshrl.u32 %v2541, 7
        %v2543 = vsub.s32 %v2059, %v2542
        %v2544 = vrot.slane %v1956, %v2543
        %v2545 = vsel %vm2064, %v2544, %v2540
        %v2546 = vlaneseq
        %v2547 = vshrl.u32 %v2546, 7
        %v2548 = vsub.s32 %v2066, %v2547
        %v2549 = vrot.slane %v1957, %v2548
        %v2550 = vsel %vm2071, %v2549, %v2545
        %v2551 = vlaneseq
        %v2552 = vshrl.u32 %v2551, 7
        %v2553 = vsub.s32 %v2073, %v2552
        %v2554 = vrot.slane %v1958, %v2553
        %v2555 = vsel %vm2078, %v2554, %v2550
        %v2556 = vlaneseq
        %v2557 = vshrl.u32 %v2556, 7
        %v2558 = vsub.s32 %v2080, %v2557
        %v2559 = vrot.slane %v1959, %v2558
        %v2560 = vsel %vm2085, %v2559, %v2555
        %v2561 = vlaneseq
        %v2562 = vshrl.u32 %v2561, 7
        %v2563 = vsub.s32 %v1977, %v2562
        %v2564 = vrot.slane %v1960, %v2563
        %v2565 = vlaneseq
        %v2566 = vshrl.u32 %v2565, 7
        %v2567 = vsub.s32 %v1982, %v2566
        %v2568 = vrot.slane %v1961, %v2567
        %v2569 = vsel %vm1987, %v2568, %v2564
        %v2570 = vlaneseq
        %v2571 = vshrl.u32 %v2570, 7
        %v2572 = vsub.s32 %v1989, %v2571
        %v2573 = vrot.slane %v1962, %v2572
        %v2574 = vsel %vm1994, %v2573, %v2569
        %v2575 = vlaneseq
        %v2576 = vshrl.u32 %v2575, 7
        %v2577 = vsub.s32 %v1996, %v2576
        %v2578 = vrot.slane %v1963, %v2577
        %v2579 = vsel %vm2001, %v2578, %v2574
        %v2580 = vlaneseq
        %v2581 = vshrl.u32 %v2580, 7
        %v2582 = vsub.s32 %v2003, %v2581
        %v2583 = vrot.slane %v1964, %v2582
        %v2584 = vsel %vm2008, %v2583, %v2579
        %v2585 = vlaneseq
        %v2586 = vshrl.u32 %v2585, 7
        %v2587 = vsub.s32 %v2010, %v2586
        %v2588 = vrot.slane %v1965, %v2587
        %v2589 = vsel %vm2015, %v2588, %v2584
        %v2590 = vlaneseq
        %v2591 = vshrl.u32 %v2590, 7
        %v2592 = vsub.s32 %v2017, %v2591
        %v2593 = vrot.slane %v1966, %v2592
        %v2594 = vsel %vm2022, %v2593, %v2589
        %v2595 = vlaneseq
        %v2596 = vshrl.u32 %v2595, 7
        %v2597 = vsub.s32 %v2024, %v2596
        %v2598 = vrot.slane %v1967, %v2597
        %v2599 = vsel %vm2029, %v2598, %v2594
        %v2600 = vlaneseq
        %v2601 = vshrl.u32 %v2600, 7
        %v2602 = vsub.s32 %v2031, %v2601
        %v2603 = vrot.slane %v1968, %v2602
        %v2604 = vsel %vm2036, %v2603, %v2599
        %v2605 = vlaneseq
        %v2606 = vshrl.u32 %v2605, 7
        %v2607 = vsub.s32 %v2038, %v2606
        %v2608 = vrot.slane %v1969, %v2607
        %v2609 = vsel %vm2043, %v2608, %v2604
        %v2610 = vlaneseq
        %v2611 = vshrl.u32 %v2610, 7
        %v2612 = vsub.s32 %v2045, %v2611
        %v2613 = vrot.slane %v1970, %v2612
        %v2614 = vsel %vm2050, %v2613, %v2609
        %v2615 = vlaneseq
        %v2616 = vshrl.u32 %v2615, 7
        %v2617 = vsub.s32 %v2052, %v2616
        %v2618 = vrot.slane %v1971, %v2617
        %v2619 = vsel %vm2057, %v2618, %v2614
        %v2620 = vlaneseq
        %v2621 = vshrl.u32 %v2620, 7
        %v2622 = vsub.s32 %v2059, %v2621
        %v2623 = vrot.slane %v1972, %v2622
        %v2624 = vsel %vm2064, %v2623, %v2619
        %v2625 = vlaneseq
        %v2626 = vshrl.u32 %v2625, 7
        %v2627 = vsub.s32 %v2066, %v2626
        %v2628 = vrot.slane %v1973, %v2627
        %v2629 = vsel %vm2071, %v2628, %v2624
        %v2630 = vlaneseq
        %v2631 = vshrl.u32 %v2630, 7
        %v2632 = vsub.s32 %v2073, %v2631
        %v2633 = vrot.slane %v1974, %v2632
        %v2634 = vsel %vm2078, %v2633, %v2629
        %v2635 = vlaneseq
        %v2636 = vshrl.u32 %v2635, 7
        %v2637 = vsub.s32 %v2080, %v2636
        %v2638 = vrot.slane %v1975, %v2637
        %v2639 = vsel %vm2085, %v2638, %v2634
        %vm2640 = vcmask 1041409
        %v2641 = vsel %vm2640, %v2402, %v2086
        %v2642 = vsel %vm2640, %v2481, %v2165
        %v2643 = vsel %vm2640, %v2560, %v2244
        %v2644 = vsel %vm2640, %v2639, %v2323
        %v2645 = vpack.c.b16 %v2641, %v2641
        %v2646 = vpack.c.b16 %v2642, %v2642
        %v2647 = vpack.c.b16 %v2643, %v2643
        %v2648 = vpack.c.b16 %v2644, %v2644
        %v2781 = vunpack.c.l.b16 %v1656
        %v2782 = vunpack.c.h.b16 %v1656
        %v2783 = vunpack.c.l.b16 %v1657
        %v2784 = vunpack.c.h.b16 %v1657
        %v2785 = vunpack.c.l.b16 %v1658
        %v2786 = vunpack.c.h.b16 %v1658
        %v2787 = vunpack.c.l.b16 %v1659
        %v2788 = vunpack.c.h.b16 %v1659
        %v2789 = vunpack.c.l.b16 %v1660
        %v2790 = vunpack.c.h.b16 %v1660
        %v2791 = vunpack.c.l.b16 %v1661
        %v2792 = vunpack.c.h.b16 %v1661
        %v2793 = vunpack.c.l.b16 %v1662
        %v2794 = vunpack.c.h.b16 %v1662
        %v2795 = vunpack.c.l.b16 %v1663
        %v2796 = vunpack.c.h.b16 %v1663
        %v2797 = vunpack.c.l.b16 %v1664
        %v2798 = vunpack.c.h.b16 %v1664
        %v2799 = vunpack.c.l.b16 %v1665
        %v2800 = vunpack.c.h.b16 %v1665
        %v2801 = vunpack.c.l.b16 %v1666
        %v2802 = vunpack.c.h.b16 %v1666
        %v2803 = vunpack.c.l.b16 %v1667
        %v2804 = vunpack.c.h.b16 %v1667
        %v2805 = vunpack.c.l.b16 %v1668
        %v2806 = vunpack.c.h.b16 %v1668
        %v2807 = vunpack.c.l.b16 %v1669
        %v2808 = vunpack.c.h.b16 %v1669
        %v2809 = vunpack.c.l.b16 %v1670
        %v2810 = vunpack.c.h.b16 %v1670
        %v2811 = vunpack.c.l.b16 %v1671
        %v2812 = vunpack.c.h.b16 %v1671
        %v2813 = vunpack.c.l.b16 %v1672
        %v2814 = vunpack.c.h.b16 %v1672
        %v2815 = vunpack.c.l.b16 %v1673
        %v2816 = vunpack.c.h.b16 %v1673
        %v2817 = vunpack.c.l.b16 %v1674
        %v2818 = vunpack.c.h.b16 %v1674
        %v2819 = vunpack.c.l.b16 %v1675
        %v2820 = vunpack.c.h.b16 %v1675
        %v2821 = vunpack.c.l.b16 %v1676
        %v2822 = vunpack.c.h.b16 %v1676
        %v2823 = vunpack.c.l.b16 %v1677
        %v2824 = vunpack.c.h.b16 %v1677
        %v2825 = vunpack.c.l.b16 %v1678
        %v2826 = vunpack.c.h.b16 %v1678
        %v2827 = vunpack.c.l.b16 %v1679
        %v2828 = vunpack.c.h.b16 %v1679
        %v2829 = vunpack.c.l.b16 %v1680
        %v2830 = vunpack.c.h.b16 %v1680
        %v2831 = vunpack.c.l.b16 %v1681
        %v2832 = vunpack.c.h.b16 %v1681
        %v2833 = vunpack.c.l.b16 %v1682
        %v2834 = vunpack.c.h.b16 %v1682
        %v2835 = vunpack.c.l.b16 %v1683
        %v2836 = vunpack.c.h.b16 %v1683
        %v2837 = vunpack.c.l.b16 %v1684
        %v2838 = vunpack.c.h.b16 %v1684
        %v2839 = vunpack.c.l.b16 %v1685
        %v2840 = vunpack.c.h.b16 %v1685
        %v2841 = vunpack.c.l.b16 %v1686
        %v2842 = vunpack.c.h.b16 %v1686
        %v2843 = vunpack.c.l.b16 %v1687
        %v2844 = vunpack.c.h.b16 %v1687
        %v2845 = vunpack.c.l.b16 %v1688
        %v2846 = vunpack.c.h.b16 %v1688
        %v2847 = vunpack.c.l.b16 %v1689
        %v2848 = vunpack.c.h.b16 %v1689
        %v2849 = vunpack.c.l.b16 %v1690
        %v2850 = vunpack.c.h.b16 %v1690
        %v2851 = vunpack.c.l.b16 %v1691
        %v2852 = vunpack.c.h.b16 %v1691
        %v2853 = vunpack.c.l.b16 %v1692
        %v2854 = vunpack.c.h.b16 %v1692
        %v2855 = vunpack.c.l.b16 %v1693
        %v2856 = vunpack.c.h.b16 %v1693
        %v2857 = vunpack.c.l.b16 %v1694
        %v2858 = vunpack.c.h.b16 %v1694
        %v2859 = vunpack.c.l.b16 %v1695
        %v2860 = vunpack.c.h.b16 %v1695
        %v2861 = vunpack.c.l.b16 %v1696
        %v2862 = vunpack.c.h.b16 %v1696
        %v2863 = vunpack.c.l.b16 %v1697
        %v2864 = vunpack.c.h.b16 %v1697
        %v2865 = vunpack.c.l.b16 %v1698
        %v2866 = vunpack.c.h.b16 %v1698
        %v2867 = vunpack.c.l.b16 %v1699
        %v2868 = vunpack.c.h.b16 %v1699
        %v2869 = vunpack.c.l.b16 %v1700
        %v2870 = vunpack.c.h.b16 %v1700
        %v2871 = vunpack.c.l.b16 %v1701
        %v2872 = vunpack.c.h.b16 %v1701
        %v2873 = vunpack.c.l.b16 %v1702
        %v2874 = vunpack.c.h.b16 %v1702
        %v2875 = vunpack.c.l.b16 %v1703
        %v2876 = vunpack.c.h.b16 %v1703
        %v2877 = vunpack.c.l.b16 %v1704
        %v2878 = vunpack.c.h.b16 %v1704
        %v2879 = vunpack.c.l.b16 %v1705
        %v2880 = vunpack.c.h.b16 %v1705
        %v2881 = vunpack.c.l.b16 %v1706
        %v2882 = vunpack.c.h.b16 %v1706
        %v2883 = vunpack.c.l.b16 %v1707
        %v2884 = vunpack.c.h.b16 %v1707
        %v2885 = vunpack.c.l.b16 %v1708
        %v2886 = vunpack.c.h.b16 %v1708
        %v2887 = vunpack.c.l.b16 %v1709
        %v2888 = vunpack.c.h.b16 %v1709
        %v2889 = vunpack.c.l.b16 %v1710
        %v2890 = vunpack.c.h.b16 %v1710
        %v2891 = vunpack.c.l.b16 %v1711
        %v2892 = vunpack.c.h.b16 %v1711
        %v2893 = vunpack.c.l.b16 %v1712
        %v2894 = vunpack.c.h.b16 %v1712
        %v2895 = vunpack.c.l.b16 %v1713
        %v2896 = vunpack.c.h.b16 %v1713
        %v2897 = vunpack.c.l.b16 %v1714
        %v2898 = vunpack.c.h.b16 %v1714
        %v2899 = vunpack.c.l.b16 %v1715
        %v2900 = vunpack.c.h.b16 %v1715
        %v2901 = vunpack.c.l.b16 %v1716
        %v2902 = vunpack.c.h.b16 %v1716
        %v2903 = vunpack.c.l.b16 %v1717
        %v2904 = vunpack.c.h.b16 %v1717
        %v2905 = vunpack.c.l.b16 %v1718
        %v2906 = vunpack.c.h.b16 %v1718
        %v2907 = vunpack.c.l.b16 %v1719
        %v2908 = vunpack.c.h.b16 %v1719
        %v2909 = vunpack.c.l.b16 %v1720
        %v2910 = vunpack.c.h.b16 %v1720
        %v2911 = vunpack.c.l.b16 %v1721
        %v2912 = vunpack.c.h.b16 %v1721
        %v2913 = vunpack.c.l.b16 %v1722
        %v2914 = vunpack.c.h.b16 %v1722
        %v2915 = vunpack.c.l.b16 %v1723
        %v2916 = vunpack.c.h.b16 %v1723
        %v2917 = vunpack.c.l.b16 %v1724
        %v2918 = vunpack.c.h.b16 %v1724
        %v2919 = vunpack.c.l.b16 %v1725
        %v2920 = vunpack.c.h.b16 %v1725
        %v2921 = vunpack.c.l.b16 %v1726
        %v2922 = vunpack.c.h.b16 %v1726
        %v2923 = vunpack.c.l.b16 %v1727
        %v2924 = vunpack.c.h.b16 %v1727
        %v2925 = vunpack.c.l.b16 %v1728
        %v2926 = vunpack.c.h.b16 %v1728
        %v2927 = vunpack.c.l.b16 %v1729
        %v2928 = vunpack.c.h.b16 %v1729
        %v2929 = vunpack.c.l.b16 %v1730
        %v2930 = vunpack.c.h.b16 %v1730
        %v2931 = vunpack.c.l.b16 %v1731
        %v2932 = vunpack.c.h.b16 %v1731
        %v2933 = vunpack.c.l.b16 %v1732
        %v2934 = vunpack.c.h.b16 %v1732
        %v2935 = vunpack.c.l.b16 %v1733
        %v2936 = vunpack.c.h.b16 %v1733
        %v2937 = vunpack.c.l.b16 %v1734
        %v2938 = vunpack.c.h.b16 %v1734
        %v2939 = vunpack.c.l.b16 %v1735
        %v2940 = vunpack.c.h.b16 %v1735
        %v2941 = vunpack.c.l.b16 %v1736
        %v2942 = vunpack.c.h.b16 %v1736
        %v2943 = vunpack.c.l.b16 %v1737
        %v2944 = vunpack.c.h.b16 %v1737
        %v2945 = vunpack.c.l.b16 %v1738
        %v2946 = vunpack.c.h.b16 %v1738
        %v2947 = vunpack.c.l.b16 %v1739
        %v2948 = vunpack.c.h.b16 %v1739
        %v2949 = vunpack.c.l.b16 %v1740
        %v2950 = vunpack.c.h.b16 %v1740
        %v2951 = vunpack.c.l.b16 %v1741
        %v2952 = vunpack.c.h.b16 %v1741
        %v2953 = vunpack.c.l.b16 %v1742
        %v2954 = vunpack.c.h.b16 %v1742
        %v2955 = vunpack.c.l.b16 %v1743
        %v2956 = vunpack.c.h.b16 %v1743
        %v2957 = vunpack.c.l.b16 %v1744
        %v2958 = vunpack.c.h.b16 %v1744
        %v2959 = vunpack.c.l.b16 %v1745
        %v2960 = vunpack.c.h.b16 %v1745
        %v2961 = vunpack.c.l.b16 %v1746
        %v2962 = vunpack.c.h.b16 %v1746
        %v2963 = vunpack.c.l.b16 %v1747
        %v2964 = vunpack.c.h.b16 %v1747
        %v2965 = vunpack.c.l.b16 %v1748
        %v2966 = vunpack.c.h.b16 %v1748
        %v2967 = vunpack.c.l.b16 %v1749
        %v2968 = vunpack.c.h.b16 %v1749
        %v2969 = vunpack.c.l.b16 %v1750
        %v2970 = vunpack.c.h.b16 %v1750
        %v2971 = vunpack.c.l.b16 %v1751
        %v2972 = vunpack.c.h.b16 %v1751
        %v2973 = vunpack.c.l.b16 %v1752
        %v2974 = vunpack.c.h.b16 %v1752
        %v2975 = vunpack.c.l.b16 %v1753
        %v2976 = vunpack.c.h.b16 %v1753
        %v2977 = vunpack.c.l.b16 %v1754
        %v2978 = vunpack.c.h.b16 %v1754
        %v2979 = vunpack.c.l.b16 %v1755
        %v2980 = vunpack.c.h.b16 %v1755
        %v2981 = vunpack.c.l.b16 %v1756
        %v2982 = vunpack.c.h.b16 %v1756
        %v2983 = vunpack.c.l.b16 %v1757
        %v2984 = vunpack.c.h.b16 %v1757
        %v2985 = vunpack.c.l.b16 %v1758
        %v2986 = vunpack.c.h.b16 %v1758
        %v2987 = vunpack.c.l.b16 %v1759
        %v2988 = vunpack.c.h.b16 %v1759
        %v2989 = vunpack.c.l.b16 %v1760
        %v2990 = vunpack.c.h.b16 %v1760
        %v2991 = vunpack.c.l.b16 %v1761
        %v2992 = vunpack.c.h.b16 %v1761
        %v2993 = vunpack.c.l.b16 %v1762
        %v2994 = vunpack.c.h.b16 %v1762
        %v2995 = vunpack.c.l.b16 %v1763
        %v2996 = vunpack.c.h.b16 %v1763
        %v2997 = vunpack.c.l.b16 %v1764
        %v2998 = vunpack.c.h.b16 %v1764
        %v2999 = vunpack.c.l.b16 %v1765
        %v3000 = vunpack.c.h.b16 %v1765
        %v3001 = vunpack.c.l.b16 %v1766
        %v3002 = vunpack.c.h.b16 %v1766
        %v3003 = vunpack.c.l.b16 %v1767
        %v3004 = vunpack.c.h.b16 %v1767
        %v3005 = vunpack.c.l.b16 %v1768
        %v3006 = vunpack.c.h.b16 %v1768
        %v3007 = vunpack.c.l.b16 %v1769
        %v3008 = vunpack.c.h.b16 %v1769
        %v3009 = vunpack.c.l.b16 %v1770
        %v3010 = vunpack.c.h.b16 %v1770
        %v3011 = vunpack.c.l.b16 %v1771
        %v3012 = vunpack.c.h.b16 %v1771
        %v3013 = vunpack.c.l.b16 %v1772
        %v3014 = vunpack.c.h.b16 %v1772
        %v3015 = vunpack.c.l.b16 %v1773
        %v3016 = vunpack.c.h.b16 %v1773
        %v3017 = vunpack.c.l.b16 %v1774
        %v3018 = vunpack.c.h.b16 %v1774
        %v3019 = vunpack.c.l.b16 %v1775
        %v3020 = vunpack.c.h.b16 %v1775
        %v3021 = vunpack.c.l.b16 %v1776
        %v3022 = vunpack.c.h.b16 %v1776
        %v3023 = vunpack.c.l.b16 %v1777
        %v3024 = vunpack.c.h.b16 %v1777
        %v3025 = vunpack.c.l.b16 %v1778
        %v3026 = vunpack.c.h.b16 %v1778
        %v3027 = vunpack.c.l.b16 %v1779
        %v3028 = vunpack.c.h.b16 %v1779
        %v3029 = vunpack.c.l.b16 %v1780
        %v3030 = vunpack.c.h.b16 %v1780
        %v3031 = vunpack.c.l.b16 %v1781
        %v3032 = vunpack.c.h.b16 %v1781
        %v3033 = vunpack.c.l.b16 %v1782
        %v3034 = vunpack.c.h.b16 %v1782
        %v3035 = vunpack.c.l.b16 %v1783
        %v3036 = vunpack.c.h.b16 %v1783
        %v3037 = vpack.c.b16 %v2785, %v2781
        %v3038 = vpack.c.b16 %v2786, %v2782
        %v3039 = vpack.c.b16 %v2787, %v2783
        %v3040 = vpack.c.b16 %v2788, %v2784
        %v3041 = vpack.c.b16 %v2793, %v2789
        %v3042 = vpack.c.b16 %v2794, %v2790
        %v3043 = vpack.c.b16 %v2795, %v2791
        %v3044 = vpack.c.b16 %v2796, %v2792
        %v3045 = vpack.c.b16 %v2801, %v2797
        %v3046 = vpack.c.b16 %v2802, %v2798
        %v3047 = vpack.c.b16 %v2803, %v2799
        %v3048 = vpack.c.b16 %v2804, %v2800
        %v3049 = vpack.c.b16 %v2809, %v2805
        %v3050 = vpack.c.b16 %v2810, %v2806
        %v3051 = vpack.c.b16 %v2811, %v2807
        %v3052 = vpack.c.b16 %v2812, %v2808
        %v3053 = vpack.c.b16 %v2817, %v2813
        %v3054 = vpack.c.b16 %v2818, %v2814
        %v3055 = vpack.c.b16 %v2819, %v2815
        %v3056 = vpack.c.b16 %v2820, %v2816
        %v3057 = vpack.c.b16 %v2825, %v2821
        %v3058 = vpack.c.b16 %v2826, %v2822
        %v3059 = vpack.c.b16 %v2827, %v2823
        %v3060 = vpack.c.b16 %v2828, %v2824
        %v3061 = vpack.c.b16 %v2833, %v2829
        %v3062 = vpack.c.b16 %v2834, %v2830
        %v3063 = vpack.c.b16 %v2835, %v2831
        %v3064 = vpack.c.b16 %v2836, %v2832
        %v3065 = vpack.c.b16 %v2841, %v2837
        %v3066 = vpack.c.b16 %v2842, %v2838
        %v3067 = vpack.c.b16 %v2843, %v2839
        %v3068 = vpack.c.b16 %v2844, %v2840
        %v3069 = vpack.c.b16 %v2849, %v2845
        %v3070 = vpack.c.b16 %v2850, %v2846
        %v3071 = vpack.c.b16 %v2851, %v2847
        %v3072 = vpack.c.b16 %v2852, %v2848
        %v3073 = vpack.c.b16 %v2857, %v2853
        %v3074 = vpack.c.b16 %v2858, %v2854
        %v3075 = vpack.c.b16 %v2859, %v2855
        %v3076 = vpack.c.b16 %v2860, %v2856
        %v3077 = vpack.c.b16 %v2865, %v2861
        %v3078 = vpack.c.b16 %v2866, %v2862
        %v3079 = vpack.c.b16 %v2867, %v2863
        %v3080 = vpack.c.b16 %v2868, %v2864
        %v3081 = vpack.c.b16 %v2873, %v2869
        %v3082 = vpack.c.b16 %v2874, %v2870
        %v3083 = vpack.c.b16 %v2875, %v2871
        %v3084 = vpack.c.b16 %v2876, %v2872
        %v3085 = vpack.c.b16 %v2881, %v2877
        %v3086 = vpack.c.b16 %v2882, %v2878
        %v3087 = vpack.c.b16 %v2883, %v2879
        %v3088 = vpack.c.b16 %v2884, %v2880
        %v3089 = vpack.c.b16 %v2889, %v2885
        %v3090 = vpack.c.b16 %v2890, %v2886
        %v3091 = vpack.c.b16 %v2891, %v2887
        %v3092 = vpack.c.b16 %v2892, %v2888
        %v3093 = vpack.c.b16 %v2897, %v2893
        %v3094 = vpack.c.b16 %v2898, %v2894
        %v3095 = vpack.c.b16 %v2899, %v2895
        %v3096 = vpack.c.b16 %v2900, %v2896
        %v3097 = vpack.c.b16 %v2905, %v2901
        %v3098 = vpack.c.b16 %v2906, %v2902
        %v3099 = vpack.c.b16 %v2907, %v2903
        %v3100 = vpack.c.b16 %v2908, %v2904
        %v3101 = vpack.c.b16 %v2913, %v2909
        %v3102 = vpack.c.b16 %v2914, %v2910
        %v3103 = vpack.c.b16 %v2915, %v2911
        %v3104 = vpack.c.b16 %v2916, %v2912
        %v3105 = vpack.c.b16 %v2921, %v2917
        %v3106 = vpack.c.b16 %v2922, %v2918
        %v3107 = vpack.c.b16 %v2923, %v2919
        %v3108 = vpack.c.b16 %v2924, %v2920
        %v3109 = vpack.c.b16 %v2929, %v2925
        %v3110 = vpack.c.b16 %v2930, %v2926
        %v3111 = vpack.c.b16 %v2931, %v2927
        %v3112 = vpack.c.b16 %v2932, %v2928
        %v3113 = vpack.c.b16 %v2937, %v2933
        %v3114 = vpack.c.b16 %v2938, %v2934
        %v3115 = vpack.c.b16 %v2939, %v2935
        %v3116 = vpack.c.b16 %v2940, %v2936
        %v3117 = vpack.c.b16 %v2945, %v2941
        %v3118 = vpack.c.b16 %v2946, %v2942
        %v3119 = vpack.c.b16 %v2947, %v2943
        %v3120 = vpack.c.b16 %v2948, %v2944
        %v3121 = vpack.c.b16 %v2953, %v2949
        %v3122 = vpack.c.b16 %v2954, %v2950
        %v3123 = vpack.c.b16 %v2955, %v2951
        %v3124 = vpack.c.b16 %v2956, %v2952
        %v3125 = vpack.c.b16 %v2961, %v2957
        %v3126 = vpack.c.b16 %v2962, %v2958
        %v3127 = vpack.c.b16 %v2963, %v2959
        %v3128 = vpack.c.b16 %v2964, %v2960
        %v3129 = vpack.c.b16 %v2969, %v2965
        %v3130 = vpack.c.b16 %v2970, %v2966
        %v3131 = vpack.c.b16 %v2971, %v2967
        %v3132 = vpack.c.b16 %v2972, %v2968
        %v3133 = vpack.c.b16 %v2977, %v2973
        %v3134 = vpack.c.b16 %v2978, %v2974
        %v3135 = vpack.c.b16 %v2979, %v2975
        %v3136 = vpack.c.b16 %v2980, %v2976
        %v3137 = vpack.c.b16 %v2985, %v2981
        %v3138 = vpack.c.b16 %v2986, %v2982
        %v3139 = vpack.c.b16 %v2987, %v2983
        %v3140 = vpack.c.b16 %v2988, %v2984
        %v3141 = vpack.c.b16 %v2993, %v2989
        %v3142 = vpack.c.b16 %v2994, %v2990
        %v3143 = vpack.c.b16 %v2995, %v2991
        %v3144 = vpack.c.b16 %v2996, %v2992
        %v3145 = vpack.c.b16 %v3001, %v2997
        %v3146 = vpack.c.b16 %v3002, %v2998
        %v3147 = vpack.c.b16 %v3003, %v2999
        %v3148 = vpack.c.b16 %v3004, %v3000
        %v3149 = vpack.c.b16 %v3009, %v3005
        %v3150 = vpack.c.b16 %v3010, %v3006
        %v3151 = vpack.c.b16 %v3011, %v3007
        %v3152 = vpack.c.b16 %v3012, %v3008
        %v3153 = vpack.c.b16 %v3017, %v3013
        %v3154 = vpack.c.b16 %v3018, %v3014
        %v3155 = vpack.c.b16 %v3019, %v3015
        %v3156 = vpack.c.b16 %v3020, %v3016
        %v3157 = vpack.c.b16 %v3025, %v3021
        %v3158 = vpack.c.b16 %v3026, %v3022
        %v3159 = vpack.c.b16 %v3027, %v3023
        %v3160 = vpack.c.b16 %v3028, %v3024
        %v3161 = vpack.c.b16 %v3033, %v3029
        %v3162 = vpack.c.b16 %v3034, %v3030
        %v3163 = vpack.c.b16 %v3035, %v3031
        %v3164 = vpack.c.b16 %v3036, %v3032
        %3293 = vmatprep.subr.bf16.mxu0 %v3038
        %3294 = vmatpush1.bf16.msra.mxu0 %v3037
        %3295 = vmatprep.subr.bf16.mxu0 %v3042
        %3296 = vmatpush1.bf16.msra.mxu0 %v3041
        %3297 = vmatprep.subr.bf16.mxu0 %v3046
        %3298 = vmatpush1.bf16.msra.mxu0 %v3045
        %3299 = vmatprep.subr.bf16.mxu0 %v3050
        %3300 = vmatpush1.bf16.msra.mxu0 %v3049
        %3301 = vmatprep.subr.bf16.mxu0 %v3054
        %3302 = vmatpush1.bf16.msra.mxu0 %v3053
        %3303 = vmatprep.subr.bf16.mxu0 %v3058
        %3304 = vmatpush1.bf16.msra.mxu0 %v3057
        %3305 = vmatprep.subr.bf16.mxu0 %v3062
        %3306 = vmatpush1.bf16.msra.mxu0 %v3061
        %3307 = vmatprep.subr.bf16.mxu0 %v3066
        %3308 = vmatpush1.bf16.msra.mxu0 %v3065
        %3309 = vmatprep.subr.bf16.mxu0 %v3070
        %3310 = vmatpush1.bf16.msra.mxu0 %v3069
        %3311 = vmatprep.subr.bf16.mxu0 %v3074
        %3312 = vmatpush1.bf16.msra.mxu0 %v3073
        %3313 = vmatprep.subr.bf16.mxu0 %v3078
        %3314 = vmatpush1.bf16.msra.mxu0 %v3077
        %3315 = vmatprep.subr.bf16.mxu0 %v3082
        %3316 = vmatpush1.bf16.msra.mxu0 %v3081
        %3317 = vmatprep.subr.bf16.mxu0 %v3086
        %3318 = vmatpush1.bf16.msra.mxu0 %v3085
        %3319 = vmatprep.subr.bf16.mxu0 %v3090
        %3320 = vmatpush1.bf16.msra.mxu0 %v3089
        %3321 = vmatprep.subr.bf16.mxu0 %v3094
        %3322 = vmatpush1.bf16.msra.mxu0 %v3093
        %3323 = vmatprep.subr.bf16.mxu0 %v3098
        %3324 = vmatpush1.bf16.msra.mxu0 %v3097
        %3325 = vmatprep.mubr.bf16.mxu0 %v2646
        %3326 = vmatmul.mubr.bf16.gmra.mrb[0].mxu0 %v2645
        %v3327 = vpop.f32.mrb[0].mxu0
        %v3328 = vadd.f32 0.0, %v3327
        %v3329 = vpop.f32.mrb[0].mxu0
        %v3330 = vadd.f32 0.0, %v3329
        %v3331 = vpop.f32.mrb[0].mxu0
        %v3332 = vpop.f32.mrb[0].mxu0
        %3333 = vdwg.mxu0
        %3334 = vmatprep.subr.bf16.mxu0 %v3102
        %3335 = vmatpush1.bf16.msra.mxu0 %v3101
        %3336 = vmatprep.subr.bf16.mxu0 %v3106
        %3337 = vmatpush1.bf16.msra.mxu0 %v3105
        %3338 = vmatprep.subr.bf16.mxu0 %v3110
        %3339 = vmatpush1.bf16.msra.mxu0 %v3109
        %3340 = vmatprep.subr.bf16.mxu0 %v3114
        %3341 = vmatpush1.bf16.msra.mxu0 %v3113
        %3342 = vmatprep.subr.bf16.mxu0 %v3118
        %3343 = vmatpush1.bf16.msra.mxu0 %v3117
        %3344 = vmatprep.subr.bf16.mxu0 %v3122
        %3345 = vmatpush1.bf16.msra.mxu0 %v3121
        %3346 = vmatprep.subr.bf16.mxu0 %v3126
        %3347 = vmatpush1.bf16.msra.mxu0 %v3125
        %3348 = vmatprep.subr.bf16.mxu0 %v3130
        %3349 = vmatpush1.bf16.msra.mxu0 %v3129
        %3350 = vmatprep.subr.bf16.mxu0 %v3134
        %3351 = vmatpush1.bf16.msra.mxu0 %v3133
        %3352 = vmatprep.subr.bf16.mxu0 %v3138
        %3353 = vmatpush1.bf16.msra.mxu0 %v3137
        %3354 = vmatprep.subr.bf16.mxu0 %v3142
        %3355 = vmatpush1.bf16.msra.mxu0 %v3141
        %3356 = vmatprep.subr.bf16.mxu0 %v3146
        %3357 = vmatpush1.bf16.msra.mxu0 %v3145
        %3358 = vmatprep.subr.bf16.mxu0 %v3150
        %3359 = vmatpush1.bf16.msra.mxu0 %v3149
        %3360 = vmatprep.subr.bf16.mxu0 %v3154
        %3361 = vmatpush1.bf16.msra.mxu0 %v3153
        %3362 = vmatprep.subr.bf16.mxu0 %v3158
        %3363 = vmatpush1.bf16.msra.mxu0 %v3157
        %3364 = vmatprep.subr.bf16.mxu0 %v3162
        %3365 = vmatpush1.bf16.msra.mxu0 %v3161
        %3366 = vmatprep.mubr.bf16.mxu0 %v2648
        %3367 = vmatmul.mubr.bf16.gmra.mrb[0].mxu0 %v2647
        %v3368 = vpop.f32.mrb[0].mxu0
        %v3369 = vadd.f32 %v3328, %v3368
        %v3370 = vpop.f32.mrb[0].mxu0
        %v3371 = vadd.f32 %v3330, %v3370
        %v3372 = vpop.f32.mrb[0].mxu0
        %v3373 = vpop.f32.mrb[0].mxu0
        %3374 = vdwg.mxu0
        %3375 = vmatprep.subr.bf16.mxu0 %v3040
        %3376 = vmatpush1.bf16.msra.mxu0 %v3039
        %3377 = vmatprep.subr.bf16.mxu0 %v3044
        %3378 = vmatpush1.bf16.msra.mxu0 %v3043
        %3379 = vmatprep.subr.bf16.mxu0 %v3048
        %3380 = vmatpush1.bf16.msra.mxu0 %v3047
        %3381 = vmatprep.subr.bf16.mxu0 %v3052
        %3382 = vmatpush1.bf16.msra.mxu0 %v3051
        %3383 = vmatprep.subr.bf16.mxu0 %v3056
        %3384 = vmatpush1.bf16.msra.mxu0 %v3055
        %3385 = vmatprep.subr.bf16.mxu0 %v3060
        %3386 = vmatpush1.bf16.msra.mxu0 %v3059
        %3387 = vmatprep.subr.bf16.mxu0 %v3064
        %3388 = vmatpush1.bf16.msra.mxu0 %v3063
        %3389 = vmatprep.subr.bf16.mxu0 %v3068
        %3390 = vmatpush1.bf16.msra.mxu0 %v3067
        %3391 = vmatprep.subr.bf16.mxu0 %v3072
        %3392 = vmatpush1.bf16.msra.mxu0 %v3071
        %3393 = vmatprep.subr.bf16.mxu0 %v3076
        %3394 = vmatpush1.bf16.msra.mxu0 %v3075
        %3395 = vmatprep.subr.bf16.mxu0 %v3080
        %3396 = vmatpush1.bf16.msra.mxu0 %v3079
        %3397 = vmatprep.subr.bf16.mxu0 %v3084
        %3398 = vmatpush1.bf16.msra.mxu0 %v3083
        %3399 = vmatprep.subr.bf16.mxu0 %v3088
        %3400 = vmatpush1.bf16.msra.mxu0 %v3087
        %3401 = vmatprep.subr.bf16.mxu0 %v3092
        %3402 = vmatpush1.bf16.msra.mxu0 %v3091
        %3403 = vmatprep.subr.bf16.mxu0 %v3096
        %3404 = vmatpush1.bf16.msra.mxu0 %v3095
        %3405 = vmatprep.subr.bf16.mxu0 %v3100
        %3406 = vmatpush1.bf16.msra.mxu0 %v3099
        %3407 = vmatprep.mubr.bf16.mxu0 %v2646
        %3408 = vmatmul.mubr.bf16.gmra.mrb[0].mxu0 %v2645
        %v3409 = vpop.f32.mrb[0].mxu0
        %v3410 = vadd.f32 0.0, %v3409
        %v3411 = vpop.f32.mrb[0].mxu0
        %v3412 = vadd.f32 0.0, %v3411
        %v3413 = vpop.f32.mrb[0].mxu0
        %v3414 = vpop.f32.mrb[0].mxu0
        %3415 = vdwg.mxu0
        %3416 = vmatprep.subr.bf16.mxu0 %v3104
        %3417 = vmatpush1.bf16.msra.mxu0 %v3103
        %3418 = vmatprep.subr.bf16.mxu0 %v3108
        %3419 = vmatpush1.bf16.msra.mxu0 %v3107
        %3420 = vmatprep.subr.bf16.mxu0 %v3112
        %3421 = vmatpush1.bf16.msra.mxu0 %v3111
        %3422 = vmatprep.subr.bf16.mxu0 %v3116
        %3423 = vmatpush1.bf16.msra.mxu0 %v3115
        %3424 = vmatprep.subr.bf16.mxu0 %v3120
        %3425 = vmatpush1.bf16.msra.mxu0 %v3119
        %3426 = vmatprep.subr.bf16.mxu0 %v3124
        %3427 = vmatpush1.bf16.msra.mxu0 %v3123
        %3428 = vmatprep.subr.bf16.mxu0 %v3128
        %3429 = vmatpush1.bf16.msra.mxu0 %v3127
        %3430 = vmatprep.subr.bf16.mxu0 %v3132
        %3431 = vmatpush1.bf16.msra.mxu0 %v3131
        %3432 = vmatprep.subr.bf16.mxu0 %v3136
        %3433 = vmatpush1.bf16.msra.mxu0 %v3135
        %3434 = vmatprep.subr.bf16.mxu0 %v3140
        %3435 = vmatpush1.bf16.msra.mxu0 %v3139
        %3436 = vmatprep.subr.bf16.mxu0 %v3144
        %3437 = vmatpush1.bf16.msra.mxu0 %v3143
        %3438 = vmatprep.subr.bf16.mxu0 %v3148
        %3439 = vmatpush1.bf16.msra.mxu0 %v3147
        %3440 = vmatprep.subr.bf16.mxu0 %v3152
        %3441 = vmatpush1.bf16.msra.mxu0 %v3151
        %3442 = vmatprep.subr.bf16.mxu0 %v3156
        %3443 = vmatpush1.bf16.msra.mxu0 %v3155
        %3444 = vmatprep.subr.bf16.mxu0 %v3160
        %3445 = vmatpush1.bf16.msra.mxu0 %v3159
        %3446 = vmatprep.subr.bf16.mxu0 %v3164
        %3447 = vmatpush1.bf16.msra.mxu0 %v3163
        %3448 = vmatprep.mubr.bf16.mxu0 %v2648
        %3449 = vmatmul.mubr.bf16.gmra.mrb[0].mxu0 %v2647
        %v3450 = vpop.f32.mrb[0].mxu0
        %v3451 = vadd.f32 %v3410, %v3450
        %v3452 = vpop.f32.mrb[0].mxu0
        %v3453 = vadd.f32 %v3412, %v3452
        %v3454 = vpop.f32.mrb[0].mxu0
        %v3455 = vpop.f32.mrb[0].mxu0
        %3456 = vdwg.mxu0
        %v3461 = vcombine.low %v3369, %v3371
        %v3462 = vcombine.low %v3451, %v3453
        %v3464 = vunpack.c.l.s4 1983009808
        %v3465 = vunpack.c.0.s8 %v3464
        %v3466 = vlaneseq
        %v3467 = vshrl.u32 %v3466, 7
        %v3468 = vsub.s32 %v3465, %v3467
        %v3469 = vrot.slane %v3461, %v3468
        %v3471 = vunpack.c.l.s4 1983009808
        %v3472 = vunpack.c.0.s8 %v3471
        %v3473 = vlaneseq
        %v3474 = vshrl.u32 %v3473, 7
        %v3475 = vsub.s32 %v3472, %v3474
        %v3476 = vrot.slane %v3462, %v3475
        %v3477 = vcombine.low %v3469, %v3476
        %v3479 = vadd.f32 %v1591, %v3477
        %3480 = vst [vmem:[#allocation2] sm:$0xff] %v3479
        %p3481 = scmp.eq.s32.totalorder %s21, 3
        // Predicated region
        $region94: #{tpu_custom_call.1} parent=76 // pred_check
          %p3482 = pneg %p3481
        $region95: #{tpu_custom_call.1} parent=76 // pred_check_branch
          %3484 = sbr.rel (%p3482) target = $region97
        $region96: #{tpu_custom_call.1} parent=76 // pred_region
          %v3485 = vld [vmem:[#allocation7] ss:$4 sm:$0xf]
          %s3486 = scalar_lea.vmem [#allocation7], 1
          %v3487 = vld [vmem:[%s3486] ss:$4 sm:$0xf]
          %s3488 = scalar_lea.vmem [#allocation7], 2
          %v3489 = vld [vmem:[%s3488] ss:$4 sm:$0xf]
          %v3490 = vld [vmem:[%s0] sm:$0xf]
          %v3491 = vld [vmem:[%s0 + $0x4] sm:$0xf]
          %v3492 = vld [vmem:[%s0 + $0x8] sm:$0xf]
          %v3493 = vld [vmem:[%s0 + $0xc] sm:$0xf]
          %v3494 = vld [vmem:[%s0 + $0x10] sm:$0xf]
          %v3495 = vld [vmem:[%s0 + $0x14] sm:$0xf]
          %v3496 = vld [vmem:[%s0 + $0x18] sm:$0xf]
          %v3497 = vld [vmem:[%s0 + $0x1c] sm:$0xf]
          %v3498 = vld [vmem:[%s0 + $0x20] sm:$0xf]
          %v3499 = vld [vmem:[%s0 + $0x24] sm:$0xf]
          %v3500 = vld [vmem:[%s0 + $0x28] sm:$0xf]
          %v3501 = vld [vmem:[%s0 + $0x2c] sm:$0xf]
          %v3502 = vld [vmem:[%s0 + $0x30] sm:$0xf]
          %v3503 = vld [vmem:[%s0 + $0x34] sm:$0xf]
          %v3504 = vld [vmem:[%s0 + $0x38] sm:$0xf]
          %v3505 = vld [vmem:[%s0 + $0x3c] sm:$0xf]
          %v3506 = vld [vmem:[%s0 + $0x40] sm:$0xf]
          %v3507 = vld [vmem:[%s0 + $0x44] sm:$0xf]
          %v3508 = vld [vmem:[%s0 + $0x48] sm:$0xf]
          %v3509 = vld [vmem:[%s0 + $0x4c] sm:$0xf]
          %v3510 = vld [vmem:[%s0 + $0x50] sm:$0xf]
          %v3511 = vld [vmem:[%s0 + $0x54] sm:$0xf]
          %v3512 = vld [vmem:[%s0 + $0x58] sm:$0xf]
          %v3513 = vld [vmem:[%s0 + $0x5c] sm:$0xf]
          %v3514 = vld [vmem:[%s0 + $0x60] sm:$0xf]
          %v3515 = vld [vmem:[%s0 + $0x64] sm:$0xf]
          %v3516 = vld [vmem:[%s0 + $0x68] sm:$0xf]
          %v3517 = vld [vmem:[%s0 + $0x6c] sm:$0xf]
          %v3518 = vld [vmem:[%s0 + $0x70] sm:$0xf]
          %v3519 = vld [vmem:[%s0 + $0x74] sm:$0xf]
          %v3520 = vld [vmem:[%s0 + $0x78] sm:$0xf]
          %v3521 = vld [vmem:[%s0 + $0x7c] sm:$0xf]
          %v3522 = vld [vmem:[%s0 + $0x80] sm:$0xf]
          %v3523 = vld [vmem:[%s0 + $0x84] sm:$0xf]
          %v3524 = vld [vmem:[%s0 + $0x88] sm:$0xf]
          %v3525 = vld [vmem:[%s0 + $0x8c] sm:$0xf]
          %v3526 = vld [vmem:[%s0 + $0x90] sm:$0xf]
          %v3527 = vld [vmem:[%s0 + $0x94] sm:$0xf]
          %v3528 = vld [vmem:[%s0 + $0x98] sm:$0xf]
          %v3529 = vld [vmem:[%s0 + $0x9c] sm:$0xf]
          %v3530 = vld [vmem:[%s0 + $0xa0] sm:$0xf]
          %v3531 = vld [vmem:[%s0 + $0xa4] sm:$0xf]
          %v3532 = vld [vmem:[%s0 + $0xa8] sm:$0xf]
          %v3533 = vld [vmem:[%s0 + $0xac] sm:$0xf]
          %v3534 = vld [vmem:[%s0 + $0xb0] sm:$0xf]
          %v3535 = vld [vmem:[%s0 + $0xb4] sm:$0xf]
          %v3536 = vld [vmem:[%s0 + $0xb8] sm:$0xf]
          %v3537 = vld [vmem:[%s0 + $0xbc] sm:$0xf]
          %v3538 = vld [vmem:[%s0 + $0xc0] sm:$0xf]
          %v3539 = vld [vmem:[%s0 + $0xc4] sm:$0xf]
          %v3540 = vld [vmem:[%s0 + $0xc8] sm:$0xf]
          %v3541 = vld [vmem:[%s0 + $0xcc] sm:$0xf]
          %v3542 = vld [vmem:[%s0 + $0xd0] sm:$0xf]
          %v3543 = vld [vmem:[%s0 + $0xd4] sm:$0xf]
          %v3544 = vld [vmem:[%s0 + $0xd8] sm:$0xf]
          %v3545 = vld [vmem:[%s0 + $0xdc] sm:$0xf]
          %v3546 = vld [vmem:[%s0 + $0xe0] sm:$0xf]
          %v3547 = vld [vmem:[%s0 + $0xe4] sm:$0xf]
          %v3548 = vld [vmem:[%s0 + $0xe8] sm:$0xf]
          %v3549 = vld [vmem:[%s0 + $0xec] sm:$0xf]
          %v3550 = vld [vmem:[%s0 + $0xf0] sm:$0xf]
          %v3551 = vld [vmem:[%s0 + $0xf4] sm:$0xf]
          %v3552 = vld [vmem:[%s0 + $0xf8] sm:$0xf]
          %v3553 = vld [vmem:[%s0 + $0xfc] sm:$0xf]
          %v3554 = vunpack.c.l.bf16 %v3490
          %v3555 = vunpack.c.l.bf16 %v3491
          %v3556 = vunpack.c.l.bf16 %v3492
          %v3557 = vunpack.c.l.bf16 %v3493
          %v3558 = vunpack.c.l.bf16 %v3494
          %v3559 = vunpack.c.l.bf16 %v3495
          %v3560 = vunpack.c.l.bf16 %v3496
          %v3561 = vunpack.c.l.bf16 %v3497
          %v3562 = vunpack.c.l.bf16 %v3498
          %v3563 = vunpack.c.l.bf16 %v3499
          %v3564 = vunpack.c.l.bf16 %v3500
          %v3565 = vunpack.c.l.bf16 %v3501
          %v3566 = vunpack.c.l.bf16 %v3502
          %v3567 = vunpack.c.l.bf16 %v3503
          %v3568 = vunpack.c.l.bf16 %v3504
          %v3569 = vunpack.c.l.bf16 %v3505
          %v3570 = vunpack.c.l.bf16 %v3506
          %v3571 = vunpack.c.l.bf16 %v3507
          %v3572 = vunpack.c.l.bf16 %v3508
          %v3573 = vunpack.c.l.bf16 %v3509
          %v3574 = vunpack.c.l.bf16 %v3510
          %v3575 = vunpack.c.l.bf16 %v3511
          %v3576 = vunpack.c.l.bf16 %v3512
          %v3577 = vunpack.c.l.bf16 %v3513
          %v3578 = vunpack.c.l.bf16 %v3514
          %v3579 = vunpack.c.l.bf16 %v3515
          %v3580 = vunpack.c.l.bf16 %v3516
          %v3581 = vunpack.c.l.bf16 %v3517
          %v3582 = vunpack.c.l.bf16 %v3518
          %v3583 = vunpack.c.l.bf16 %v3519
          %v3584 = vunpack.c.l.bf16 %v3520
          %v3585 = vunpack.c.l.bf16 %v3521
          %v3586 = vunpack.c.l.bf16 %v3522
          %v3587 = vunpack.c.l.bf16 %v3523
          %v3588 = vunpack.c.l.bf16 %v3524
          %v3589 = vunpack.c.l.bf16 %v3525
          %v3590 = vunpack.c.l.bf16 %v3526
          %v3591 = vunpack.c.l.bf16 %v3527
          %v3592 = vunpack.c.l.bf16 %v3528
          %v3593 = vunpack.c.l.bf16 %v3529
          %v3594 = vunpack.c.l.bf16 %v3530
          %v3595 = vunpack.c.l.bf16 %v3531
          %v3596 = vunpack.c.l.bf16 %v3532
          %v3597 = vunpack.c.l.bf16 %v3533
          %v3598 = vunpack.c.l.bf16 %v3534
          %v3599 = vunpack.c.l.bf16 %v3535
          %v3600 = vunpack.c.l.bf16 %v3536
          %v3601 = vunpack.c.l.bf16 %v3537
          %v3602 = vunpack.c.l.bf16 %v3538
          %v3603 = vunpack.c.l.bf16 %v3539
          %v3604 = vunpack.c.l.bf16 %v3540
          %v3605 = vunpack.c.l.bf16 %v3541
          %v3606 = vunpack.c.l.bf16 %v3542
          %v3607 = vunpack.c.l.bf16 %v3543
          %v3608 = vunpack.c.l.bf16 %v3544
          %v3609 = vunpack.c.l.bf16 %v3545
          %v3610 = vunpack.c.l.bf16 %v3546
          %v3611 = vunpack.c.l.bf16 %v3547
          %v3612 = vunpack.c.l.bf16 %v3548
          %v3613 = vunpack.c.l.bf16 %v3549
          %v3614 = vunpack.c.l.bf16 %v3550
          %v3615 = vunpack.c.l.bf16 %v3551
          %v3616 = vunpack.c.l.bf16 %v3552
          %v3617 = vunpack.c.l.bf16 %v3553
          %v3618 = vsel %vm1078, %v3554, 0.0
          %3619 = vadd.xlane.f32.xlu0 %v3618
          %v3620 = vpop.xlane.xlu0 %3619
          %v3621 = vsel %vm1078, %v3555, 0.0
          %3622 = vadd.xlane.f32.xlu0 %v3621
          %v3623 = vpop.xlane.xlu0 %3622
          %v3624 = vsel %vm1078, %v3556, 0.0
          %3625 = vadd.xlane.f32.xlu0 %v3624
          %v3626 = vpop.xlane.xlu0 %3625
          %v3627 = vsel %vm1078, %v3557, 0.0
          %3628 = vadd.xlane.f32.xlu0 %v3627
          %v3629 = vpop.xlane.xlu0 %3628
          %v3630 = vsel %vm1078, %v3558, 0.0
          %3631 = vadd.xlane.f32.xlu0 %v3630
          %v3632 = vpop.xlane.xlu0 %3631
          %v3633 = vsel %vm1078, %v3559, 0.0
          %3634 = vadd.xlane.f32.xlu0 %v3633
          %v3635 = vpop.xlane.xlu0 %3634
          %v3636 = vsel %vm1078, %v3560, 0.0
          %3637 = vadd.xlane.f32.xlu0 %v3636
          %v3638 = vpop.xlane.xlu0 %3637
          %v3639 = vsel %vm1078, %v3561, 0.0
          %3640 = vadd.xlane.f32.xlu0 %v3639
          %v3641 = vpop.xlane.xlu0 %3640
          %v3642 = vsel %vm1078, %v3562, 0.0
          %3643 = vadd.xlane.f32.xlu0 %v3642
          %v3644 = vpop.xlane.xlu0 %3643
          %v3645 = vsel %vm1078, %v3563, 0.0
          %3646 = vadd.xlane.f32.xlu0 %v3645
          %v3647 = vpop.xlane.xlu0 %3646
          %v3648 = vsel %vm1078, %v3564, 0.0
          %3649 = vadd.xlane.f32.xlu0 %v3648
          %v3650 = vpop.xlane.xlu0 %3649
          %v3651 = vsel %vm1078, %v3565, 0.0
          %3652 = vadd.xlane.f32.xlu0 %v3651
          %v3653 = vpop.xlane.xlu0 %3652
          %v3654 = vsel %vm1078, %v3566, 0.0
          %3655 = vadd.xlane.f32.xlu0 %v3654
          %v3656 = vpop.xlane.xlu0 %3655
          %v3657 = vsel %vm1078, %v3567, 0.0
          %3658 = vadd.xlane.f32.xlu0 %v3657
          %v3659 = vpop.xlane.xlu0 %3658
          %v3660 = vsel %vm1078, %v3568, 0.0
          %3661 = vadd.xlane.f32.xlu0 %v3660
          %v3662 = vpop.xlane.xlu0 %3661
          %v3663 = vsel %vm1078, %v3569, 0.0
          %3664 = vadd.xlane.f32.xlu0 %v3663
          %v3665 = vpop.xlane.xlu0 %3664
          %v3666 = vsel %vm1078, %v3570, 0.0
          %3667 = vadd.xlane.f32.xlu0 %v3666
          %v3668 = vpop.xlane.xlu0 %3667
          %v3669 = vsel %vm1078, %v3571, 0.0
          %3670 = vadd.xlane.f32.xlu0 %v3669
          %v3671 = vpop.xlane.xlu0 %3670
          %v3672 = vsel %vm1078, %v3572, 0.0
          %3673 = vadd.xlane.f32.xlu0 %v3672
          %v3674 = vpop.xlane.xlu0 %3673
          %v3675 = vsel %vm1078, %v3573, 0.0
          %3676 = vadd.xlane.f32.xlu0 %v3675
          %v3677 = vpop.xlane.xlu0 %3676
          %v3678 = vsel %vm1078, %v3574, 0.0
          %3679 = vadd.xlane.f32.xlu0 %v3678
          %v3680 = vpop.xlane.xlu0 %3679
          %v3681 = vsel %vm1078, %v3575, 0.0
          %3682 = vadd.xlane.f32.xlu0 %v3681
          %v3683 = vpop.xlane.xlu0 %3682
          %v3684 = vsel %vm1078, %v3576, 0.0
          %3685 = vadd.xlane.f32.xlu0 %v3684
          %v3686 = vpop.xlane.xlu0 %3685
          %v3687 = vsel %vm1078, %v3577, 0.0
          %3688 = vadd.xlane.f32.xlu0 %v3687
          %v3689 = vpop.xlane.xlu0 %3688
          %v3690 = vsel %vm1078, %v3578, 0.0
          %3691 = vadd.xlane.f32.xlu0 %v3690
          %v3692 = vpop.xlane.xlu0 %3691
          %v3693 = vsel %vm1078, %v3579, 0.0
          %3694 = vadd.xlane.f32.xlu0 %v3693
          %v3695 = vpop.xlane.xlu0 %3694
          %v3696 = vsel %vm1078, %v3580, 0.0
          %3697 = vadd.xlane.f32.xlu0 %v3696
          %v3698 = vpop.xlane.xlu0 %3697
          %v3699 = vsel %vm1078, %v3581, 0.0
          %3700 = vadd.xlane.f32.xlu0 %v3699
          %v3701 = vpop.xlane.xlu0 %3700
          %v3702 = vsel %vm1078, %v3582, 0.0
          %3703 = vadd.xlane.f32.xlu0 %v3702
          %v3704 = vpop.xlane.xlu0 %3703
          %v3705 = vsel %vm1078, %v3583, 0.0
          %3706 = vadd.xlane.f32.xlu0 %v3705
          %v3707 = vpop.xlane.xlu0 %3706
          %v3708 = vsel %vm1078, %v3584, 0.0
          %3709 = vadd.xlane.f32.xlu0 %v3708
          %v3710 = vpop.xlane.xlu0 %3709
          %v3711 = vsel %vm1078, %v3585, 0.0
          %3712 = vadd.xlane.f32.xlu0 %v3711
          %v3713 = vpop.xlane.xlu0 %3712
          %v3714 = vsel %vm1078, %v3586, 0.0
          %3715 = vadd.xlane.f32.xlu0 %v3714
          %v3716 = vpop.xlane.xlu0 %3715
          %v3717 = vsel %vm1078, %v3587, 0.0
          %3718 = vadd.xlane.f32.xlu0 %v3717
          %v3719 = vpop.xlane.xlu0 %3718
          %v3720 = vsel %vm1078, %v3588, 0.0
          %3721 = vadd.xlane.f32.xlu0 %v3720
          %v3722 = vpop.xlane.xlu0 %3721
          %v3723 = vsel %vm1078, %v3589, 0.0
          %3724 = vadd.xlane.f32.xlu0 %v3723
          %v3725 = vpop.xlane.xlu0 %3724
          %v3726 = vsel %vm1078, %v3590, 0.0
          %3727 = vadd.xlane.f32.xlu0 %v3726
          %v3728 = vpop.xlane.xlu0 %3727
          %v3729 = vsel %vm1078, %v3591, 0.0
          %3730 = vadd.xlane.f32.xlu0 %v3729
          %v3731 = vpop.xlane.xlu0 %3730
          %v3732 = vsel %vm1078, %v3592, 0.0
          %3733 = vadd.xlane.f32.xlu0 %v3732
          %v3734 = vpop.xlane.xlu0 %3733
          %v3735 = vsel %vm1078, %v3593, 0.0
          %3736 = vadd.xlane.f32.xlu0 %v3735
          %v3737 = vpop.xlane.xlu0 %3736
          %v3738 = vsel %vm1078, %v3594, 0.0
          %3739 = vadd.xlane.f32.xlu0 %v3738
          %v3740 = vpop.xlane.xlu0 %3739
          %v3741 = vsel %vm1078, %v3595, 0.0
          %3742 = vadd.xlane.f32.xlu0 %v3741
          %v3743 = vpop.xlane.xlu0 %3742
          %v3744 = vsel %vm1078, %v3596, 0.0
          %3745 = vadd.xlane.f32.xlu0 %v3744
          %v3746 = vpop.xlane.xlu0 %3745
          %v3747 = vsel %vm1078, %v3597, 0.0
          %3748 = vadd.xlane.f32.xlu0 %v3747
          %v3749 = vpop.xlane.xlu0 %3748
          %v3750 = vsel %vm1078, %v3598, 0.0
          %3751 = vadd.xlane.f32.xlu0 %v3750
          %v3752 = vpop.xlane.xlu0 %3751
          %v3753 = vsel %vm1078, %v3599, 0.0
          %3754 = vadd.xlane.f32.xlu0 %v3753
          %v3755 = vpop.xlane.xlu0 %3754
          %v3756 = vsel %vm1078, %v3600, 0.0
          %3757 = vadd.xlane.f32.xlu0 %v3756
          %v3758 = vpop.xlane.xlu0 %3757
          %v3759 = vsel %vm1078, %v3601, 0.0
          %3760 = vadd.xlane.f32.xlu0 %v3759
          %v3761 = vpop.xlane.xlu0 %3760
          %v3762 = vsel %vm1078, %v3602, 0.0
          %3763 = vadd.xlane.f32.xlu0 %v3762
          %v3764 = vpop.xlane.xlu0 %3763
          %v3765 = vsel %vm1078, %v3603, 0.0
          %3766 = vadd.xlane.f32.xlu0 %v3765
          %v3767 = vpop.xlane.xlu0 %3766
          %v3768 = vsel %vm1078, %v3604, 0.0
          %3769 = vadd.xlane.f32.xlu0 %v3768
          %v3770 = vpop.xlane.xlu0 %3769
          %v3771 = vsel %vm1078, %v3605, 0.0
          %3772 = vadd.xlane.f32.xlu0 %v3771
          %v3773 = vpop.xlane.xlu0 %3772
          %v3774 = vsel %vm1078, %v3606, 0.0
          %3775 = vadd.xlane.f32.xlu0 %v3774
          %v3776 = vpop.xlane.xlu0 %3775
          %v3777 = vsel %vm1078, %v3607, 0.0
          %3778 = vadd.xlane.f32.xlu0 %v3777
          %v3779 = vpop.xlane.xlu0 %3778
          %v3780 = vsel %vm1078, %v3608, 0.0
          %3781 = vadd.xlane.f32.xlu0 %v3780
          %v3782 = vpop.xlane.xlu0 %3781
          %v3783 = vsel %vm1078, %v3609, 0.0
          %3784 = vadd.xlane.f32.xlu0 %v3783
          %v3785 = vpop.xlane.xlu0 %3784
          %v3786 = vsel %vm1078, %v3610, 0.0
          %3787 = vadd.xlane.f32.xlu0 %v3786
          %v3788 = vpop.xlane.xlu0 %3787
          %v3789 = vsel %vm1078, %v3611, 0.0
          %3790 = vadd.xlane.f32.xlu0 %v3789
          %v3791 = vpop.xlane.xlu0 %3790
          %v3792 = vsel %vm1078, %v3612, 0.0
          %3793 = vadd.xlane.f32.xlu0 %v3792
          %v3794 = vpop.xlane.xlu0 %3793
          %v3795 = vsel %vm1078, %v3613, 0.0
          %3796 = vadd.xlane.f32.xlu0 %v3795
          %v3797 = vpop.xlane.xlu0 %3796
          %v3798 = vsel %vm1078, %v3614, 0.0
          %3799 = vadd.xlane.f32.xlu0 %v3798
          %v3800 = vpop.xlane.xlu0 %3799
          %v3801 = vsel %vm1078, %v3615, 0.0
          %3802 = vadd.xlane.f32.xlu0 %v3801
          %v3803 = vpop.xlane.xlu0 %3802
          %v3804 = vsel %vm1078, %v3616, 0.0
          %3805 = vadd.xlane.f32.xlu0 %v3804
          %v3806 = vpop.xlane.xlu0 %3805
          %v3807 = vsel %vm1078, %v3617, 0.0
          %3808 = vadd.xlane.f32.xlu0 %v3807
          %v3809 = vpop.xlane.xlu0 %3808
          %v3810 = vmul.f32 %v3620, 0.015625
          %v3811 = vmul.f32 %v3623, 0.015625
          %v3812 = vmul.f32 %v3626, 0.015625
          %v3813 = vmul.f32 %v3629, 0.015625
          %v3814 = vmul.f32 %v3632, 0.015625
          %v3815 = vmul.f32 %v3635, 0.015625
          %v3816 = vmul.f32 %v3638, 0.015625
          %v3817 = vmul.f32 %v3641, 0.015625
          %v3818 = vmul.f32 %v3644, 0.015625
          %v3819 = vmul.f32 %v3647, 0.015625
          %v3820 = vmul.f32 %v3650, 0.015625
          %v3821 = vmul.f32 %v3653, 0.015625
          %v3822 = vmul.f32 %v3656, 0.015625
          %v3823 = vmul.f32 %v3659, 0.015625
          %v3824 = vmul.f32 %v3662, 0.015625
          %v3825 = vmul.f32 %v3665, 0.015625
          %v3826 = vmul.f32 %v3668, 0.015625
          %v3827 = vmul.f32 %v3671, 0.015625
          %v3828 = vmul.f32 %v3674, 0.015625
          %v3829 = vmul.f32 %v3677, 0.015625
          %v3830 = vmul.f32 %v3680, 0.015625
          %v3831 = vmul.f32 %v3683, 0.015625
          %v3832 = vmul.f32 %v3686, 0.015625
          %v3833 = vmul.f32 %v3689, 0.015625
          %v3834 = vmul.f32 %v3692, 0.015625
          %v3835 = vmul.f32 %v3695, 0.015625
          %v3836 = vmul.f32 %v3698, 0.015625
          %v3837 = vmul.f32 %v3701, 0.015625
          %v3838 = vmul.f32 %v3704, 0.015625
          %v3839 = vmul.f32 %v3707, 0.015625
          %v3840 = vmul.f32 %v3710, 0.015625
          %v3841 = vmul.f32 %v3713, 0.015625
          %v3842 = vmul.f32 %v3716, 0.015625
          %v3843 = vmul.f32 %v3719, 0.015625
          %v3844 = vmul.f32 %v3722, 0.015625
          %v3845 = vmul.f32 %v3725, 0.015625
          %v3846 = vmul.f32 %v3728, 0.015625
          %v3847 = vmul.f32 %v3731, 0.015625
          %v3848 = vmul.f32 %v3734, 0.015625
          %v3849 = vmul.f32 %v3737, 0.015625
          %v3850 = vmul.f32 %v3740, 0.015625
          %v3851 = vmul.f32 %v3743, 0.015625
          %v3852 = vmul.f32 %v3746, 0.015625
          %v3853 = vmul.f32 %v3749, 0.015625
          %v3854 = vmul.f32 %v3752, 0.015625
          %v3855 = vmul.f32 %v3755, 0.015625
          %v3856 = vmul.f32 %v3758, 0.015625
          %v3857 = vmul.f32 %v3761, 0.015625
          %v3858 = vmul.f32 %v3764, 0.015625
          %v3859 = vmul.f32 %v3767, 0.015625
          %v3860 = vmul.f32 %v3770, 0.015625
          %v3861 = vmul.f32 %v3773, 0.015625
          %v3862 = vmul.f32 %v3776, 0.015625
          %v3863 = vmul.f32 %v3779, 0.015625
          %v3864 = vmul.f32 %v3782, 0.015625
          %v3865 = vmul.f32 %v3785, 0.015625
          %v3866 = vmul.f32 %v3788, 0.015625
          %v3867 = vmul.f32 %v3791, 0.015625
          %v3868 = vmul.f32 %v3794, 0.015625
          %v3869 = vmul.f32 %v3797, 0.015625
          %v3870 = vmul.f32 %v3800, 0.015625
          %v3871 = vmul.f32 %v3803, 0.015625
          %v3872 = vmul.f32 %v3806, 0.015625
          %v3873 = vmul.f32 %v3809, 0.015625
          %v3874 = vld [vmem:[%s3] sm:$0xff]
          %v3875 = vld [vmem:[%s3 + $0x8] sm:$0xff]
          %v3876 = vld [vmem:[%s3 + $0x10] sm:$0xff]
          %v3877 = vld [vmem:[%s3 + $0x18] sm:$0xff]
          %v3878 = vld [vmem:[%s3 + $0x20] sm:$0xff]
          %v3879 = vld [vmem:[%s3 + $0x28] sm:$0xff]
          %v3880 = vld [vmem:[%s3 + $0x30] sm:$0xff]
          %v3881 = vld [vmem:[%s3 + $0x38] sm:$0xff]
          %v3882 = vld [vmem:[%s3 + $0x40] sm:$0xff]
          %v3883 = vld [vmem:[%s3 + $0x48] sm:$0xff]
          %v3884 = vld [vmem:[%s3 + $0x50] sm:$0xff]
          %v3885 = vld [vmem:[%s3 + $0x58] sm:$0xff]
          %v3886 = vld [vmem:[%s3 + $0x60] sm:$0xff]
          %v3887 = vld [vmem:[%s3 + $0x68] sm:$0xff]
          %v3888 = vld [vmem:[%s3 + $0x70] sm:$0xff]
          %v3889 = vld [vmem:[%s3 + $0x78] sm:$0xff]
          %v3890 = vld [vmem:[%s3 + $0x80] sm:$0xff]
          %v3891 = vld [vmem:[%s3 + $0x88] sm:$0xff]
          %v3892 = vld [vmem:[%s3 + $0x90] sm:$0xff]
          %v3893 = vld [vmem:[%s3 + $0x98] sm:$0xff]
          %v3894 = vld [vmem:[%s3 + $0xa0] sm:$0xff]
          %v3895 = vld [vmem:[%s3 + $0xa8] sm:$0xff]
          %v3896 = vld [vmem:[%s3 + $0xb0] sm:$0xff]
          %v3897 = vld [vmem:[%s3 + $0xb8] sm:$0xff]
          %v3898 = vld [vmem:[%s3 + $0xc0] sm:$0xff]
          %v3899 = vld [vmem:[%s3 + $0xc8] sm:$0xff]
          %v3900 = vld [vmem:[%s3 + $0xd0] sm:$0xff]
          %v3901 = vld [vmem:[%s3 + $0xd8] sm:$0xff]
          %v3902 = vld [vmem:[%s3 + $0xe0] sm:$0xff]
          %v3903 = vld [vmem:[%s3 + $0xe8] sm:$0xff]
          %v3904 = vld [vmem:[%s3 + $0xf0] sm:$0xff]
          %v3905 = vld [vmem:[%s3 + $0xf8] sm:$0xff]
          %v3906 = vld [vmem:[%s3 + $0x100] sm:$0xff]
          %v3907 = vld [vmem:[%s3 + $0x108] sm:$0xff]
          %v3908 = vld [vmem:[%s3 + $0x110] sm:$0xff]
          %v3909 = vld [vmem:[%s3 + $0x118] sm:$0xff]
          %v3910 = vld [vmem:[%s3 + $0x120] sm:$0xff]
          %v3911 = vld [vmem:[%s3 + $0x128] sm:$0xff]
          %v3912 = vld [vmem:[%s3 + $0x130] sm:$0xff]
          %v3913 = vld [vmem:[%s3 + $0x138] sm:$0xff]
          %v3914 = vld [vmem:[%s3 + $0x140] sm:$0xff]
          %v3915 = vld [vmem:[%s3 + $0x148] sm:$0xff]
          %v3916 = vld [vmem:[%s3 + $0x150] sm:$0xff]
          %v3917 = vld [vmem:[%s3 + $0x158] sm:$0xff]
          %v3918 = vld [vmem:[%s3 + $0x160] sm:$0xff]
          %v3919 = vld [vmem:[%s3 + $0x168] sm:$0xff]
          %v3920 = vld [vmem:[%s3 + $0x170] sm:$0xff]
          %v3921 = vld [vmem:[%s3 + $0x178] sm:$0xff]
          %v3922 = vld [vmem:[%s3 + $0x180] sm:$0xff]
          %v3923 = vld [vmem:[%s3 + $0x188] sm:$0xff]
          %v3924 = vld [vmem:[%s3 + $0x190] sm:$0xff]
          %v3925 = vld [vmem:[%s3 + $0x198] sm:$0xff]
          %v3926 = vld [vmem:[%s3 + $0x1a0] sm:$0xff]
          %v3927 = vld [vmem:[%s3 + $0x1a8] sm:$0xff]
          %v3928 = vld [vmem:[%s3 + $0x1b0] sm:$0xff]
          %v3929 = vld [vmem:[%s3 + $0x1b8] sm:$0xff]
          %v3930 = vld [vmem:[%s3 + $0x1c0] sm:$0xff]
          %v3931 = vld [vmem:[%s3 + $0x1c8] sm:$0xff]
          %v3932 = vld [vmem:[%s3 + $0x1d0] sm:$0xff]
          %v3933 = vld [vmem:[%s3 + $0x1d8] sm:$0xff]
          %v3934 = vld [vmem:[%s3 + $0x1e0] sm:$0xff]
          %v3935 = vld [vmem:[%s3 + $0x1e8] sm:$0xff]
          %v3936 = vld [vmem:[%s3 + $0x1f0] sm:$0xff]
          %v3937 = vld [vmem:[%s3 + $0x1f8] sm:$0xff]
          %v3938 = vpack.c.bf16 %v3811, %v3810
          %v3939 = vpack.c.bf16 %v3813, %v3812
          %v3940 = vpack.c.bf16 %v3815, %v3814
          %v3941 = vpack.c.bf16 %v3817, %v3816
          %v3942 = vpack.c.bf16 %v3819, %v3818
          %v3943 = vpack.c.bf16 %v3821, %v3820
          %v3944 = vpack.c.bf16 %v3823, %v3822
          %v3945 = vpack.c.bf16 %v3825, %v3824
          %v3946 = vpack.c.bf16 %v3827, %v3826
          %v3947 = vpack.c.bf16 %v3829, %v3828
          %v3948 = vpack.c.bf16 %v3831, %v3830
          %v3949 = vpack.c.bf16 %v3833, %v3832
          %v3950 = vpack.c.bf16 %v3835, %v3834
          %v3951 = vpack.c.bf16 %v3837, %v3836
          %v3952 = vpack.c.bf16 %v3839, %v3838
          %v3953 = vpack.c.bf16 %v3841, %v3840
          %v3954 = vpack.c.bf16 %v3843, %v3842
          %v3955 = vpack.c.bf16 %v3845, %v3844
          %v3956 = vpack.c.bf16 %v3847, %v3846
          %v3957 = vpack.c.bf16 %v3849, %v3848
          %v3958 = vpack.c.bf16 %v3851, %v3850
          %v3959 = vpack.c.bf16 %v3853, %v3852
          %v3960 = vpack.c.bf16 %v3855, %v3854
          %v3961 = vpack.c.bf16 %v3857, %v3856
          %v3962 = vpack.c.bf16 %v3859, %v3858
          %v3963 = vpack.c.bf16 %v3861, %v3860
          %v3964 = vpack.c.bf16 %v3863, %v3862
          %v3965 = vpack.c.bf16 %v3865, %v3864
          %v3966 = vpack.c.bf16 %v3867, %v3866
          %v3967 = vpack.c.bf16 %v3869, %v3868
          %v3968 = vpack.c.bf16 %v3871, %v3870
          %v3969 = vpack.c.bf16 %v3873, %v3872
          %v3971 = vlaneseq
          %v3972 = vshrl.u32 %v3971, 7
          %v3973 = vsub.s32 0, %v3972
          %v3974 = vrot.slane %v3485, %v3973
          %v3975 = vlaneseq
          %v3976 = vshrl.u32 %v3975, 7
          %v3977 = vsub.s32 1, %v3976
          %v3978 = vrot.slane %v3485, %v3977
          %v3979 = vlaneseq
          %v3980 = vshrl.u32 %v3979, 7
          %v3981 = vsub.s32 2, %v3980
          %v3982 = vrot.slane %v3485, %v3981
          %v3983 = vlaneseq
          %v3984 = vshrl.u32 %v3983, 7
          %v3985 = vsub.s32 3, %v3984
          %v3986 = vrot.slane %v3485, %v3985
          %v4023 = vunpack.c.l.b16 %v3938
          %v4024 = vunpack.c.h.b16 %v3938
          %v4025 = vunpack.c.l.b16 %v3939
          %v4026 = vunpack.c.h.b16 %v3939
          %v4027 = vunpack.c.l.b16 %v3940
          %v4028 = vunpack.c.h.b16 %v3940
          %v4029 = vunpack.c.l.b16 %v3941
          %v4030 = vunpack.c.h.b16 %v3941
          %v4031 = vunpack.c.l.b16 %v3942
          %v4032 = vunpack.c.h.b16 %v3942
          %v4033 = vunpack.c.l.b16 %v3943
          %v4034 = vunpack.c.h.b16 %v3943
          %v4035 = vunpack.c.l.b16 %v3944
          %v4036 = vunpack.c.h.b16 %v3944
          %v4037 = vunpack.c.l.b16 %v3945
          %v4038 = vunpack.c.h.b16 %v3945
          %v4039 = vunpack.c.l.b16 %v3946
          %v4040 = vunpack.c.h.b16 %v3946
          %v4041 = vunpack.c.l.b16 %v3947
          %v4042 = vunpack.c.h.b16 %v3947
          %v4043 = vunpack.c.l.b16 %v3948
          %v4044 = vunpack.c.h.b16 %v3948
          %v4045 = vunpack.c.l.b16 %v3949
          %v4046 = vunpack.c.h.b16 %v3949
          %v4047 = vunpack.c.l.b16 %v3950
          %v4048 = vunpack.c.h.b16 %v3950
          %v4049 = vunpack.c.l.b16 %v3951
          %v4050 = vunpack.c.h.b16 %v3951
          %v4051 = vunpack.c.l.b16 %v3952
          %v4052 = vunpack.c.h.b16 %v3952
          %v4053 = vunpack.c.l.b16 %v3953
          %v4054 = vunpack.c.h.b16 %v3953
          %v4055 = vunpack.c.l.b16 %v3954
          %v4056 = vunpack.c.h.b16 %v3954
          %v4057 = vunpack.c.l.b16 %v3955
          %v4058 = vunpack.c.h.b16 %v3955
          %v4059 = vunpack.c.l.b16 %v3956
          %v4060 = vunpack.c.h.b16 %v3956
          %v4061 = vunpack.c.l.b16 %v3957
          %v4062 = vunpack.c.h.b16 %v3957
          %v4063 = vunpack.c.l.b16 %v3958
          %v4064 = vunpack.c.h.b16 %v3958
          %v4065 = vunpack.c.l.b16 %v3959
          %v4066 = vunpack.c.h.b16 %v3959
          %v4067 = vunpack.c.l.b16 %v3960
          %v4068 = vunpack.c.h.b16 %v3960
          %v4069 = vunpack.c.l.b16 %v3961
          %v4070 = vunpack.c.h.b16 %v3961
          %v4071 = vunpack.c.l.b16 %v3962
          %v4072 = vunpack.c.h.b16 %v3962
          %v4073 = vunpack.c.l.b16 %v3963
          %v4074 = vunpack.c.h.b16 %v3963
          %v4075 = vunpack.c.l.b16 %v3964
          %v4076 = vunpack.c.h.b16 %v3964
          %v4077 = vunpack.c.l.b16 %v3965
          %v4078 = vunpack.c.h.b16 %v3965
          %v4079 = vunpack.c.l.b16 %v3966
          %v4080 = vunpack.c.h.b16 %v3966
          %v4081 = vunpack.c.l.b16 %v3967
          %v4082 = vunpack.c.h.b16 %v3967
          %v4083 = vunpack.c.l.b16 %v3968
          %v4084 = vunpack.c.h.b16 %v3968
          %v4085 = vunpack.c.l.b16 %v3969
          %v4086 = vunpack.c.h.b16 %v3969
          %v4087 = vlaneseq
          %v4088 = vshrl.u32 %v4087, 7
          %v4089 = vsub.s32 %v1977, %v4088
          %v4090 = vrot.slane %v4023, %v4089
          %v4091 = vlaneseq
          %v4092 = vshrl.u32 %v4091, 7
          %v4093 = vsub.s32 %v1982, %v4092
          %v4094 = vrot.slane %v4024, %v4093
          %v4095 = vsel %vm1987, %v4094, %v4090
          %v4096 = vlaneseq
          %v4097 = vshrl.u32 %v4096, 7
          %v4098 = vsub.s32 %v1989, %v4097
          %v4099 = vrot.slane %v4025, %v4098
          %v4100 = vsel %vm1994, %v4099, %v4095
          %v4101 = vlaneseq
          %v4102 = vshrl.u32 %v4101, 7
          %v4103 = vsub.s32 %v1996, %v4102
          %v4104 = vrot.slane %v4026, %v4103
          %v4105 = vsel %vm2001, %v4104, %v4100
          %v4106 = vlaneseq
          %v4107 = vshrl.u32 %v4106, 7
          %v4108 = vsub.s32 %v2003, %v4107
          %v4109 = vrot.slane %v4027, %v4108
          %v4110 = vsel %vm2008, %v4109, %v4105
          %v4111 = vlaneseq
          %v4112 = vshrl.u32 %v4111, 7
          %v4113 = vsub.s32 %v2010, %v4112
          %v4114 = vrot.slane %v4028, %v4113
          %v4115 = vsel %vm2015, %v4114, %v4110
          %v4116 = vlaneseq
          %v4117 = vshrl.u32 %v4116, 7
          %v4118 = vsub.s32 %v2017, %v4117
          %v4119 = vrot.slane %v4029, %v4118
          %v4120 = vsel %vm2022, %v4119, %v4115
          %v4121 = vlaneseq
          %v4122 = vshrl.u32 %v4121, 7
          %v4123 = vsub.s32 %v2024, %v4122
          %v4124 = vrot.slane %v4030, %v4123
          %v4125 = vsel %vm2029, %v4124, %v4120
          %v4126 = vlaneseq
          %v4127 = vshrl.u32 %v4126, 7
          %v4128 = vsub.s32 %v2031, %v4127
          %v4129 = vrot.slane %v4031, %v4128
          %v4130 = vsel %vm2036, %v4129, %v4125
          %v4131 = vlaneseq
          %v4132 = vshrl.u32 %v4131, 7
          %v4133 = vsub.s32 %v2038, %v4132
          %v4134 = vrot.slane %v4032, %v4133
          %v4135 = vsel %vm2043, %v4134, %v4130
          %v4136 = vlaneseq
          %v4137 = vshrl.u32 %v4136, 7
          %v4138 = vsub.s32 %v2045, %v4137
          %v4139 = vrot.slane %v4033, %v4138
          %v4140 = vsel %vm2050, %v4139, %v4135
          %v4141 = vlaneseq
          %v4142 = vshrl.u32 %v4141, 7
          %v4143 = vsub.s32 %v2052, %v4142
          %v4144 = vrot.slane %v4034, %v4143
          %v4145 = vsel %vm2057, %v4144, %v4140
          %v4146 = vlaneseq
          %v4147 = vshrl.u32 %v4146, 7
          %v4148 = vsub.s32 %v2059, %v4147
          %v4149 = vrot.slane %v4035, %v4148
          %v4150 = vsel %vm2064, %v4149, %v4145
          %v4151 = vlaneseq
          %v4152 = vshrl.u32 %v4151, 7
          %v4153 = vsub.s32 %v2066, %v4152
          %v4154 = vrot.slane %v4036, %v4153
          %v4155 = vsel %vm2071, %v4154, %v4150
          %v4156 = vlaneseq
          %v4157 = vshrl.u32 %v4156, 7
          %v4158 = vsub.s32 %v2073, %v4157
          %v4159 = vrot.slane %v4037, %v4158
          %v4160 = vsel %vm2078, %v4159, %v4155
          %v4161 = vlaneseq
          %v4162 = vshrl.u32 %v4161, 7
          %v4163 = vsub.s32 %v2080, %v4162
          %v4164 = vrot.slane %v4038, %v4163
          %v4165 = vsel %vm2085, %v4164, %v4160
          %v4166 = vlaneseq
          %v4167 = vshrl.u32 %v4166, 7
          %v4168 = vsub.s32 %v1977, %v4167
          %v4169 = vrot.slane %v4039, %v4168
          %v4170 = vlaneseq
          %v4171 = vshrl.u32 %v4170, 7
          %v4172 = vsub.s32 %v1982, %v4171
          %v4173 = vrot.slane %v4040, %v4172
          %v4174 = vsel %vm1987, %v4173, %v4169
          %v4175 = vlaneseq
          %v4176 = vshrl.u32 %v4175, 7
          %v4177 = vsub.s32 %v1989, %v4176
          %v4178 = vrot.slane %v4041, %v4177
          %v4179 = vsel %vm1994, %v4178, %v4174
          %v4180 = vlaneseq
          %v4181 = vshrl.u32 %v4180, 7
          %v4182 = vsub.s32 %v1996, %v4181
          %v4183 = vrot.slane %v4042, %v4182
          %v4184 = vsel %vm2001, %v4183, %v4179
          %v4185 = vlaneseq
          %v4186 = vshrl.u32 %v4185, 7
          %v4187 = vsub.s32 %v2003, %v4186
          %v4188 = vrot.slane %v4043, %v4187
          %v4189 = vsel %vm2008, %v4188, %v4184
          %v4190 = vlaneseq
          %v4191 = vshrl.u32 %v4190, 7
          %v4192 = vsub.s32 %v2010, %v4191
          %v4193 = vrot.slane %v4044, %v4192
          %v4194 = vsel %vm2015, %v4193, %v4189
          %v4195 = vlaneseq
          %v4196 = vshrl.u32 %v4195, 7
          %v4197 = vsub.s32 %v2017, %v4196
          %v4198 = vrot.slane %v4045, %v4197
          %v4199 = vsel %vm2022, %v4198, %v4194
          %v4200 = vlaneseq
          %v4201 = vshrl.u32 %v4200, 7
          %v4202 = vsub.s32 %v2024, %v4201
          %v4203 = vrot.slane %v4046, %v4202
          %v4204 = vsel %vm2029, %v4203, %v4199
          %v4205 = vlaneseq
          %v4206 = vshrl.u32 %v4205, 7
          %v4207 = vsub.s32 %v2031, %v4206
          %v4208 = vrot.slane %v4047, %v4207
          %v4209 = vsel %vm2036, %v4208, %v4204
          %v4210 = vlaneseq
          %v4211 = vshrl.u32 %v4210, 7
          %v4212 = vsub.s32 %v2038, %v4211
          %v4213 = vrot.slane %v4048, %v4212
          %v4214 = vsel %vm2043, %v4213, %v4209
          %v4215 = vlaneseq
          %v4216 = vshrl.u32 %v4215, 7
          %v4217 = vsub.s32 %v2045, %v4216
          %v4218 = vrot.slane %v4049, %v4217
          %v4219 = vsel %vm2050, %v4218, %v4214
          %v4220 = vlaneseq
          %v4221 = vshrl.u32 %v4220, 7
          %v4222 = vsub.s32 %v2052, %v4221
          %v4223 = vrot.slane %v4050, %v4222
          %v4224 = vsel %vm2057, %v4223, %v4219
          %v4225 = vlaneseq
          %v4226 = vshrl.u32 %v4225, 7
          %v4227 = vsub.s32 %v2059, %v4226
          %v4228 = vrot.slane %v4051, %v4227
          %v4229 = vsel %vm2064, %v4228, %v4224
          %v4230 = vlaneseq
          %v4231 = vshrl.u32 %v4230, 7
          %v4232 = vsub.s32 %v2066, %v4231
          %v4233 = vrot.slane %v4052, %v4232
          %v4234 = vsel %vm2071, %v4233, %v4229
          %v4235 = vlaneseq
          %v4236 = vshrl.u32 %v4235, 7
          %v4237 = vsub.s32 %v2073, %v4236
          %v4238 = vrot.slane %v4053, %v4237
          %v4239 = vsel %vm2078, %v4238, %v4234
          %v4240 = vlaneseq
          %v4241 = vshrl.u32 %v4240, 7
          %v4242 = vsub.s32 %v2080, %v4241
          %v4243 = vrot.slane %v4054, %v4242
          %v4244 = vsel %vm2085, %v4243, %v4239
          %v4245 = vlaneseq
          %v4246 = vshrl.u32 %v4245, 7
          %v4247 = vsub.s32 %v1977, %v4246
          %v4248 = vrot.slane %v4055, %v4247
          %v4249 = vlaneseq
          %v4250 = vshrl.u32 %v4249, 7
          %v4251 = vsub.s32 %v1982, %v4250
          %v4252 = vrot.slane %v4056, %v4251
          %v4253 = vsel %vm1987, %v4252, %v4248
          %v4254 = vlaneseq
          %v4255 = vshrl.u32 %v4254, 7
          %v4256 = vsub.s32 %v1989, %v4255
          %v4257 = vrot.slane %v4057, %v4256
          %v4258 = vsel %vm1994, %v4257, %v4253
          %v4259 = vlaneseq
          %v4260 = vshrl.u32 %v4259, 7
          %v4261 = vsub.s32 %v1996, %v4260
          %v4262 = vrot.slane %v4058, %v4261
          %v4263 = vsel %vm2001, %v4262, %v4258
          %v4264 = vlaneseq
          %v4265 = vshrl.u32 %v4264, 7
          %v4266 = vsub.s32 %v2003, %v4265
          %v4267 = vrot.slane %v4059, %v4266
          %v4268 = vsel %vm2008, %v4267, %v4263
          %v4269 = vlaneseq
          %v4270 = vshrl.u32 %v4269, 7
          %v4271 = vsub.s32 %v2010, %v4270
          %v4272 = vrot.slane %v4060, %v4271
          %v4273 = vsel %vm2015, %v4272, %v4268
          %v4274 = vlaneseq
          %v4275 = vshrl.u32 %v4274, 7
          %v4276 = vsub.s32 %v2017, %v4275
          %v4277 = vrot.slane %v4061, %v4276
          %v4278 = vsel %vm2022, %v4277, %v4273
          %v4279 = vlaneseq
          %v4280 = vshrl.u32 %v4279, 7
          %v4281 = vsub.s32 %v2024, %v4280
          %v4282 = vrot.slane %v4062, %v4281
          %v4283 = vsel %vm2029, %v4282, %v4278
          %v4284 = vlaneseq
          %v4285 = vshrl.u32 %v4284, 7
          %v4286 = vsub.s32 %v2031, %v4285
          %v4287 = vrot.slane %v4063, %v4286
          %v4288 = vsel %vm2036, %v4287, %v4283
          %v4289 = vlaneseq
          %v4290 = vshrl.u32 %v4289, 7
          %v4291 = vsub.s32 %v2038, %v4290
          %v4292 = vrot.slane %v4064, %v4291
          %v4293 = vsel %vm2043, %v4292, %v4288
          %v4294 = vlaneseq
          %v4295 = vshrl.u32 %v4294, 7
          %v4296 = vsub.s32 %v2045, %v4295
          %v4297 = vrot.slane %v4065, %v4296
          %v4298 = vsel %vm2050, %v4297, %v4293
          %v4299 = vlaneseq
          %v4300 = vshrl.u32 %v4299, 7
          %v4301 = vsub.s32 %v2052, %v4300
          %v4302 = vrot.slane %v4066, %v4301
          %v4303 = vsel %vm2057, %v4302, %v4298
          %v4304 = vlaneseq
          %v4305 = vshrl.u32 %v4304, 7
          %v4306 = vsub.s32 %v2059, %v4305
          %v4307 = vrot.slane %v4067, %v4306
          %v4308 = vsel %vm2064, %v4307, %v4303
          %v4309 = vlaneseq
          %v4310 = vshrl.u32 %v4309, 7
          %v4311 = vsub.s32 %v2066, %v4310
          %v4312 = vrot.slane %v4068, %v4311
          %v4313 = vsel %vm2071, %v4312, %v4308
          %v4314 = vlaneseq
          %v4315 = vshrl.u32 %v4314, 7
          %v4316 = vsub.s32 %v2073, %v4315
          %v4317 = vrot.slane %v4069, %v4316
          %v4318 = vsel %vm2078, %v4317, %v4313
          %v4319 = vlaneseq
          %v4320 = vshrl.u32 %v4319, 7
          %v4321 = vsub.s32 %v2080, %v4320
          %v4322 = vrot.slane %v4070, %v4321
          %v4323 = vsel %vm2085, %v4322, %v4318
          %v4324 = vlaneseq
          %v4325 = vshrl.u32 %v4324, 7
          %v4326 = vsub.s32 %v1977, %v4325
          %v4327 = vrot.slane %v4071, %v4326
          %v4328 = vlaneseq
          %v4329 = vshrl.u32 %v4328, 7
          %v4330 = vsub.s32 %v1982, %v4329
          %v4331 = vrot.slane %v4072, %v4330
          %v4332 = vsel %vm1987, %v4331, %v4327
          %v4333 = vlaneseq
          %v4334 = vshrl.u32 %v4333, 7
          %v4335 = vsub.s32 %v1989, %v4334
          %v4336 = vrot.slane %v4073, %v4335
          %v4337 = vsel %vm1994, %v4336, %v4332
          %v4338 = vlaneseq
          %v4339 = vshrl.u32 %v4338, 7
          %v4340 = vsub.s32 %v1996, %v4339
          %v4341 = vrot.slane %v4074, %v4340
          %v4342 = vsel %vm2001, %v4341, %v4337
          %v4343 = vlaneseq
          %v4344 = vshrl.u32 %v4343, 7
          %v4345 = vsub.s32 %v2003, %v4344
          %v4346 = vrot.slane %v4075, %v4345
          %v4347 = vsel %vm2008, %v4346, %v4342
          %v4348 = vlaneseq
          %v4349 = vshrl.u32 %v4348, 7
          %v4350 = vsub.s32 %v2010, %v4349
          %v4351 = vrot.slane %v4076, %v4350
          %v4352 = vsel %vm2015, %v4351, %v4347
          %v4353 = vlaneseq
          %v4354 = vshrl.u32 %v4353, 7
          %v4355 = vsub.s32 %v2017, %v4354
          %v4356 = vrot.slane %v4077, %v4355
          %v4357 = vsel %vm2022, %v4356, %v4352
          %v4358 = vlaneseq
          %v4359 = vshrl.u32 %v4358, 7
          %v4360 = vsub.s32 %v2024, %v4359
          %v4361 = vrot.slane %v4078, %v4360
          %v4362 = vsel %vm2029, %v4361, %v4357
          %v4363 = vlaneseq
          %v4364 = vshrl.u32 %v4363, 7
          %v4365 = vsub.s32 %v2031, %v4364
          %v4366 = vrot.slane %v4079, %v4365
          %v4367 = vsel %vm2036, %v4366, %v4362
          %v4368 = vlaneseq
          %v4369 = vshrl.u32 %v4368, 7
          %v4370 = vsub.s32 %v2038, %v4369
          %v4371 = vrot.slane %v4080, %v4370
          %v4372 = vsel %vm2043, %v4371, %v4367
          %v4373 = vlaneseq
          %v4374 = vshrl.u32 %v4373, 7
          %v4375 = vsub.s32 %v2045, %v4374
          %v4376 = vrot.slane %v4081, %v4375
          %v4377 = vsel %vm2050, %v4376, %v4372
          %v4378 = vlaneseq
          %v4379 = vshrl.u32 %v4378, 7
          %v4380 = vsub.s32 %v2052, %v4379
          %v4381 = vrot.slane %v4082, %v4380
          %v4382 = vsel %vm2057, %v4381, %v4377
          %v4383 = vlaneseq
          %v4384 = vshrl.u32 %v4383, 7
          %v4385 = vsub.s32 %v2059, %v4384
          %v4386 = vrot.slane %v4083, %v4385
          %v4387 = vsel %vm2064, %v4386, %v4382
          %v4388 = vlaneseq
          %v4389 = vshrl.u32 %v4388, 7
          %v4390 = vsub.s32 %v2066, %v4389
          %v4391 = vrot.slane %v4084, %v4390
          %v4392 = vsel %vm2071, %v4391, %v4387
          %v4393 = vlaneseq
          %v4394 = vshrl.u32 %v4393, 7
          %v4395 = vsub.s32 %v2073, %v4394
          %v4396 = vrot.slane %v4085, %v4395
          %v4397 = vsel %vm2078, %v4396, %v4392
          %v4398 = vlaneseq
          %v4399 = vshrl.u32 %v4398, 7
          %v4400 = vsub.s32 %v2080, %v4399
          %v4401 = vrot.slane %v4086, %v4400
          %v4402 = vsel %vm2085, %v4401, %v4397
          %v4403 = vsel %vm2640, %v4323, %v4165
          %v4404 = vsel %vm2640, %v4402, %v4244
          %v4405 = vpack.c.b16 %v4403, %v4403
          %v4406 = vpack.c.b16 %v4404, %v4404
          %v4473 = vunpack.c.l.b16 %v3874
          %v4474 = vunpack.c.h.b16 %v3874
          %v4475 = vunpack.c.l.b16 %v3875
          %v4476 = vunpack.c.h.b16 %v3875
          %v4477 = vunpack.c.l.b16 %v3876
          %v4478 = vunpack.c.h.b16 %v3876
          %v4479 = vunpack.c.l.b16 %v3877
          %v4480 = vunpack.c.h.b16 %v3877
          %v4481 = vunpack.c.l.b16 %v3878
          %v4482 = vunpack.c.h.b16 %v3878
          %v4483 = vunpack.c.l.b16 %v3879
          %v4484 = vunpack.c.h.b16 %v3879
          %v4485 = vunpack.c.l.b16 %v3880
          %v4486 = vunpack.c.h.b16 %v3880
          %v4487 = vunpack.c.l.b16 %v3881
          %v4488 = vunpack.c.h.b16 %v3881
          %v4489 = vunpack.c.l.b16 %v3882
          %v4490 = vunpack.c.h.b16 %v3882
          %v4491 = vunpack.c.l.b16 %v3883
          %v4492 = vunpack.c.h.b16 %v3883
          %v4493 = vunpack.c.l.b16 %v3884
          %v4494 = vunpack.c.h.b16 %v3884
          %v4495 = vunpack.c.l.b16 %v3885
          %v4496 = vunpack.c.h.b16 %v3885
          %v4497 = vunpack.c.l.b16 %v3886
          %v4498 = vunpack.c.h.b16 %v3886
          %v4499 = vunpack.c.l.b16 %v3887
          %v4500 = vunpack.c.h.b16 %v3887
          %v4501 = vunpack.c.l.b16 %v3888
          %v4502 = vunpack.c.h.b16 %v3888
          %v4503 = vunpack.c.l.b16 %v3889
          %v4504 = vunpack.c.h.b16 %v3889
          %v4505 = vunpack.c.l.b16 %v3890
          %v4506 = vunpack.c.h.b16 %v3890
          %v4507 = vunpack.c.l.b16 %v3891
          %v4508 = vunpack.c.h.b16 %v3891
          %v4509 = vunpack.c.l.b16 %v3892
          %v4510 = vunpack.c.h.b16 %v3892
          %v4511 = vunpack.c.l.b16 %v3893
          %v4512 = vunpack.c.h.b16 %v3893
          %v4513 = vunpack.c.l.b16 %v3894
          %v4514 = vunpack.c.h.b16 %v3894
          %v4515 = vunpack.c.l.b16 %v3895
          %v4516 = vunpack.c.h.b16 %v3895
          %v4517 = vunpack.c.l.b16 %v3896
          %v4518 = vunpack.c.h.b16 %v3896
          %v4519 = vunpack.c.l.b16 %v3897
          %v4520 = vunpack.c.h.b16 %v3897
          %v4521 = vunpack.c.l.b16 %v3898
          %v4522 = vunpack.c.h.b16 %v3898
          %v4523 = vunpack.c.l.b16 %v3899
          %v4524 = vunpack.c.h.b16 %v3899
          %v4525 = vunpack.c.l.b16 %v3900
          %v4526 = vunpack.c.h.b16 %v3900
          %v4527 = vunpack.c.l.b16 %v3901
          %v4528 = vunpack.c.h.b16 %v3901
          %v4529 = vunpack.c.l.b16 %v3902
          %v4530 = vunpack.c.h.b16 %v3902
          %v4531 = vunpack.c.l.b16 %v3903
          %v4532 = vunpack.c.h.b16 %v3903
          %v4533 = vunpack.c.l.b16 %v3904
          %v4534 = vunpack.c.h.b16 %v3904
          %v4535 = vunpack.c.l.b16 %v3905
          %v4536 = vunpack.c.h.b16 %v3905
          %v4537 = vunpack.c.l.b16 %v3906
          %v4538 = vunpack.c.h.b16 %v3906
          %v4539 = vunpack.c.l.b16 %v3907
          %v4540 = vunpack.c.h.b16 %v3907
          %v4541 = vunpack.c.l.b16 %v3908
          %v4542 = vunpack.c.h.b16 %v3908
          %v4543 = vunpack.c.l.b16 %v3909
          %v4544 = vunpack.c.h.b16 %v3909
          %v4545 = vunpack.c.l.b16 %v3910
          %v4546 = vunpack.c.h.b16 %v3910
          %v4547 = vunpack.c.l.b16 %v3911
          %v4548 = vunpack.c.h.b16 %v3911
          %v4549 = vunpack.c.l.b16 %v3912
          %v4550 = vunpack.c.h.b16 %v3912
          %v4551 = vunpack.c.l.b16 %v3913
          %v4552 = vunpack.c.h.b16 %v3913
          %v4553 = vunpack.c.l.b16 %v3914
          %v4554 = vunpack.c.h.b16 %v3914
          %v4555 = vunpack.c.l.b16 %v3915
          %v4556 = vunpack.c.h.b16 %v3915
          %v4557 = vunpack.c.l.b16 %v3916
          %v4558 = vunpack.c.h.b16 %v3916
          %v4559 = vunpack.c.l.b16 %v3917
          %v4560 = vunpack.c.h.b16 %v3917
          %v4561 = vunpack.c.l.b16 %v3918
          %v4562 = vunpack.c.h.b16 %v3918
          %v4563 = vunpack.c.l.b16 %v3919
          %v4564 = vunpack.c.h.b16 %v3919
          %v4565 = vunpack.c.l.b16 %v3920
          %v4566 = vunpack.c.h.b16 %v3920
          %v4567 = vunpack.c.l.b16 %v3921
          %v4568 = vunpack.c.h.b16 %v3921
          %v4569 = vunpack.c.l.b16 %v3922
          %v4570 = vunpack.c.h.b16 %v3922
          %v4571 = vunpack.c.l.b16 %v3923
          %v4572 = vunpack.c.h.b16 %v3923
          %v4573 = vunpack.c.l.b16 %v3924
          %v4574 = vunpack.c.h.b16 %v3924
          %v4575 = vunpack.c.l.b16 %v3925
          %v4576 = vunpack.c.h.b16 %v3925
          %v4577 = vunpack.c.l.b16 %v3926
          %v4578 = vunpack.c.h.b16 %v3926
          %v4579 = vunpack.c.l.b16 %v3927
          %v4580 = vunpack.c.h.b16 %v3927
          %v4581 = vunpack.c.l.b16 %v3928
          %v4582 = vunpack.c.h.b16 %v3928
          %v4583 = vunpack.c.l.b16 %v3929
          %v4584 = vunpack.c.h.b16 %v3929
          %v4585 = vunpack.c.l.b16 %v3930
          %v4586 = vunpack.c.h.b16 %v3930
          %v4587 = vunpack.c.l.b16 %v3931
          %v4588 = vunpack.c.h.b16 %v3931
          %v4589 = vunpack.c.l.b16 %v3932
          %v4590 = vunpack.c.h.b16 %v3932
          %v4591 = vunpack.c.l.b16 %v3933
          %v4592 = vunpack.c.h.b16 %v3933
          %v4593 = vunpack.c.l.b16 %v3934
          %v4594 = vunpack.c.h.b16 %v3934
          %v4595 = vunpack.c.l.b16 %v3935
          %v4596 = vunpack.c.h.b16 %v3935
          %v4597 = vunpack.c.l.b16 %v3936
          %v4598 = vunpack.c.h.b16 %v3936
          %v4599 = vunpack.c.l.b16 %v3937
          %v4600 = vunpack.c.h.b16 %v3937
          %v4601 = vpack.c.b16 %v4477, %v4473
          %v4602 = vpack.c.b16 %v4478, %v4474
          %v4603 = vpack.c.b16 %v4479, %v4475
          %v4604 = vpack.c.b16 %v4480, %v4476
          %v4605 = vpack.c.b16 %v4485, %v4481
          %v4606 = vpack.c.b16 %v4486, %v4482
          %v4607 = vpack.c.b16 %v4487, %v4483
          %v4608 = vpack.c.b16 %v4488, %v4484
          %v4609 = vpack.c.b16 %v4493, %v4489
          %v4610 = vpack.c.b16 %v4494, %v4490
          %v4611 = vpack.c.b16 %v4495, %v4491
          %v4612 = vpack.c.b16 %v4496, %v4492
          %v4613 = vpack.c.b16 %v4501, %v4497
          %v4614 = vpack.c.b16 %v4502, %v4498
          %v4615 = vpack.c.b16 %v4503, %v4499
          %v4616 = vpack.c.b16 %v4504, %v4500
          %v4617 = vpack.c.b16 %v4509, %v4505
          %v4618 = vpack.c.b16 %v4510, %v4506
          %v4619 = vpack.c.b16 %v4511, %v4507
          %v4620 = vpack.c.b16 %v4512, %v4508
          %v4621 = vpack.c.b16 %v4517, %v4513
          %v4622 = vpack.c.b16 %v4518, %v4514
          %v4623 = vpack.c.b16 %v4519, %v4515
          %v4624 = vpack.c.b16 %v4520, %v4516
          %v4625 = vpack.c.b16 %v4525, %v4521
          %v4626 = vpack.c.b16 %v4526, %v4522
          %v4627 = vpack.c.b16 %v4527, %v4523
          %v4628 = vpack.c.b16 %v4528, %v4524
          %v4629 = vpack.c.b16 %v4533, %v4529
          %v4630 = vpack.c.b16 %v4534, %v4530
          %v4631 = vpack.c.b16 %v4535, %v4531
          %v4632 = vpack.c.b16 %v4536, %v4532
          %v4633 = vpack.c.b16 %v4541, %v4537
          %v4634 = vpack.c.b16 %v4542, %v4538
          %v4635 = vpack.c.b16 %v4543, %v4539
          %v4636 = vpack.c.b16 %v4544, %v4540
          %v4637 = vpack.c.b16 %v4549, %v4545
          %v4638 = vpack.c.b16 %v4550, %v4546
          %v4639 = vpack.c.b16 %v4551, %v4547
          %v4640 = vpack.c.b16 %v4552, %v4548
          %v4641 = vpack.c.b16 %v4557, %v4553
          %v4642 = vpack.c.b16 %v4558, %v4554
          %v4643 = vpack.c.b16 %v4559, %v4555
          %v4644 = vpack.c.b16 %v4560, %v4556
          %v4645 = vpack.c.b16 %v4565, %v4561
          %v4646 = vpack.c.b16 %v4566, %v4562
          %v4647 = vpack.c.b16 %v4567, %v4563
          %v4648 = vpack.c.b16 %v4568, %v4564
          %v4649 = vpack.c.b16 %v4573, %v4569
          %v4650 = vpack.c.b16 %v4574, %v4570
          %v4651 = vpack.c.b16 %v4575, %v4571
          %v4652 = vpack.c.b16 %v4576, %v4572
          %v4653 = vpack.c.b16 %v4581, %v4577
          %v4654 = vpack.c.b16 %v4582, %v4578
          %v4655 = vpack.c.b16 %v4583, %v4579
          %v4656 = vpack.c.b16 %v4584, %v4580
          %v4657 = vpack.c.b16 %v4589, %v4585
          %v4658 = vpack.c.b16 %v4590, %v4586
          %v4659 = vpack.c.b16 %v4591, %v4587
          %v4660 = vpack.c.b16 %v4592, %v4588
          %v4661 = vpack.c.b16 %v4597, %v4593
          %v4662 = vpack.c.b16 %v4598, %v4594
          %v4663 = vpack.c.b16 %v4599, %v4595
          %v4664 = vpack.c.b16 %v4600, %v4596
          %4729 = vmatprep.subr.bf16.mxu0 %v4602
          %4730 = vmatpush1.bf16.msra.mxu0 %v4601
          %4731 = vmatprep.subr.bf16.mxu0 %v4606
          %4732 = vmatpush1.bf16.msra.mxu0 %v4605
          %4733 = vmatprep.subr.bf16.mxu0 %v4610
          %4734 = vmatpush1.bf16.msra.mxu0 %v4609
          %4735 = vmatprep.subr.bf16.mxu0 %v4614
          %4736 = vmatpush1.bf16.msra.mxu0 %v4613
          %4737 = vmatprep.subr.bf16.mxu0 %v4618
          %4738 = vmatpush1.bf16.msra.mxu0 %v4617
          %4739 = vmatprep.subr.bf16.mxu0 %v4622
          %4740 = vmatpush1.bf16.msra.mxu0 %v4621
          %4741 = vmatprep.subr.bf16.mxu0 %v4626
          %4742 = vmatpush1.bf16.msra.mxu0 %v4625
          %4743 = vmatprep.subr.bf16.mxu0 %v4630
          %4744 = vmatpush1.bf16.msra.mxu0 %v4629
          %4745 = vmatprep.subr.bf16.mxu0 %v4634
          %4746 = vmatpush1.bf16.msra.mxu0 %v4633
          %4747 = vmatprep.subr.bf16.mxu0 %v4638
          %4748 = vmatpush1.bf16.msra.mxu0 %v4637
          %4749 = vmatprep.subr.bf16.mxu0 %v4642
          %4750 = vmatpush1.bf16.msra.mxu0 %v4641
          %4751 = vmatprep.subr.bf16.mxu0 %v4646
          %4752 = vmatpush1.bf16.msra.mxu0 %v4645
          %4753 = vmatprep.subr.bf16.mxu0 %v4650
          %4754 = vmatpush1.bf16.msra.mxu0 %v4649
          %4755 = vmatprep.subr.bf16.mxu0 %v4654
          %4756 = vmatpush1.bf16.msra.mxu0 %v4653
          %4757 = vmatprep.subr.bf16.mxu0 %v4658
          %4758 = vmatpush1.bf16.msra.mxu0 %v4657
          %4759 = vmatprep.subr.bf16.mxu0 %v4662
          %4760 = vmatpush1.bf16.msra.mxu0 %v4661
          %4761 = vmatprep.mubr.bf16.mxu0 %v4406
          %4762 = vmatmul.mubr.bf16.gmra.mrb[0].mxu0 %v4405
          %v4763 = vpop.f32.mrb[0].mxu0
          %v4764 = vadd.f32 %v3974, %v4763
          %v4765 = vpop.f32.mrb[0].mxu0
          %v4766 = vadd.f32 %v3978, %v4765
          %v4767 = vpop.f32.mrb[0].mxu0
          %v4768 = vpop.f32.mrb[0].mxu0
          %4769 = vdwg.mxu0
          %4770 = vmatprep.subr.bf16.mxu0 %v4604
          %4771 = vmatpush1.bf16.msra.mxu0 %v4603
          %4772 = vmatprep.subr.bf16.mxu0 %v4608
          %4773 = vmatpush1.bf16.msra.mxu0 %v4607
          %4774 = vmatprep.subr.bf16.mxu0 %v4612
          %4775 = vmatpush1.bf16.msra.mxu0 %v4611
          %4776 = vmatprep.subr.bf16.mxu0 %v4616
          %4777 = vmatpush1.bf16.msra.mxu0 %v4615
          %4778 = vmatprep.subr.bf16.mxu0 %v4620
          %4779 = vmatpush1.bf16.msra.mxu0 %v4619
          %4780 = vmatprep.subr.bf16.mxu0 %v4624
          %4781 = vmatpush1.bf16.msra.mxu0 %v4623
          %4782 = vmatprep.subr.bf16.mxu0 %v4628
          %4783 = vmatpush1.bf16.msra.mxu0 %v4627
          %4784 = vmatprep.subr.bf16.mxu0 %v4632
          %4785 = vmatpush1.bf16.msra.mxu0 %v4631
          %4786 = vmatprep.subr.bf16.mxu0 %v4636
          %4787 = vmatpush1.bf16.msra.mxu0 %v4635
          %4788 = vmatprep.subr.bf16.mxu0 %v4640
          %4789 = vmatpush1.bf16.msra.mxu0 %v4639
          %4790 = vmatprep.subr.bf16.mxu0 %v4644
          %4791 = vmatpush1.bf16.msra.mxu0 %v4643
          %4792 = vmatprep.subr.bf16.mxu0 %v4648
          %4793 = vmatpush1.bf16.msra.mxu0 %v4647
          %4794 = vmatprep.subr.bf16.mxu0 %v4652
          %4795 = vmatpush1.bf16.msra.mxu0 %v4651
          %4796 = vmatprep.subr.bf16.mxu0 %v4656
          %4797 = vmatpush1.bf16.msra.mxu0 %v4655
          %4798 = vmatprep.subr.bf16.mxu0 %v4660
          %4799 = vmatpush1.bf16.msra.mxu0 %v4659
          %4800 = vmatprep.subr.bf16.mxu0 %v4664
          %4801 = vmatpush1.bf16.msra.mxu0 %v4663
          %4802 = vmatprep.mubr.bf16.mxu0 %v4406
          %4803 = vmatmul.mubr.bf16.gmra.mrb[0].mxu0 %v4405
          %v4804 = vpop.f32.mrb[0].mxu0
          %v4805 = vadd.f32 %v3982, %v4804
          %v4806 = vpop.f32.mrb[0].mxu0
          %v4807 = vadd.f32 %v3986, %v4806
          %v4808 = vpop.f32.mrb[0].mxu0
          %v4809 = vpop.f32.mrb[0].mxu0
          %4810 = vdwg.mxu0
          %v4811 = vmax.f32 %v4764, 0.0
          %v4812 = vmax.f32 %v4766, 0.0
          %v4813 = vmax.f32 %v4805, 0.0
          %v4814 = vmax.f32 %v4807, 0.0
          %v4815 = vld [vmem:[#allocation2] sm:$0xff]
          %v4817 = vlaneseq
          %v4818 = vshrl.u32 %v4817, 7
          %v4819 = vsub.s32 0, %v4818
          %v4820 = vrot.slane %v3487, %v4819
          %v4821 = vlaneseq
          %v4822 = vshrl.u32 %v4821, 7
          %v4823 = vsub.s32 1, %v4822
          %v4824 = vrot.slane %v3487, %v4823
          %v4825 = vlaneseq
          %v4826 = vshrl.u32 %v4825, 7
          %v4827 = vsub.s32 2, %v4826
          %v4828 = vrot.slane %v3487, %v4827
          %v4829 = vlaneseq
          %v4830 = vshrl.u32 %v4829, 7
          %v4831 = vsub.s32 3, %v4830
          %v4832 = vrot.slane %v3487, %v4831
          %v4833 = vcombine.low %v4820, %v4824
          %v4834 = vcombine.low %v4828, %v4832
          %v4836 = vunpack.c.l.s4 1983009808
          %v4837 = vunpack.c.0.s8 %v4836
          %v4838 = vlaneseq
          %v4839 = vshrl.u32 %v4838, 7
          %v4840 = vsub.s32 %v4837, %v4839
          %v4841 = vrot.slane %v4833, %v4840
          %v4843 = vunpack.c.l.s4 1983009808
          %v4844 = vunpack.c.0.s8 %v4843
          %v4845 = vlaneseq
          %v4846 = vshrl.u32 %v4845, 7
          %v4847 = vsub.s32 %v4844, %v4846
          %v4848 = vrot.slane %v4834, %v4847
          %v4849 = vcombine.low %v4841, %v4848
          %v4851 = vadd.f32 %v4815, %v4849
          %v4852 = vmax.f32 %v4851, 0.0
          %v4853 = vld [vmem:[%s3 + $0x200] sm:$0xff]
          %v4854 = vld [vmem:[%s3 + $0x208] sm:$0xff]
          %v4855 = vld [vmem:[%s3 + $0x210] sm:$0xff]
          %v4856 = vld [vmem:[%s3 + $0x218] sm:$0xff]
          %v4857 = vld [vmem:[%s3 + $0x220] sm:$0xff]
          %v4858 = vld [vmem:[%s3 + $0x228] sm:$0xff]
          %v4859 = vld [vmem:[%s3 + $0x230] sm:$0xff]
          %v4860 = vld [vmem:[%s3 + $0x238] sm:$0xff]
          %v4861 = vld [vmem:[%s3 + $0x240] sm:$0xff]
          %v4862 = vld [vmem:[%s3 + $0x248] sm:$0xff]
          %v4863 = vld [vmem:[%s3 + $0x250] sm:$0xff]
          %v4864 = vld [vmem:[%s3 + $0x258] sm:$0xff]
          %v4865 = vld [vmem:[%s3 + $0x260] sm:$0xff]
          %v4866 = vld [vmem:[%s3 + $0x268] sm:$0xff]
          %v4867 = vld [vmem:[%s3 + $0x270] sm:$0xff]
          %v4868 = vld [vmem:[%s3 + $0x278] sm:$0xff]
          %v4869 = vld [vmem:[%s3 + $0x280] sm:$0xff]
          %v4870 = vld [vmem:[%s3 + $0x288] sm:$0xff]
          %v4871 = vld [vmem:[%s3 + $0x290] sm:$0xff]
          %v4872 = vld [vmem:[%s3 + $0x298] sm:$0xff]
          %v4873 = vld [vmem:[%s3 + $0x2a0] sm:$0xff]
          %v4874 = vld [vmem:[%s3 + $0x2a8] sm:$0xff]
          %v4875 = vld [vmem:[%s3 + $0x2b0] sm:$0xff]
          %v4876 = vld [vmem:[%s3 + $0x2b8] sm:$0xff]
          %v4877 = vld [vmem:[%s3 + $0x2c0] sm:$0xff]
          %v4878 = vld [vmem:[%s3 + $0x2c8] sm:$0xff]
          %v4879 = vld [vmem:[%s3 + $0x2d0] sm:$0xff]
          %v4880 = vld [vmem:[%s3 + $0x2d8] sm:$0xff]
          %v4881 = vld [vmem:[%s3 + $0x2e0] sm:$0xff]
          %v4882 = vld [vmem:[%s3 + $0x2e8] sm:$0xff]
          %v4883 = vld [vmem:[%s3 + $0x2f0] sm:$0xff]
          %v4884 = vld [vmem:[%s3 + $0x2f8] sm:$0xff]
          %v4885 = vld [vmem:[%s3 + $0x300] sm:$0xff]
          %v4886 = vld [vmem:[%s3 + $0x308] sm:$0xff]
          %v4887 = vld [vmem:[%s3 + $0x310] sm:$0xff]
          %v4888 = vld [vmem:[%s3 + $0x318] sm:$0xff]
          %v4889 = vld [vmem:[%s3 + $0x320] sm:$0xff]
          %v4890 = vld [vmem:[%s3 + $0x328] sm:$0xff]
          %v4891 = vld [vmem:[%s3 + $0x330] sm:$0xff]
          %v4892 = vld [vmem:[%s3 + $0x338] sm:$0xff]
          %v4893 = vld [vmem:[%s3 + $0x340] sm:$0xff]
          %v4894 = vld [vmem:[%s3 + $0x348] sm:$0xff]
          %v4895 = vld [vmem:[%s3 + $0x350] sm:$0xff]
          %v4896 = vld [vmem:[%s3 + $0x358] sm:$0xff]
          %v4897 = vld [vmem:[%s3 + $0x360] sm:$0xff]
          %v4898 = vld [vmem:[%s3 + $0x368] sm:$0xff]
          %v4899 = vld [vmem:[%s3 + $0x370] sm:$0xff]
          %v4900 = vld [vmem:[%s3 + $0x378] sm:$0xff]
          %v4901 = vld [vmem:[%s3 + $0x380] sm:$0xff]
          %v4902 = vld [vmem:[%s3 + $0x388] sm:$0xff]
          %v4903 = vld [vmem:[%s3 + $0x390] sm:$0xff]
          %v4904 = vld [vmem:[%s3 + $0x398] sm:$0xff]
          %v4905 = vld [vmem:[%s3 + $0x3a0] sm:$0xff]
          %v4906 = vld [vmem:[%s3 + $0x3a8] sm:$0xff]
          %v4907 = vld [vmem:[%s3 + $0x3b0] sm:$0xff]
          %v4908 = vld [vmem:[%s3 + $0x3b8] sm:$0xff]
          %v4909 = vld [vmem:[%s3 + $0x3c0] sm:$0xff]
          %v4910 = vld [vmem:[%s3 + $0x3c8] sm:$0xff]
          %v4911 = vld [vmem:[%s3 + $0x3d0] sm:$0xff]
          %v4912 = vld [vmem:[%s3 + $0x3d8] sm:$0xff]
          %v4913 = vld [vmem:[%s3 + $0x3e0] sm:$0xff]
          %v4914 = vld [vmem:[%s3 + $0x3e8] sm:$0xff]
          %v4915 = vld [vmem:[%s3 + $0x3f0] sm:$0xff]
          %v4916 = vld [vmem:[%s3 + $0x3f8] sm:$0xff]
          %v4917 = vld [vmem:[%s3 + $0x400] sm:$0xff]
          %v4918 = vld [vmem:[%s3 + $0x408] sm:$0xff]
          %v4919 = vld [vmem:[%s3 + $0x410] sm:$0xff]
          %v4920 = vld [vmem:[%s3 + $0x418] sm:$0xff]
          %v4921 = vld [vmem:[%s3 + $0x420] sm:$0xff]
          %v4922 = vld [vmem:[%s3 + $0x428] sm:$0xff]
          %v4923 = vld [vmem:[%s3 + $0x430] sm:$0xff]
          %v4924 = vld [vmem:[%s3 + $0x438] sm:$0xff]
          %v4925 = vld [vmem:[%s3 + $0x440] sm:$0xff]
          %v4926 = vld [vmem:[%s3 + $0x448] sm:$0xff]
          %v4927 = vld [vmem:[%s3 + $0x450] sm:$0xff]
          %v4928 = vld [vmem:[%s3 + $0x458] sm:$0xff]
          %v4929 = vld [vmem:[%s3 + $0x460] sm:$0xff]
          %v4930 = vld [vmem:[%s3 + $0x468] sm:$0xff]
          %v4931 = vld [vmem:[%s3 + $0x470] sm:$0xff]
          %v4932 = vld [vmem:[%s3 + $0x478] sm:$0xff]
          %v4933 = vld [vmem:[%s3 + $0x480] sm:$0xff]
          %v4934 = vld [vmem:[%s3 + $0x488] sm:$0xff]
          %v4935 = vld [vmem:[%s3 + $0x490] sm:$0xff]
          %v4936 = vld [vmem:[%s3 + $0x498] sm:$0xff]
          %v4937 = vld [vmem:[%s3 + $0x4a0] sm:$0xff]
          %v4938 = vld [vmem:[%s3 + $0x4a8] sm:$0xff]
          %v4939 = vld [vmem:[%s3 + $0x4b0] sm:$0xff]
          %v4940 = vld [vmem:[%s3 + $0x4b8] sm:$0xff]
          %v4941 = vld [vmem:[%s3 + $0x4c0] sm:$0xff]
          %v4942 = vld [vmem:[%s3 + $0x4c8] sm:$0xff]
          %v4943 = vld [vmem:[%s3 + $0x4d0] sm:$0xff]
          %v4944 = vld [vmem:[%s3 + $0x4d8] sm:$0xff]
          %v4945 = vld [vmem:[%s3 + $0x4e0] sm:$0xff]
          %v4946 = vld [vmem:[%s3 + $0x4e8] sm:$0xff]
          %v4947 = vld [vmem:[%s3 + $0x4f0] sm:$0xff]
          %v4948 = vld [vmem:[%s3 + $0x4f8] sm:$0xff]
          %v4949 = vld [vmem:[%s3 + $0x500] sm:$0xff]
          %v4950 = vld [vmem:[%s3 + $0x508] sm:$0xff]
          %v4951 = vld [vmem:[%s3 + $0x510] sm:$0xff]
          %v4952 = vld [vmem:[%s3 + $0x518] sm:$0xff]
          %v4953 = vld [vmem:[%s3 + $0x520] sm:$0xff]
          %v4954 = vld [vmem:[%s3 + $0x528] sm:$0xff]
          %v4955 = vld [vmem:[%s3 + $0x530] sm:$0xff]
          %v4956 = vld [vmem:[%s3 + $0x538] sm:$0xff]
          %v4957 = vld [vmem:[%s3 + $0x540] sm:$0xff]
          %v4958 = vld [vmem:[%s3 + $0x548] sm:$0xff]
          %v4959 = vld [vmem:[%s3 + $0x550] sm:$0xff]
          %v4960 = vld [vmem:[%s3 + $0x558] sm:$0xff]
          %v4961 = vld [vmem:[%s3 + $0x560] sm:$0xff]
          %v4962 = vld [vmem:[%s3 + $0x568] sm:$0xff]
          %v4963 = vld [vmem:[%s3 + $0x570] sm:$0xff]
          %v4964 = vld [vmem:[%s3 + $0x578] sm:$0xff]
          %v4965 = vld [vmem:[%s3 + $0x580] sm:$0xff]
          %v4966 = vld [vmem:[%s3 + $0x588] sm:$0xff]
          %v4967 = vld [vmem:[%s3 + $0x590] sm:$0xff]
          %v4968 = vld [vmem:[%s3 + $0x598] sm:$0xff]
          %v4969 = vld [vmem:[%s3 + $0x5a0] sm:$0xff]
          %v4970 = vld [vmem:[%s3 + $0x5a8] sm:$0xff]
          %v4971 = vld [vmem:[%s3 + $0x5b0] sm:$0xff]
          %v4972 = vld [vmem:[%s3 + $0x5b8] sm:$0xff]
          %v4973 = vld [vmem:[%s3 + $0x5c0] sm:$0xff]
          %v4974 = vld [vmem:[%s3 + $0x5c8] sm:$0xff]
          %v4975 = vld [vmem:[%s3 + $0x5d0] sm:$0xff]
          %v4976 = vld [vmem:[%s3 + $0x5d8] sm:$0xff]
          %v4977 = vld [vmem:[%s3 + $0x5e0] sm:$0xff]
          %v4978 = vld [vmem:[%s3 + $0x5e8] sm:$0xff]
          %v4979 = vld [vmem:[%s3 + $0x5f0] sm:$0xff]
          %v4980 = vld [vmem:[%s3 + $0x5f8] sm:$0xff]
          %v4981 = vld [vmem:[%s3 + $0x600] sm:$0xff]
          %v4982 = vld [vmem:[%s3 + $0x608] sm:$0xff]
          %v4983 = vld [vmem:[%s3 + $0x610] sm:$0xff]
          %v4984 = vld [vmem:[%s3 + $0x618] sm:$0xff]
          %v4985 = vld [vmem:[%s3 + $0x620] sm:$0xff]
          %v4986 = vld [vmem:[%s3 + $0x628] sm:$0xff]
          %v4987 = vld [vmem:[%s3 + $0x630] sm:$0xff]
          %v4988 = vld [vmem:[%s3 + $0x638] sm:$0xff]
          %v4989 = vld [vmem:[%s3 + $0x640] sm:$0xff]
          %v4990 = vld [vmem:[%s3 + $0x648] sm:$0xff]
          %v4991 = vld [vmem:[%s3 + $0x650] sm:$0xff]
          %v4992 = vld [vmem:[%s3 + $0x658] sm:$0xff]
          %v4993 = vld [vmem:[%s3 + $0x660] sm:$0xff]
          %v4994 = vld [vmem:[%s3 + $0x668] sm:$0xff]
          %v4995 = vld [vmem:[%s3 + $0x670] sm:$0xff]
          %v4996 = vld [vmem:[%s3 + $0x678] sm:$0xff]
          %v4997 = vld [vmem:[%s3 + $0x680] sm:$0xff]
          %v4998 = vld [vmem:[%s3 + $0x688] sm:$0xff]
          %v4999 = vld [vmem:[%s3 + $0x690] sm:$0xff]
          %v5000 = vld [vmem:[%s3 + $0x698] sm:$0xff]
          %v5001 = vld [vmem:[%s3 + $0x6a0] sm:$0xff]
          %v5002 = vld [vmem:[%s3 + $0x6a8] sm:$0xff]
          %v5003 = vld [vmem:[%s3 + $0x6b0] sm:$0xff]
          %v5004 = vld [vmem:[%s3 + $0x6b8] sm:$0xff]
          %v5005 = vld [vmem:[%s3 + $0x6c0] sm:$0xff]
          %v5006 = vld [vmem:[%s3 + $0x6c8] sm:$0xff]
          %v5007 = vld [vmem:[%s3 + $0x6d0] sm:$0xff]
          %v5008 = vld [vmem:[%s3 + $0x6d8] sm:$0xff]
          %v5009 = vld [vmem:[%s3 + $0x6e0] sm:$0xff]
          %v5010 = vld [vmem:[%s3 + $0x6e8] sm:$0xff]
          %v5011 = vld [vmem:[%s3 + $0x6f0] sm:$0xff]
          %v5012 = vld [vmem:[%s3 + $0x6f8] sm:$0xff]
          %v5013 = vld [vmem:[%s3 + $0x700] sm:$0xff]
          %v5014 = vld [vmem:[%s3 + $0x708] sm:$0xff]
          %v5015 = vld [vmem:[%s3 + $0x710] sm:$0xff]
          %v5016 = vld [vmem:[%s3 + $0x718] sm:$0xff]
          %v5017 = vld [vmem:[%s3 + $0x720] sm:$0xff]
          %v5018 = vld [vmem:[%s3 + $0x728] sm:$0xff]
          %v5019 = vld [vmem:[%s3 + $0x730] sm:$0xff]
          %v5020 = vld [vmem:[%s3 + $0x738] sm:$0xff]
          %v5021 = vld [vmem:[%s3 + $0x740] sm:$0xff]
          %v5022 = vld [vmem:[%s3 + $0x748] sm:$0xff]
          %v5023 = vld [vmem:[%s3 + $0x750] sm:$0xff]
          %v5024 = vld [vmem:[%s3 + $0x758] sm:$0xff]
          %v5025 = vld [vmem:[%s3 + $0x760] sm:$0xff]
          %v5026 = vld [vmem:[%s3 + $0x768] sm:$0xff]
          %v5027 = vld [vmem:[%s3 + $0x770] sm:$0xff]
          %v5028 = vld [vmem:[%s3 + $0x778] sm:$0xff]
          %v5029 = vld [vmem:[%s3 + $0x780] sm:$0xff]
          %v5030 = vld [vmem:[%s3 + $0x788] sm:$0xff]
          %v5031 = vld [vmem:[%s3 + $0x790] sm:$0xff]
          %v5032 = vld [vmem:[%s3 + $0x798] sm:$0xff]
          %v5033 = vld [vmem:[%s3 + $0x7a0] sm:$0xff]
          %v5034 = vld [vmem:[%s3 + $0x7a8] sm:$0xff]
          %v5035 = vld [vmem:[%s3 + $0x7b0] sm:$0xff]
          %v5036 = vld [vmem:[%s3 + $0x7b8] sm:$0xff]
          %v5037 = vld [vmem:[%s3 + $0x7c0] sm:$0xff]
          %v5038 = vld [vmem:[%s3 + $0x7c8] sm:$0xff]
          %v5039 = vld [vmem:[%s3 + $0x7d0] sm:$0xff]
          %v5040 = vld [vmem:[%s3 + $0x7d8] sm:$0xff]
          %v5041 = vld [vmem:[%s3 + $0x7e0] sm:$0xff]
          %v5042 = vld [vmem:[%s3 + $0x7e8] sm:$0xff]
          %v5043 = vld [vmem:[%s3 + $0x7f0] sm:$0xff]
          %v5044 = vld [vmem:[%s3 + $0x7f8] sm:$0xff]
          %v5045 = vld [vmem:[%s3 + $0x800] sm:$0xff]
          %v5046 = vld [vmem:[%s3 + $0x808] sm:$0xff]
          %v5047 = vld [vmem:[%s3 + $0x810] sm:$0xff]
          %v5048 = vld [vmem:[%s3 + $0x818] sm:$0xff]
          %v5049 = vld [vmem:[%s3 + $0x820] sm:$0xff]
          %v5050 = vld [vmem:[%s3 + $0x828] sm:$0xff]
          %v5051 = vld [vmem:[%s3 + $0x830] sm:$0xff]
          %v5052 = vld [vmem:[%s3 + $0x838] sm:$0xff]
          %v5053 = vld [vmem:[%s3 + $0x840] sm:$0xff]
          %v5054 = vld [vmem:[%s3 + $0x848] sm:$0xff]
          %v5055 = vld [vmem:[%s3 + $0x850] sm:$0xff]
          %v5056 = vld [vmem:[%s3 + $0x858] sm:$0xff]
          %v5057 = vld [vmem:[%s3 + $0x860] sm:$0xff]
          %v5058 = vld [vmem:[%s3 + $0x868] sm:$0xff]
          %v5059 = vld [vmem:[%s3 + $0x870] sm:$0xff]
          %v5060 = vld [vmem:[%s3 + $0x878] sm:$0xff]
          %v5061 = vld [vmem:[%s3 + $0x880] sm:$0xff]
          %v5062 = vld [vmem:[%s3 + $0x888] sm:$0xff]
          %v5063 = vld [vmem:[%s3 + $0x890] sm:$0xff]
          %v5064 = vld [vmem:[%s3 + $0x898] sm:$0xff]
          %v5065 = vld [vmem:[%s3 + $0x8a0] sm:$0xff]
          %v5066 = vld [vmem:[%s3 + $0x8a8] sm:$0xff]
          %v5067 = vld [vmem:[%s3 + $0x8b0] sm:$0xff]
          %v5068 = vld [vmem:[%s3 + $0x8b8] sm:$0xff]
          %v5069 = vld [vmem:[%s3 + $0x8c0] sm:$0xff]
          %v5070 = vld [vmem:[%s3 + $0x8c8] sm:$0xff]
          %v5071 = vld [vmem:[%s3 + $0x8d0] sm:$0xff]
          %v5072 = vld [vmem:[%s3 + $0x8d8] sm:$0xff]
          %v5073 = vld [vmem:[%s3 + $0x8e0] sm:$0xff]
          %v5074 = vld [vmem:[%s3 + $0x8e8] sm:$0xff]
          %v5075 = vld [vmem:[%s3 + $0x8f0] sm:$0xff]
          %v5076 = vld [vmem:[%s3 + $0x8f8] sm:$0xff]
          %v5077 = vld [vmem:[%s3 + $0x900] sm:$0xff]
          %v5078 = vld [vmem:[%s3 + $0x908] sm:$0xff]
          %v5079 = vld [vmem:[%s3 + $0x910] sm:$0xff]
          %v5080 = vld [vmem:[%s3 + $0x918] sm:$0xff]
          %v5081 = vld [vmem:[%s3 + $0x920] sm:$0xff]
          %v5082 = vld [vmem:[%s3 + $0x928] sm:$0xff]
          %v5083 = vld [vmem:[%s3 + $0x930] sm:$0xff]
          %v5084 = vld [vmem:[%s3 + $0x938] sm:$0xff]
          %v5085 = vld [vmem:[%s3 + $0x940] sm:$0xff]
          %v5086 = vld [vmem:[%s3 + $0x948] sm:$0xff]
          %v5087 = vld [vmem:[%s3 + $0x950] sm:$0xff]
          %v5088 = vld [vmem:[%s3 + $0x958] sm:$0xff]
          %v5089 = vld [vmem:[%s3 + $0x960] sm:$0xff]
          %v5090 = vld [vmem:[%s3 + $0x968] sm:$0xff]
          %v5091 = vld [vmem:[%s3 + $0x970] sm:$0xff]
          %v5092 = vld [vmem:[%s3 + $0x978] sm:$0xff]
          %v5093 = vld [vmem:[%s3 + $0x980] sm:$0xff]
          %v5094 = vld [vmem:[%s3 + $0x988] sm:$0xff]
          %v5095 = vld [vmem:[%s3 + $0x990] sm:$0xff]
          %v5096 = vld [vmem:[%s3 + $0x998] sm:$0xff]
          %v5097 = vld [vmem:[%s3 + $0x9a0] sm:$0xff]
          %v5098 = vld [vmem:[%s3 + $0x9a8] sm:$0xff]
          %v5099 = vld [vmem:[%s3 + $0x9b0] sm:$0xff]
          %v5100 = vld [vmem:[%s3 + $0x9b8] sm:$0xff]
          %v5101 = vld [vmem:[%s3 + $0x9c0] sm:$0xff]
          %v5102 = vld [vmem:[%s3 + $0x9c8] sm:$0xff]
          %v5103 = vld [vmem:[%s3 + $0x9d0] sm:$0xff]
          %v5104 = vld [vmem:[%s3 + $0x9d8] sm:$0xff]
          %v5105 = vld [vmem:[%s3 + $0x9e0] sm:$0xff]
          %v5106 = vld [vmem:[%s3 + $0x9e8] sm:$0xff]
          %v5107 = vld [vmem:[%s3 + $0x9f0] sm:$0xff]
          %v5108 = vld [vmem:[%s3 + $0x9f8] sm:$0xff]
          %v5109 = vpack.c.bf16 %v4811, %v4811
          %v5110 = vpack.c.bf16 %v4812, %v4812
          %v5111 = vpack.c.bf16 %v4813, %v4813
          %v5112 = vpack.c.bf16 %v4814, %v4814
          %v5114 = vcombine.high %v4852, %v4852
          %v5116 = vunpack.c.l.s4 1983009808
          %v5117 = vunpack.c.0.s8 %v5116
          %v5118 = vlaneseq
          %v5119 = vshrl.u32 %v5118, 7
          %v5120 = vsub.s32 %v5117, %v5119
          %v5121 = vrot.slane %v4852, %v5120
          %v5123 = vunpack.c.l.s4 1983009808
          %v5124 = vunpack.c.0.s8 %v5123
          %v5125 = vlaneseq
          %v5126 = vshrl.u32 %v5125, 7
          %v5127 = vsub.s32 %v5124, %v5126
          %v5128 = vrot.slane %v5114, %v5127
          %v5129 = vcombine.high %v5121, %v5121
          %v5130 = vcombine.high %v5128, %v5128
          %v5135 = vpack.c.bf16 %v5121, %v5121
          %v5136 = vpack.c.bf16 %v5129, %v5129
          %v5137 = vpack.c.bf16 %v5128, %v5128
          %v5138 = vpack.c.bf16 %v5130, %v5130
          %v5267 = vunpack.c.l.b16 %v4981
          %v5268 = vunpack.c.h.b16 %v4981
          %v5269 = vunpack.c.l.b16 %v4982
          %v5270 = vunpack.c.h.b16 %v4982
          %v5271 = vunpack.c.l.b16 %v4983
          %v5272 = vunpack.c.h.b16 %v4983
          %v5273 = vunpack.c.l.b16 %v4984
          %v5274 = vunpack.c.h.b16 %v4984
          %v5275 = vunpack.c.l.b16 %v4985
          %v5276 = vunpack.c.h.b16 %v4985
          %v5277 = vunpack.c.l.b16 %v4986
          %v5278 = vunpack.c.h.b16 %v4986
          %v5279 = vunpack.c.l.b16 %v4987
          %v5280 = vunpack.c.h.b16 %v4987
          %v5281 = vunpack.c.l.b16 %v4988
          %v5282 = vunpack.c.h.b16 %v4988
          %v5283 = vunpack.c.l.b16 %v4989
          %v5284 = vunpack.c.h.b16 %v4989
          %v5285 = vunpack.c.l.b16 %v4990
          %v5286 = vunpack.c.h.b16 %v4990
          %v5287 = vunpack.c.l.b16 %v4991
          %v5288 = vunpack.c.h.b16 %v4991
          %v5289 = vunpack.c.l.b16 %v4992
          %v5290 = vunpack.c.h.b16 %v4992
          %v5291 = vunpack.c.l.b16 %v4993
          %v5292 = vunpack.c.h.b16 %v4993
          %v5293 = vunpack.c.l.b16 %v4994
          %v5294 = vunpack.c.h.b16 %v4994
          %v5295 = vunpack.c.l.b16 %v4995
          %v5296 = vunpack.c.h.b16 %v4995
          %v5297 = vunpack.c.l.b16 %v4996
          %v5298 = vunpack.c.h.b16 %v4996
          %v5299 = vunpack.c.l.b16 %v4997
          %v5300 = vunpack.c.h.b16 %v4997
          %v5301 = vunpack.c.l.b16 %v4998
          %v5302 = vunpack.c.h.b16 %v4998
          %v5303 = vunpack.c.l.b16 %v4999
          %v5304 = vunpack.c.h.b16 %v4999
          %v5305 = vunpack.c.l.b16 %v5000
          %v5306 = vunpack.c.h.b16 %v5000
          %v5307 = vunpack.c.l.b16 %v5001
          %v5308 = vunpack.c.h.b16 %v5001
          %v5309 = vunpack.c.l.b16 %v5002
          %v5310 = vunpack.c.h.b16 %v5002
          %v5311 = vunpack.c.l.b16 %v5003
          %v5312 = vunpack.c.h.b16 %v5003
          %v5313 = vunpack.c.l.b16 %v5004
          %v5314 = vunpack.c.h.b16 %v5004
          %v5315 = vunpack.c.l.b16 %v5005
          %v5316 = vunpack.c.h.b16 %v5005
          %v5317 = vunpack.c.l.b16 %v5006
          %v5318 = vunpack.c.h.b16 %v5006
          %v5319 = vunpack.c.l.b16 %v5007
          %v5320 = vunpack.c.h.b16 %v5007
          %v5321 = vunpack.c.l.b16 %v5008
          %v5322 = vunpack.c.h.b16 %v5008
          %v5323 = vunpack.c.l.b16 %v5009
          %v5324 = vunpack.c.h.b16 %v5009
          %v5325 = vunpack.c.l.b16 %v5010
          %v5326 = vunpack.c.h.b16 %v5010
          %v5327 = vunpack.c.l.b16 %v5011
          %v5328 = vunpack.c.h.b16 %v5011
          %v5329 = vunpack.c.l.b16 %v5012
          %v5330 = vunpack.c.h.b16 %v5012
          %v5331 = vunpack.c.l.b16 %v5013
          %v5332 = vunpack.c.h.b16 %v5013
          %v5333 = vunpack.c.l.b16 %v5014
          %v5334 = vunpack.c.h.b16 %v5014
          %v5335 = vunpack.c.l.b16 %v5015
          %v5336 = vunpack.c.h.b16 %v5015
          %v5337 = vunpack.c.l.b16 %v5016
          %v5338 = vunpack.c.h.b16 %v5016
          %v5339 = vunpack.c.l.b16 %v5017
          %v5340 = vunpack.c.h.b16 %v5017
          %v5341 = vunpack.c.l.b16 %v5018
          %v5342 = vunpack.c.h.b16 %v5018
          %v5343 = vunpack.c.l.b16 %v5019
          %v5344 = vunpack.c.h.b16 %v5019
          %v5345 = vunpack.c.l.b16 %v5020
          %v5346 = vunpack.c.h.b16 %v5020
          %v5347 = vunpack.c.l.b16 %v5021
          %v5348 = vunpack.c.h.b16 %v5021
          %v5349 = vunpack.c.l.b16 %v5022
          %v5350 = vunpack.c.h.b16 %v5022
          %v5351 = vunpack.c.l.b16 %v5023
          %v5352 = vunpack.c.h.b16 %v5023
          %v5353 = vunpack.c.l.b16 %v5024
          %v5354 = vunpack.c.h.b16 %v5024
          %v5355 = vunpack.c.l.b16 %v5025
          %v5356 = vunpack.c.h.b16 %v5025
          %v5357 = vunpack.c.l.b16 %v5026
          %v5358 = vunpack.c.h.b16 %v5026
          %v5359 = vunpack.c.l.b16 %v5027
          %v5360 = vunpack.c.h.b16 %v5027
          %v5361 = vunpack.c.l.b16 %v5028
          %v5362 = vunpack.c.h.b16 %v5028
          %v5363 = vunpack.c.l.b16 %v5029
          %v5364 = vunpack.c.h.b16 %v5029
          %v5365 = vunpack.c.l.b16 %v5030
          %v5366 = vunpack.c.h.b16 %v5030
          %v5367 = vunpack.c.l.b16 %v5031
          %v5368 = vunpack.c.h.b16 %v5031
          %v5369 = vunpack.c.l.b16 %v5032
          %v5370 = vunpack.c.h.b16 %v5032
          %v5371 = vunpack.c.l.b16 %v5033
          %v5372 = vunpack.c.h.b16 %v5033
          %v5373 = vunpack.c.l.b16 %v5034
          %v5374 = vunpack.c.h.b16 %v5034
          %v5375 = vunpack.c.l.b16 %v5035
          %v5376 = vunpack.c.h.b16 %v5035
          %v5377 = vunpack.c.l.b16 %v5036
          %v5378 = vunpack.c.h.b16 %v5036
          %v5379 = vunpack.c.l.b16 %v5037
          %v5380 = vunpack.c.h.b16 %v5037
          %v5381 = vunpack.c.l.b16 %v5038
          %v5382 = vunpack.c.h.b16 %v5038
          %v5383 = vunpack.c.l.b16 %v5039
          %v5384 = vunpack.c.h.b16 %v5039
          %v5385 = vunpack.c.l.b16 %v5040
          %v5386 = vunpack.c.h.b16 %v5040
          %v5387 = vunpack.c.l.b16 %v5041
          %v5388 = vunpack.c.h.b16 %v5041
          %v5389 = vunpack.c.l.b16 %v5042
          %v5390 = vunpack.c.h.b16 %v5042
          %v5391 = vunpack.c.l.b16 %v5043
          %v5392 = vunpack.c.h.b16 %v5043
          %v5393 = vunpack.c.l.b16 %v5044
          %v5394 = vunpack.c.h.b16 %v5044
          %v5395 = vunpack.c.l.b16 %v5045
          %v5396 = vunpack.c.h.b16 %v5045
          %v5397 = vunpack.c.l.b16 %v5046
          %v5398 = vunpack.c.h.b16 %v5046
          %v5399 = vunpack.c.l.b16 %v5047
          %v5400 = vunpack.c.h.b16 %v5047
          %v5401 = vunpack.c.l.b16 %v5048
          %v5402 = vunpack.c.h.b16 %v5048
          %v5403 = vunpack.c.l.b16 %v5049
          %v5404 = vunpack.c.h.b16 %v5049
          %v5405 = vunpack.c.l.b16 %v5050
          %v5406 = vunpack.c.h.b16 %v5050
          %v5407 = vunpack.c.l.b16 %v5051
          %v5408 = vunpack.c.h.b16 %v5051
          %v5409 = vunpack.c.l.b16 %v5052
          %v5410 = vunpack.c.h.b16 %v5052
          %v5411 = vunpack.c.l.b16 %v5053
          %v5412 = vunpack.c.h.b16 %v5053
          %v5413 = vunpack.c.l.b16 %v5054
          %v5414 = vunpack.c.h.b16 %v5054
          %v5415 = vunpack.c.l.b16 %v5055
          %v5416 = vunpack.c.h.b16 %v5055
          %v5417 = vunpack.c.l.b16 %v5056
          %v5418 = vunpack.c.h.b16 %v5056
          %v5419 = vunpack.c.l.b16 %v5057
          %v5420 = vunpack.c.h.b16 %v5057
          %v5421 = vunpack.c.l.b16 %v5058
          %v5422 = vunpack.c.h.b16 %v5058
          %v5423 = vunpack.c.l.b16 %v5059
          %v5424 = vunpack.c.h.b16 %v5059
          %v5425 = vunpack.c.l.b16 %v5060
          %v5426 = vunpack.c.h.b16 %v5060
          %v5427 = vunpack.c.l.b16 %v5061
          %v5428 = vunpack.c.h.b16 %v5061
          %v5429 = vunpack.c.l.b16 %v5062
          %v5430 = vunpack.c.h.b16 %v5062
          %v5431 = vunpack.c.l.b16 %v5063
          %v5432 = vunpack.c.h.b16 %v5063
          %v5433 = vunpack.c.l.b16 %v5064
          %v5434 = vunpack.c.h.b16 %v5064
          %v5435 = vunpack.c.l.b16 %v5065
          %v5436 = vunpack.c.h.b16 %v5065
          %v5437 = vunpack.c.l.b16 %v5066
          %v5438 = vunpack.c.h.b16 %v5066
          %v5439 = vunpack.c.l.b16 %v5067
          %v5440 = vunpack.c.h.b16 %v5067
          %v5441 = vunpack.c.l.b16 %v5068
          %v5442 = vunpack.c.h.b16 %v5068
          %v5443 = vunpack.c.l.b16 %v5069
          %v5444 = vunpack.c.h.b16 %v5069
          %v5445 = vunpack.c.l.b16 %v5070
          %v5446 = vunpack.c.h.b16 %v5070
          %v5447 = vunpack.c.l.b16 %v5071
          %v5448 = vunpack.c.h.b16 %v5071
          %v5449 = vunpack.c.l.b16 %v5072
          %v5450 = vunpack.c.h.b16 %v5072
          %v5451 = vunpack.c.l.b16 %v5073
          %v5452 = vunpack.c.h.b16 %v5073
          %v5453 = vunpack.c.l.b16 %v5074
          %v5454 = vunpack.c.h.b16 %v5074
          %v5455 = vunpack.c.l.b16 %v5075
          %v5456 = vunpack.c.h.b16 %v5075
          %v5457 = vunpack.c.l.b16 %v5076
          %v5458 = vunpack.c.h.b16 %v5076
          %v5459 = vunpack.c.l.b16 %v5077
          %v5460 = vunpack.c.h.b16 %v5077
          %v5461 = vunpack.c.l.b16 %v5078
          %v5462 = vunpack.c.h.b16 %v5078
          %v5463 = vunpack.c.l.b16 %v5079
          %v5464 = vunpack.c.h.b16 %v5079
          %v5465 = vunpack.c.l.b16 %v5080
          %v5466 = vunpack.c.h.b16 %v5080
          %v5467 = vunpack.c.l.b16 %v5081
          %v5468 = vunpack.c.h.b16 %v5081
          %v5469 = vunpack.c.l.b16 %v5082
          %v5470 = vunpack.c.h.b16 %v5082
          %v5471 = vunpack.c.l.b16 %v5083
          %v5472 = vunpack.c.h.b16 %v5083
          %v5473 = vunpack.c.l.b16 %v5084
          %v5474 = vunpack.c.h.b16 %v5084
          %v5475 = vunpack.c.l.b16 %v5085
          %v5476 = vunpack.c.h.b16 %v5085
          %v5477 = vunpack.c.l.b16 %v5086
          %v5478 = vunpack.c.h.b16 %v5086
          %v5479 = vunpack.c.l.b16 %v5087
          %v5480 = vunpack.c.h.b16 %v5087
          %v5481 = vunpack.c.l.b16 %v5088
          %v5482 = vunpack.c.h.b16 %v5088
          %v5483 = vunpack.c.l.b16 %v5089
          %v5484 = vunpack.c.h.b16 %v5089
          %v5485 = vunpack.c.l.b16 %v5090
          %v5486 = vunpack.c.h.b16 %v5090
          %v5487 = vunpack.c.l.b16 %v5091
          %v5488 = vunpack.c.h.b16 %v5091
          %v5489 = vunpack.c.l.b16 %v5092
          %v5490 = vunpack.c.h.b16 %v5092
          %v5491 = vunpack.c.l.b16 %v5093
          %v5492 = vunpack.c.h.b16 %v5093
          %v5493 = vunpack.c.l.b16 %v5094
          %v5494 = vunpack.c.h.b16 %v5094
          %v5495 = vunpack.c.l.b16 %v5095
          %v5496 = vunpack.c.h.b16 %v5095
          %v5497 = vunpack.c.l.b16 %v5096
          %v5498 = vunpack.c.h.b16 %v5096
          %v5499 = vunpack.c.l.b16 %v5097
          %v5500 = vunpack.c.h.b16 %v5097
          %v5501 = vunpack.c.l.b16 %v5098
          %v5502 = vunpack.c.h.b16 %v5098
          %v5503 = vunpack.c.l.b16 %v5099
          %v5504 = vunpack.c.h.b16 %v5099
          %v5505 = vunpack.c.l.b16 %v5100
          %v5506 = vunpack.c.h.b16 %v5100
          %v5507 = vunpack.c.l.b16 %v5101
          %v5508 = vunpack.c.h.b16 %v5101
          %v5509 = vunpack.c.l.b16 %v5102
          %v5510 = vunpack.c.h.b16 %v5102
          %v5511 = vunpack.c.l.b16 %v5103
          %v5512 = vunpack.c.h.b16 %v5103
          %v5513 = vunpack.c.l.b16 %v5104
          %v5514 = vunpack.c.h.b16 %v5104
          %v5515 = vunpack.c.l.b16 %v5105
          %v5516 = vunpack.c.h.b16 %v5105
          %v5517 = vunpack.c.l.b16 %v5106
          %v5518 = vunpack.c.h.b16 %v5106
          %v5519 = vunpack.c.l.b16 %v5107
          %v5520 = vunpack.c.h.b16 %v5107
          %v5521 = vunpack.c.l.b16 %v5108
          %v5522 = vunpack.c.h.b16 %v5108
          %v5523 = vpack.c.b16 %v5271, %v5267
          %v5524 = vpack.c.b16 %v5272, %v5268
          %v5525 = vpack.c.b16 %v5273, %v5269
          %v5526 = vpack.c.b16 %v5274, %v5270
          %v5527 = vpack.c.b16 %v5279, %v5275
          %v5528 = vpack.c.b16 %v5280, %v5276
          %v5529 = vpack.c.b16 %v5281, %v5277
          %v5530 = vpack.c.b16 %v5282, %v5278
          %v5531 = vpack.c.b16 %v5287, %v5283
          %v5532 = vpack.c.b16 %v5288, %v5284
          %v5533 = vpack.c.b16 %v5289, %v5285
          %v5534 = vpack.c.b16 %v5290, %v5286
          %v5535 = vpack.c.b16 %v5295, %v5291
          %v5536 = vpack.c.b16 %v5296, %v5292
          %v5537 = vpack.c.b16 %v5297, %v5293
          %v5538 = vpack.c.b16 %v5298, %v5294
          %v5539 = vpack.c.b16 %v5303, %v5299
          %v5540 = vpack.c.b16 %v5304, %v5300
          %v5541 = vpack.c.b16 %v5305, %v5301
          %v5542 = vpack.c.b16 %v5306, %v5302
          %v5543 = vpack.c.b16 %v5311, %v5307
          %v5544 = vpack.c.b16 %v5312, %v5308
          %v5545 = vpack.c.b16 %v5313, %v5309
          %v5546 = vpack.c.b16 %v5314, %v5310
          %v5547 = vpack.c.b16 %v5319, %v5315
          %v5548 = vpack.c.b16 %v5320, %v5316
          %v5549 = vpack.c.b16 %v5321, %v5317
          %v5550 = vpack.c.b16 %v5322, %v5318
          %v5551 = vpack.c.b16 %v5327, %v5323
          %v5552 = vpack.c.b16 %v5328, %v5324
          %v5553 = vpack.c.b16 %v5329, %v5325
          %v5554 = vpack.c.b16 %v5330, %v5326
          %v5555 = vpack.c.b16 %v5335, %v5331
          %v5556 = vpack.c.b16 %v5336, %v5332
          %v5557 = vpack.c.b16 %v5337, %v5333
          %v5558 = vpack.c.b16 %v5338, %v5334
          %v5559 = vpack.c.b16 %v5343, %v5339
          %v5560 = vpack.c.b16 %v5344, %v5340
          %v5561 = vpack.c.b16 %v5345, %v5341
          %v5562 = vpack.c.b16 %v5346, %v5342
          %v5563 = vpack.c.b16 %v5351, %v5347
          %v5564 = vpack.c.b16 %v5352, %v5348
          %v5565 = vpack.c.b16 %v5353, %v5349
          %v5566 = vpack.c.b16 %v5354, %v5350
          %v5567 = vpack.c.b16 %v5359, %v5355
          %v5568 = vpack.c.b16 %v5360, %v5356
          %v5569 = vpack.c.b16 %v5361, %v5357
          %v5570 = vpack.c.b16 %v5362, %v5358
          %v5571 = vpack.c.b16 %v5367, %v5363
          %v5572 = vpack.c.b16 %v5368, %v5364
          %v5573 = vpack.c.b16 %v5369, %v5365
          %v5574 = vpack.c.b16 %v5370, %v5366
          %v5575 = vpack.c.b16 %v5375, %v5371
          %v5576 = vpack.c.b16 %v5376, %v5372
          %v5577 = vpack.c.b16 %v5377, %v5373
          %v5578 = vpack.c.b16 %v5378, %v5374
          %v5579 = vpack.c.b16 %v5383, %v5379
          %v5580 = vpack.c.b16 %v5384, %v5380
          %v5581 = vpack.c.b16 %v5385, %v5381
          %v5582 = vpack.c.b16 %v5386, %v5382
          %v5583 = vpack.c.b16 %v5391, %v5387
          %v5584 = vpack.c.b16 %v5392, %v5388
          %v5585 = vpack.c.b16 %v5393, %v5389
          %v5586 = vpack.c.b16 %v5394, %v5390
          %v5587 = vpack.c.b16 %v5399, %v5395
          %v5588 = vpack.c.b16 %v5400, %v5396
          %v5589 = vpack.c.b16 %v5401, %v5397
          %v5590 = vpack.c.b16 %v5402, %v5398
          %v5591 = vpack.c.b16 %v5407, %v5403
          %v5592 = vpack.c.b16 %v5408, %v5404
          %v5593 = vpack.c.b16 %v5409, %v5405
          %v5594 = vpack.c.b16 %v5410, %v5406
          %v5595 = vpack.c.b16 %v5415, %v5411
          %v5596 = vpack.c.b16 %v5416, %v5412
          %v5597 = vpack.c.b16 %v5417, %v5413
          %v5598 = vpack.c.b16 %v5418, %v5414
          %v5599 = vpack.c.b16 %v5423, %v5419
          %v5600 = vpack.c.b16 %v5424, %v5420
          %v5601 = vpack.c.b16 %v5425, %v5421
          %v5602 = vpack.c.b16 %v5426, %v5422
          %v5603 = vpack.c.b16 %v5431, %v5427
          %v5604 = vpack.c.b16 %v5432, %v5428
          %v5605 = vpack.c.b16 %v5433, %v5429
          %v5606 = vpack.c.b16 %v5434, %v5430
          %v5607 = vpack.c.b16 %v5439, %v5435
          %v5608 = vpack.c.b16 %v5440, %v5436
          %v5609 = vpack.c.b16 %v5441, %v5437
          %v5610 = vpack.c.b16 %v5442, %v5438
          %v5611 = vpack.c.b16 %v5447, %v5443
          %v5612 = vpack.c.b16 %v5448, %v5444
          %v5613 = vpack.c.b16 %v5449, %v5445
          %v5614 = vpack.c.b16 %v5450, %v5446
          %v5615 = vpack.c.b16 %v5455, %v5451
          %v5616 = vpack.c.b16 %v5456, %v5452
          %v5617 = vpack.c.b16 %v5457, %v5453
          %v5618 = vpack.c.b16 %v5458, %v5454
          %v5619 = vpack.c.b16 %v5463, %v5459
          %v5620 = vpack.c.b16 %v5464, %v5460
          %v5621 = vpack.c.b16 %v5465, %v5461
          %v5622 = vpack.c.b16 %v5466, %v5462
          %v5623 = vpack.c.b16 %v5471, %v5467
          %v5624 = vpack.c.b16 %v5472, %v5468
          %v5625 = vpack.c.b16 %v5473, %v5469
          %v5626 = vpack.c.b16 %v5474, %v5470
          %v5627 = vpack.c.b16 %v5479, %v5475
          %v5628 = vpack.c.b16 %v5480, %v5476
          %v5629 = vpack.c.b16 %v5481, %v5477
          %v5630 = vpack.c.b16 %v5482, %v5478
          %v5631 = vpack.c.b16 %v5487, %v5483
          %v5632 = vpack.c.b16 %v5488, %v5484
          %v5633 = vpack.c.b16 %v5489, %v5485
          %v5634 = vpack.c.b16 %v5490, %v5486
          %v5635 = vpack.c.b16 %v5495, %v5491
          %v5636 = vpack.c.b16 %v5496, %v5492
          %v5637 = vpack.c.b16 %v5497, %v5493
          %v5638 = vpack.c.b16 %v5498, %v5494
          %v5639 = vpack.c.b16 %v5503, %v5499
          %v5640 = vpack.c.b16 %v5504, %v5500
          %v5641 = vpack.c.b16 %v5505, %v5501
          %v5642 = vpack.c.b16 %v5506, %v5502
          %v5643 = vpack.c.b16 %v5511, %v5507
          %v5644 = vpack.c.b16 %v5512, %v5508
          %v5645 = vpack.c.b16 %v5513, %v5509
          %v5646 = vpack.c.b16 %v5514, %v5510
          %v5647 = vpack.c.b16 %v5519, %v5515
          %v5648 = vpack.c.b16 %v5520, %v5516
          %v5649 = vpack.c.b16 %v5521, %v5517
          %v5650 = vpack.c.b16 %v5522, %v5518
          %5779 = vmatprep.subr.bf16.mxu0 %v5524
          %5780 = vmatpush1.bf16.msra.mxu0 %v5523
          %5781 = vmatprep.subr.bf16.mxu0 %v5528
          %5782 = vmatpush1.bf16.msra.mxu0 %v5527
          %5783 = vmatprep.subr.bf16.mxu0 %v5532
          %5784 = vmatpush1.bf16.msra.mxu0 %v5531
          %5785 = vmatprep.subr.bf16.mxu0 %v5536
          %5786 = vmatpush1.bf16.msra.mxu0 %v5535
          %5787 = vmatprep.subr.bf16.mxu0 %v5540
          %5788 = vmatpush1.bf16.msra.mxu0 %v5539
          %5789 = vmatprep.subr.bf16.mxu0 %v5544
          %5790 = vmatpush1.bf16.msra.mxu0 %v5543
          %5791 = vmatprep.subr.bf16.mxu0 %v5548
          %5792 = vmatpush1.bf16.msra.mxu0 %v5547
          %5793 = vmatprep.subr.bf16.mxu0 %v5552
          %5794 = vmatpush1.bf16.msra.mxu0 %v5551
          %5795 = vmatprep.subr.bf16.mxu0 %v5556
          %5796 = vmatpush1.bf16.msra.mxu0 %v5555
          %5797 = vmatprep.subr.bf16.mxu0 %v5560
          %5798 = vmatpush1.bf16.msra.mxu0 %v5559
          %5799 = vmatprep.subr.bf16.mxu0 %v5564
          %5800 = vmatpush1.bf16.msra.mxu0 %v5563
          %5801 = vmatprep.subr.bf16.mxu0 %v5568
          %5802 = vmatpush1.bf16.msra.mxu0 %v5567
          %5803 = vmatprep.subr.bf16.mxu0 %v5572
          %5804 = vmatpush1.bf16.msra.mxu0 %v5571
          %5805 = vmatprep.subr.bf16.mxu0 %v5576
          %5806 = vmatpush1.bf16.msra.mxu0 %v5575
          %5807 = vmatprep.subr.bf16.mxu0 %v5580
          %5808 = vmatpush1.bf16.msra.mxu0 %v5579
          %5809 = vmatprep.subr.bf16.mxu0 %v5584
          %5810 = vmatpush1.bf16.msra.mxu0 %v5583
          %5811 = vmatprep.mubr.bf16.mxu0 %v5136
          %5812 = vmatmul.mubr.bf16.gmra.mrb[0].mxu0 %v5135
          %v5813 = vpop.f32.mrb[0].mxu0
          %v5814 = vadd.f32 0.0, %v5813
          %v5815 = vpop.f32.mrb[0].mxu0
          %v5816 = vadd.f32 0.0, %v5815
          %v5817 = vpop.f32.mrb[0].mxu0
          %v5818 = vpop.f32.mrb[0].mxu0
          %5819 = vdwg.mxu0
          %5820 = vmatprep.subr.bf16.mxu0 %v5588
          %5821 = vmatpush1.bf16.msra.mxu0 %v5587
          %5822 = vmatprep.subr.bf16.mxu0 %v5592
          %5823 = vmatpush1.bf16.msra.mxu0 %v5591
          %5824 = vmatprep.subr.bf16.mxu0 %v5596
          %5825 = vmatpush1.bf16.msra.mxu0 %v5595
          %5826 = vmatprep.subr.bf16.mxu0 %v5600
          %5827 = vmatpush1.bf16.msra.mxu0 %v5599
          %5828 = vmatprep.subr.bf16.mxu0 %v5604
          %5829 = vmatpush1.bf16.msra.mxu0 %v5603
          %5830 = vmatprep.subr.bf16.mxu0 %v5608
          %5831 = vmatpush1.bf16.msra.mxu0 %v5607
          %5832 = vmatprep.subr.bf16.mxu0 %v5612
          %5833 = vmatpush1.bf16.msra.mxu0 %v5611
          %5834 = vmatprep.subr.bf16.mxu0 %v5616
          %5835 = vmatpush1.bf16.msra.mxu0 %v5615
          %5836 = vmatprep.subr.bf16.mxu0 %v5620
          %5837 = vmatpush1.bf16.msra.mxu0 %v5619
          %5838 = vmatprep.subr.bf16.mxu0 %v5624
          %5839 = vmatpush1.bf16.msra.mxu0 %v5623
          %5840 = vmatprep.subr.bf16.mxu0 %v5628
          %5841 = vmatpush1.bf16.msra.mxu0 %v5627
          %5842 = vmatprep.subr.bf16.mxu0 %v5632
          %5843 = vmatpush1.bf16.msra.mxu0 %v5631
          %5844 = vmatprep.subr.bf16.mxu0 %v5636
          %5845 = vmatpush1.bf16.msra.mxu0 %v5635
          %5846 = vmatprep.subr.bf16.mxu0 %v5640
          %5847 = vmatpush1.bf16.msra.mxu0 %v5639
          %5848 = vmatprep.subr.bf16.mxu0 %v5644
          %5849 = vmatpush1.bf16.msra.mxu0 %v5643
          %5850 = vmatprep.subr.bf16.mxu0 %v5648
          %5851 = vmatpush1.bf16.msra.mxu0 %v5647
          %5852 = vmatprep.mubr.bf16.mxu0 %v5138
          %5853 = vmatmul.mubr.bf16.gmra.mrb[0].mxu0 %v5137
          %v5854 = vpop.f32.mrb[0].mxu0
          %v5855 = vadd.f32 %v5814, %v5854
          %v5856 = vpop.f32.mrb[0].mxu0
          %v5857 = vadd.f32 %v5816, %v5856
          %v5858 = vpop.f32.mrb[0].mxu0
          %v5859 = vpop.f32.mrb[0].mxu0
          %5860 = vdwg.mxu0
          %5861 = vmatprep.subr.bf16.mxu0 %v5526
          %5862 = vmatpush1.bf16.msra.mxu0 %v5525
          %5863 = vmatprep.subr.bf16.mxu0 %v5530
          %5864 = vmatpush1.bf16.msra.mxu0 %v5529
          %5865 = vmatprep.subr.bf16.mxu0 %v5534
          %5866 = vmatpush1.bf16.msra.mxu0 %v5533
          %5867 = vmatprep.subr.bf16.mxu0 %v5538
          %5868 = vmatpush1.bf16.msra.mxu0 %v5537
          %5869 = vmatprep.subr.bf16.mxu0 %v5542
          %5870 = vmatpush1.bf16.msra.mxu0 %v5541
          %5871 = vmatprep.subr.bf16.mxu0 %v5546
          %5872 = vmatpush1.bf16.msra.mxu0 %v5545
          %5873 = vmatprep.subr.bf16.mxu0 %v5550
          %5874 = vmatpush1.bf16.msra.mxu0 %v5549
          %5875 = vmatprep.subr.bf16.mxu0 %v5554
          %5876 = vmatpush1.bf16.msra.mxu0 %v5553
          %5877 = vmatprep.subr.bf16.mxu0 %v5558
          %5878 = vmatpush1.bf16.msra.mxu0 %v5557
          %5879 = vmatprep.subr.bf16.mxu0 %v5562
          %5880 = vmatpush1.bf16.msra.mxu0 %v5561
          %5881 = vmatprep.subr.bf16.mxu0 %v5566
          %5882 = vmatpush1.bf16.msra.mxu0 %v5565
          %5883 = vmatprep.subr.bf16.mxu0 %v5570
          %5884 = vmatpush1.bf16.msra.mxu0 %v5569
          %5885 = vmatprep.subr.bf16.mxu0 %v5574
          %5886 = vmatpush1.bf16.msra.mxu0 %v5573
          %5887 = vmatprep.subr.bf16.mxu0 %v5578
          %5888 = vmatpush1.bf16.msra.mxu0 %v5577
          %5889 = vmatprep.subr.bf16.mxu0 %v5582
          %5890 = vmatpush1.bf16.msra.mxu0 %v5581
          %5891 = vmatprep.subr.bf16.mxu0 %v5586
          %5892 = vmatpush1.bf16.msra.mxu0 %v5585
          %5893 = vmatprep.mubr.bf16.mxu0 %v5136
          %5894 = vmatmul.mubr.bf16.gmra.mrb[0].mxu0 %v5135
          %v5895 = vpop.f32.mrb[0].mxu0
          %v5896 = vadd.f32 0.0, %v5895
          %v5897 = vpop.f32.mrb[0].mxu0
          %v5898 = vadd.f32 0.0, %v5897
          %v5899 = vpop.f32.mrb[0].mxu0
          %v5900 = vpop.f32.mrb[0].mxu0
          %5901 = vdwg.mxu0
          %5902 = vmatprep.subr.bf16.mxu0 %v5590
          %5903 = vmatpush1.bf16.msra.mxu0 %v5589
          %5904 = vmatprep.subr.bf16.mxu0 %v5594
          %5905 = vmatpush1.bf16.msra.mxu0 %v5593
          %5906 = vmatprep.subr.bf16.mxu0 %v5598
          %5907 = vmatpush1.bf16.msra.mxu0 %v5597
          %5908 = vmatprep.subr.bf16.mxu0 %v5602
          %5909 = vmatpush1.bf16.msra.mxu0 %v5601
          %5910 = vmatprep.subr.bf16.mxu0 %v5606
          %5911 = vmatpush1.bf16.msra.mxu0 %v5605
          %5912 = vmatprep.subr.bf16.mxu0 %v5610
          %5913 = vmatpush1.bf16.msra.mxu0 %v5609
          %5914 = vmatprep.subr.bf16.mxu0 %v5614
          %5915 = vmatpush1.bf16.msra.mxu0 %v5613
          %5916 = vmatprep.subr.bf16.mxu0 %v5618
          %5917 = vmatpush1.bf16.msra.mxu0 %v5617
          %5918 = vmatprep.subr.bf16.mxu0 %v5622
          %5919 = vmatpush1.bf16.msra.mxu0 %v5621
          %5920 = vmatprep.subr.bf16.mxu0 %v5626
          %5921 = vmatpush1.bf16.msra.mxu0 %v5625
          %5922 = vmatprep.subr.bf16.mxu0 %v5630
          %5923 = vmatpush1.bf16.msra.mxu0 %v5629
          %5924 = vmatprep.subr.bf16.mxu0 %v5634
          %5925 = vmatpush1.bf16.msra.mxu0 %v5633
          %5926 = vmatprep.subr.bf16.mxu0 %v5638
          %5927 = vmatpush1.bf16.msra.mxu0 %v5637
          %5928 = vmatprep.subr.bf16.mxu0 %v5642
          %5929 = vmatpush1.bf16.msra.mxu0 %v5641
          %5930 = vmatprep.subr.bf16.mxu0 %v5646
          %5931 = vmatpush1.bf16.msra.mxu0 %v5645
          %5932 = vmatprep.subr.bf16.mxu0 %v5650
          %5933 = vmatpush1.bf16.msra.mxu0 %v5649
          %5934 = vmatprep.mubr.bf16.mxu0 %v5138
          %5935 = vmatmul.mubr.bf16.gmra.mrb[0].mxu0 %v5137
          %v5936 = vpop.f32.mrb[0].mxu0
          %v5937 = vadd.f32 %v5896, %v5936
          %v5938 = vpop.f32.mrb[0].mxu0
          %v5939 = vadd.f32 %v5898, %v5938
          %v5940 = vpop.f32.mrb[0].mxu0
          %v5941 = vpop.f32.mrb[0].mxu0
          %5942 = vdwg.mxu0
          %v6071 = vunpack.c.l.b16 %v4853
          %v6072 = vunpack.c.h.b16 %v4853
          %v6073 = vunpack.c.l.b16 %v4854
          %v6074 = vunpack.c.h.b16 %v4854
          %v6075 = vunpack.c.l.b16 %v4855
          %v6076 = vunpack.c.h.b16 %v4855
          %v6077 = vunpack.c.l.b16 %v4856
          %v6078 = vunpack.c.h.b16 %v4856
          %v6079 = vunpack.c.l.b16 %v4857
          %v6080 = vunpack.c.h.b16 %v4857
          %v6081 = vunpack.c.l.b16 %v4858
          %v6082 = vunpack.c.h.b16 %v4858
          %v6083 = vunpack.c.l.b16 %v4859
          %v6084 = vunpack.c.h.b16 %v4859
          %v6085 = vunpack.c.l.b16 %v4860
          %v6086 = vunpack.c.h.b16 %v4860
          %v6087 = vunpack.c.l.b16 %v4861
          %v6088 = vunpack.c.h.b16 %v4861
          %v6089 = vunpack.c.l.b16 %v4862
          %v6090 = vunpack.c.h.b16 %v4862
          %v6091 = vunpack.c.l.b16 %v4863
          %v6092 = vunpack.c.h.b16 %v4863
          %v6093 = vunpack.c.l.b16 %v4864
          %v6094 = vunpack.c.h.b16 %v4864
          %v6095 = vunpack.c.l.b16 %v4865
          %v6096 = vunpack.c.h.b16 %v4865
          %v6097 = vunpack.c.l.b16 %v4866
          %v6098 = vunpack.c.h.b16 %v4866
          %v6099 = vunpack.c.l.b16 %v4867
          %v6100 = vunpack.c.h.b16 %v4867
          %v6101 = vunpack.c.l.b16 %v4868
          %v6102 = vunpack.c.h.b16 %v4868
          %v6103 = vunpack.c.l.b16 %v4869
          %v6104 = vunpack.c.h.b16 %v4869
          %v6105 = vunpack.c.l.b16 %v4870
          %v6106 = vunpack.c.h.b16 %v4870
          %v6107 = vunpack.c.l.b16 %v4871
          %v6108 = vunpack.c.h.b16 %v4871
          %v6109 = vunpack.c.l.b16 %v4872
          %v6110 = vunpack.c.h.b16 %v4872
          %v6111 = vunpack.c.l.b16 %v4873
          %v6112 = vunpack.c.h.b16 %v4873
          %v6113 = vunpack.c.l.b16 %v4874
          %v6114 = vunpack.c.h.b16 %v4874
          %v6115 = vunpack.c.l.b16 %v4875
          %v6116 = vunpack.c.h.b16 %v4875
          %v6117 = vunpack.c.l.b16 %v4876
          %v6118 = vunpack.c.h.b16 %v4876
          %v6119 = vunpack.c.l.b16 %v4877
          %v6120 = vunpack.c.h.b16 %v4877
          %v6121 = vunpack.c.l.b16 %v4878
          %v6122 = vunpack.c.h.b16 %v4878
          %v6123 = vunpack.c.l.b16 %v4879
          %v6124 = vunpack.c.h.b16 %v4879
          %v6125 = vunpack.c.l.b16 %v4880
          %v6126 = vunpack.c.h.b16 %v4880
          %v6127 = vunpack.c.l.b16 %v4881
          %v6128 = vunpack.c.h.b16 %v4881
          %v6129 = vunpack.c.l.b16 %v4882
          %v6130 = vunpack.c.h.b16 %v4882
          %v6131 = vunpack.c.l.b16 %v4883
          %v6132 = vunpack.c.h.b16 %v4883
          %v6133 = vunpack.c.l.b16 %v4884
          %v6134 = vunpack.c.h.b16 %v4884
          %v6135 = vunpack.c.l.b16 %v4885
          %v6136 = vunpack.c.h.b16 %v4885
          %v6137 = vunpack.c.l.b16 %v4886
          %v6138 = vunpack.c.h.b16 %v4886
          %v6139 = vunpack.c.l.b16 %v4887
          %v6140 = vunpack.c.h.b16 %v4887
          %v6141 = vunpack.c.l.b16 %v4888
          %v6142 = vunpack.c.h.b16 %v4888
          %v6143 = vunpack.c.l.b16 %v4889
          %v6144 = vunpack.c.h.b16 %v4889
          %v6145 = vunpack.c.l.b16 %v4890
          %v6146 = vunpack.c.h.b16 %v4890
          %v6147 = vunpack.c.l.b16 %v4891
          %v6148 = vunpack.c.h.b16 %v4891
          %v6149 = vunpack.c.l.b16 %v4892
          %v6150 = vunpack.c.h.b16 %v4892
          %v6151 = vunpack.c.l.b16 %v4893
          %v6152 = vunpack.c.h.b16 %v4893
          %v6153 = vunpack.c.l.b16 %v4894
          %v6154 = vunpack.c.h.b16 %v4894
          %v6155 = vunpack.c.l.b16 %v4895
          %v6156 = vunpack.c.h.b16 %v4895
          %v6157 = vunpack.c.l.b16 %v4896
          %v6158 = vunpack.c.h.b16 %v4896
          %v6159 = vunpack.c.l.b16 %v4897
          %v6160 = vunpack.c.h.b16 %v4897
          %v6161 = vunpack.c.l.b16 %v4898
          %v6162 = vunpack.c.h.b16 %v4898
          %v6163 = vunpack.c.l.b16 %v4899
          %v6164 = vunpack.c.h.b16 %v4899
          %v6165 = vunpack.c.l.b16 %v4900
          %v6166 = vunpack.c.h.b16 %v4900
          %v6167 = vunpack.c.l.b16 %v4901
          %v6168 = vunpack.c.h.b16 %v4901
          %v6169 = vunpack.c.l.b16 %v4902
          %v6170 = vunpack.c.h.b16 %v4902
          %v6171 = vunpack.c.l.b16 %v4903
          %v6172 = vunpack.c.h.b16 %v4903
          %v6173 = vunpack.c.l.b16 %v4904
          %v6174 = vunpack.c.h.b16 %v4904
          %v6175 = vunpack.c.l.b16 %v4905
          %v6176 = vunpack.c.h.b16 %v4905
          %v6177 = vunpack.c.l.b16 %v4906
          %v6178 = vunpack.c.h.b16 %v4906
          %v6179 = vunpack.c.l.b16 %v4907
          %v6180 = vunpack.c.h.b16 %v4907
          %v6181 = vunpack.c.l.b16 %v4908
          %v6182 = vunpack.c.h.b16 %v4908
          %v6183 = vunpack.c.l.b16 %v4909
          %v6184 = vunpack.c.h.b16 %v4909
          %v6185 = vunpack.c.l.b16 %v4910
          %v6186 = vunpack.c.h.b16 %v4910
          %v6187 = vunpack.c.l.b16 %v4911
          %v6188 = vunpack.c.h.b16 %v4911
          %v6189 = vunpack.c.l.b16 %v4912
          %v6190 = vunpack.c.h.b16 %v4912
          %v6191 = vunpack.c.l.b16 %v4913
          %v6192 = vunpack.c.h.b16 %v4913
          %v6193 = vunpack.c.l.b16 %v4914
          %v6194 = vunpack.c.h.b16 %v4914
          %v6195 = vunpack.c.l.b16 %v4915
          %v6196 = vunpack.c.h.b16 %v4915
          %v6197 = vunpack.c.l.b16 %v4916
          %v6198 = vunpack.c.h.b16 %v4916
          %v6199 = vunpack.c.l.b16 %v4917
          %v6200 = vunpack.c.h.b16 %v4917
          %v6201 = vunpack.c.l.b16 %v4918
          %v6202 = vunpack.c.h.b16 %v4918
          %v6203 = vunpack.c.l.b16 %v4919
          %v6204 = vunpack.c.h.b16 %v4919
          %v6205 = vunpack.c.l.b16 %v4920
          %v6206 = vunpack.c.h.b16 %v4920
          %v6207 = vunpack.c.l.b16 %v4921
          %v6208 = vunpack.c.h.b16 %v4921
          %v6209 = vunpack.c.l.b16 %v4922
          %v6210 = vunpack.c.h.b16 %v4922
          %v6211 = vunpack.c.l.b16 %v4923
          %v6212 = vunpack.c.h.b16 %v4923
          %v6213 = vunpack.c.l.b16 %v4924
          %v6214 = vunpack.c.h.b16 %v4924
          %v6215 = vunpack.c.l.b16 %v4925
          %v6216 = vunpack.c.h.b16 %v4925
          %v6217 = vunpack.c.l.b16 %v4926
          %v6218 = vunpack.c.h.b16 %v4926
          %v6219 = vunpack.c.l.b16 %v4927
          %v6220 = vunpack.c.h.b16 %v4927
          %v6221 = vunpack.c.l.b16 %v4928
          %v6222 = vunpack.c.h.b16 %v4928
          %v6223 = vunpack.c.l.b16 %v4929
          %v6224 = vunpack.c.h.b16 %v4929
          %v6225 = vunpack.c.l.b16 %v4930
          %v6226 = vunpack.c.h.b16 %v4930
          %v6227 = vunpack.c.l.b16 %v4931
          %v6228 = vunpack.c.h.b16 %v4931
          %v6229 = vunpack.c.l.b16 %v4932
          %v6230 = vunpack.c.h.b16 %v4932
          %v6231 = vunpack.c.l.b16 %v4933
          %v6232 = vunpack.c.h.b16 %v4933
          %v6233 = vunpack.c.l.b16 %v4934
          %v6234 = vunpack.c.h.b16 %v4934
          %v6235 = vunpack.c.l.b16 %v4935
          %v6236 = vunpack.c.h.b16 %v4935
          %v6237 = vunpack.c.l.b16 %v4936
          %v6238 = vunpack.c.h.b16 %v4936
          %v6239 = vunpack.c.l.b16 %v4937
          %v6240 = vunpack.c.h.b16 %v4937
          %v6241 = vunpack.c.l.b16 %v4938
          %v6242 = vunpack.c.h.b16 %v4938
          %v6243 = vunpack.c.l.b16 %v4939
          %v6244 = vunpack.c.h.b16 %v4939
          %v6245 = vunpack.c.l.b16 %v4940
          %v6246 = vunpack.c.h.b16 %v4940
          %v6247 = vunpack.c.l.b16 %v4941
          %v6248 = vunpack.c.h.b16 %v4941
          %v6249 = vunpack.c.l.b16 %v4942
          %v6250 = vunpack.c.h.b16 %v4942
          %v6251 = vunpack.c.l.b16 %v4943
          %v6252 = vunpack.c.h.b16 %v4943
          %v6253 = vunpack.c.l.b16 %v4944
          %v6254 = vunpack.c.h.b16 %v4944
          %v6255 = vunpack.c.l.b16 %v4945
          %v6256 = vunpack.c.h.b16 %v4945
          %v6257 = vunpack.c.l.b16 %v4946
          %v6258 = vunpack.c.h.b16 %v4946
          %v6259 = vunpack.c.l.b16 %v4947
          %v6260 = vunpack.c.h.b16 %v4947
          %v6261 = vunpack.c.l.b16 %v4948
          %v6262 = vunpack.c.h.b16 %v4948
          %v6263 = vunpack.c.l.b16 %v4949
          %v6264 = vunpack.c.h.b16 %v4949
          %v6265 = vunpack.c.l.b16 %v4950
          %v6266 = vunpack.c.h.b16 %v4950
          %v6267 = vunpack.c.l.b16 %v4951
          %v6268 = vunpack.c.h.b16 %v4951
          %v6269 = vunpack.c.l.b16 %v4952
          %v6270 = vunpack.c.h.b16 %v4952
          %v6271 = vunpack.c.l.b16 %v4953
          %v6272 = vunpack.c.h.b16 %v4953
          %v6273 = vunpack.c.l.b16 %v4954
          %v6274 = vunpack.c.h.b16 %v4954
          %v6275 = vunpack.c.l.b16 %v4955
          %v6276 = vunpack.c.h.b16 %v4955
          %v6277 = vunpack.c.l.b16 %v4956
          %v6278 = vunpack.c.h.b16 %v4956
          %v6279 = vunpack.c.l.b16 %v4957
          %v6280 = vunpack.c.h.b16 %v4957
          %v6281 = vunpack.c.l.b16 %v4958
          %v6282 = vunpack.c.h.b16 %v4958
          %v6283 = vunpack.c.l.b16 %v4959
          %v6284 = vunpack.c.h.b16 %v4959
          %v6285 = vunpack.c.l.b16 %v4960
          %v6286 = vunpack.c.h.b16 %v4960
          %v6287 = vunpack.c.l.b16 %v4961
          %v6288 = vunpack.c.h.b16 %v4961
          %v6289 = vunpack.c.l.b16 %v4962
          %v6290 = vunpack.c.h.b16 %v4962
          %v6291 = vunpack.c.l.b16 %v4963
          %v6292 = vunpack.c.h.b16 %v4963
          %v6293 = vunpack.c.l.b16 %v4964
          %v6294 = vunpack.c.h.b16 %v4964
          %v6295 = vunpack.c.l.b16 %v4965
          %v6296 = vunpack.c.h.b16 %v4965
          %v6297 = vunpack.c.l.b16 %v4966
          %v6298 = vunpack.c.h.b16 %v4966
          %v6299 = vunpack.c.l.b16 %v4967
          %v6300 = vunpack.c.h.b16 %v4967
          %v6301 = vunpack.c.l.b16 %v4968
          %v6302 = vunpack.c.h.b16 %v4968
          %v6303 = vunpack.c.l.b16 %v4969
          %v6304 = vunpack.c.h.b16 %v4969
          %v6305 = vunpack.c.l.b16 %v4970
          %v6306 = vunpack.c.h.b16 %v4970
          %v6307 = vunpack.c.l.b16 %v4971
          %v6308 = vunpack.c.h.b16 %v4971
          %v6309 = vunpack.c.l.b16 %v4972
          %v6310 = vunpack.c.h.b16 %v4972
          %v6311 = vunpack.c.l.b16 %v4973
          %v6312 = vunpack.c.h.b16 %v4973
          %v6313 = vunpack.c.l.b16 %v4974
          %v6314 = vunpack.c.h.b16 %v4974
          %v6315 = vunpack.c.l.b16 %v4975
          %v6316 = vunpack.c.h.b16 %v4975
          %v6317 = vunpack.c.l.b16 %v4976
          %v6318 = vunpack.c.h.b16 %v4976
          %v6319 = vunpack.c.l.b16 %v4977
          %v6320 = vunpack.c.h.b16 %v4977
          %v6321 = vunpack.c.l.b16 %v4978
          %v6322 = vunpack.c.h.b16 %v4978
          %v6323 = vunpack.c.l.b16 %v4979
          %v6324 = vunpack.c.h.b16 %v4979
          %v6325 = vunpack.c.l.b16 %v4980
          %v6326 = vunpack.c.h.b16 %v4980
          %v6327 = vpack.c.b16 %v6075, %v6071
          %v6328 = vpack.c.b16 %v6076, %v6072
          %v6329 = vpack.c.b16 %v6077, %v6073
          %v6330 = vpack.c.b16 %v6078, %v6074
          %v6331 = vpack.c.b16 %v6083, %v6079
          %v6332 = vpack.c.b16 %v6084, %v6080
          %v6333 = vpack.c.b16 %v6085, %v6081
          %v6334 = vpack.c.b16 %v6086, %v6082
          %v6335 = vpack.c.b16 %v6091, %v6087
          %v6336 = vpack.c.b16 %v6092, %v6088
          %v6337 = vpack.c.b16 %v6093, %v6089
          %v6338 = vpack.c.b16 %v6094, %v6090
          %v6339 = vpack.c.b16 %v6099, %v6095
          %v6340 = vpack.c.b16 %v6100, %v6096
          %v6341 = vpack.c.b16 %v6101, %v6097
          %v6342 = vpack.c.b16 %v6102, %v6098
          %v6343 = vpack.c.b16 %v6107, %v6103
          %v6344 = vpack.c.b16 %v6108, %v6104
          %v6345 = vpack.c.b16 %v6109, %v6105
          %v6346 = vpack.c.b16 %v6110, %v6106
          %v6347 = vpack.c.b16 %v6115, %v6111
          %v6348 = vpack.c.b16 %v6116, %v6112
          %v6349 = vpack.c.b16 %v6117, %v6113
          %v6350 = vpack.c.b16 %v6118, %v6114
          %v6351 = vpack.c.b16 %v6123, %v6119
          %v6352 = vpack.c.b16 %v6124, %v6120
          %v6353 = vpack.c.b16 %v6125, %v6121
          %v6354 = vpack.c.b16 %v6126, %v6122
          %v6355 = vpack.c.b16 %v6131, %v6127
          %v6356 = vpack.c.b16 %v6132, %v6128
          %v6357 = vpack.c.b16 %v6133, %v6129
          %v6358 = vpack.c.b16 %v6134, %v6130
          %v6359 = vpack.c.b16 %v6139, %v6135
          %v6360 = vpack.c.b16 %v6140, %v6136
          %v6361 = vpack.c.b16 %v6141, %v6137
          %v6362 = vpack.c.b16 %v6142, %v6138
          %v6363 = vpack.c.b16 %v6147, %v6143
          %v6364 = vpack.c.b16 %v6148, %v6144
          %v6365 = vpack.c.b16 %v6149, %v6145
          %v6366 = vpack.c.b16 %v6150, %v6146
          %v6367 = vpack.c.b16 %v6155, %v6151
          %v6368 = vpack.c.b16 %v6156, %v6152
          %v6369 = vpack.c.b16 %v6157, %v6153
          %v6370 = vpack.c.b16 %v6158, %v6154
          %v6371 = vpack.c.b16 %v6163, %v6159
          %v6372 = vpack.c.b16 %v6164, %v6160
          %v6373 = vpack.c.b16 %v6165, %v6161
          %v6374 = vpack.c.b16 %v6166, %v6162
          %v6375 = vpack.c.b16 %v6171, %v6167
          %v6376 = vpack.c.b16 %v6172, %v6168
          %v6377 = vpack.c.b16 %v6173, %v6169
          %v6378 = vpack.c.b16 %v6174, %v6170
          %v6379 = vpack.c.b16 %v6179, %v6175
          %v6380 = vpack.c.b16 %v6180, %v6176
          %v6381 = vpack.c.b16 %v6181, %v6177
          %v6382 = vpack.c.b16 %v6182, %v6178
          %v6383 = vpack.c.b16 %v6187, %v6183
          %v6384 = vpack.c.b16 %v6188, %v6184
          %v6385 = vpack.c.b16 %v6189, %v6185
          %v6386 = vpack.c.b16 %v6190, %v6186
          %v6387 = vpack.c.b16 %v6195, %v6191
          %v6388 = vpack.c.b16 %v6196, %v6192
          %v6389 = vpack.c.b16 %v6197, %v6193
          %v6390 = vpack.c.b16 %v6198, %v6194
          %v6391 = vpack.c.b16 %v6203, %v6199
          %v6392 = vpack.c.b16 %v6204, %v6200
          %v6393 = vpack.c.b16 %v6205, %v6201
          %v6394 = vpack.c.b16 %v6206, %v6202
          %v6395 = vpack.c.b16 %v6211, %v6207
          %v6396 = vpack.c.b16 %v6212, %v6208
          %v6397 = vpack.c.b16 %v6213, %v6209
          %v6398 = vpack.c.b16 %v6214, %v6210
          %v6399 = vpack.c.b16 %v6219, %v6215
          %v6400 = vpack.c.b16 %v6220, %v6216
          %v6401 = vpack.c.b16 %v6221, %v6217
          %v6402 = vpack.c.b16 %v6222, %v6218
          %v6403 = vpack.c.b16 %v6227, %v6223
          %v6404 = vpack.c.b16 %v6228, %v6224
          %v6405 = vpack.c.b16 %v6229, %v6225
          %v6406 = vpack.c.b16 %v6230, %v6226
          %v6407 = vpack.c.b16 %v6235, %v6231
          %v6408 = vpack.c.b16 %v6236, %v6232
          %v6409 = vpack.c.b16 %v6237, %v6233
          %v6410 = vpack.c.b16 %v6238, %v6234
          %v6411 = vpack.c.b16 %v6243, %v6239
          %v6412 = vpack.c.b16 %v6244, %v6240
          %v6413 = vpack.c.b16 %v6245, %v6241
          %v6414 = vpack.c.b16 %v6246, %v6242
          %v6415 = vpack.c.b16 %v6251, %v6247
          %v6416 = vpack.c.b16 %v6252, %v6248
          %v6417 = vpack.c.b16 %v6253, %v6249
          %v6418 = vpack.c.b16 %v6254, %v6250
          %v6419 = vpack.c.b16 %v6259, %v6255
          %v6420 = vpack.c.b16 %v6260, %v6256
          %v6421 = vpack.c.b16 %v6261, %v6257
          %v6422 = vpack.c.b16 %v6262, %v6258
          %v6423 = vpack.c.b16 %v6267, %v6263
          %v6424 = vpack.c.b16 %v6268, %v6264
          %v6425 = vpack.c.b16 %v6269, %v6265
          %v6426 = vpack.c.b16 %v6270, %v6266
          %v6427 = vpack.c.b16 %v6275, %v6271
          %v6428 = vpack.c.b16 %v6276, %v6272
          %v6429 = vpack.c.b16 %v6277, %v6273
          %v6430 = vpack.c.b16 %v6278, %v6274
          %v6431 = vpack.c.b16 %v6283, %v6279
          %v6432 = vpack.c.b16 %v6284, %v6280
          %v6433 = vpack.c.b16 %v6285, %v6281
          %v6434 = vpack.c.b16 %v6286, %v6282
          %v6435 = vpack.c.b16 %v6291, %v6287
          %v6436 = vpack.c.b16 %v6292, %v6288
          %v6437 = vpack.c.b16 %v6293, %v6289
          %v6438 = vpack.c.b16 %v6294, %v6290
          %v6439 = vpack.c.b16 %v6299, %v6295
          %v6440 = vpack.c.b16 %v6300, %v6296
          %v6441 = vpack.c.b16 %v6301, %v6297
          %v6442 = vpack.c.b16 %v6302, %v6298
          %v6443 = vpack.c.b16 %v6307, %v6303
          %v6444 = vpack.c.b16 %v6308, %v6304
          %v6445 = vpack.c.b16 %v6309, %v6305
          %v6446 = vpack.c.b16 %v6310, %v6306
          %v6447 = vpack.c.b16 %v6315, %v6311
          %v6448 = vpack.c.b16 %v6316, %v6312
          %v6449 = vpack.c.b16 %v6317, %v6313
          %v6450 = vpack.c.b16 %v6318, %v6314
          %v6451 = vpack.c.b16 %v6323, %v6319
          %v6452 = vpack.c.b16 %v6324, %v6320
          %v6453 = vpack.c.b16 %v6325, %v6321
          %v6454 = vpack.c.b16 %v6326, %v6322
          %6583 = vmatprep.subr.bf16.mxu0 %v6328
          %6584 = vmatpush1.bf16.msra.mxu0 %v6327
          %6585 = vmatprep.subr.bf16.mxu0 %v6332
          %6586 = vmatpush1.bf16.msra.mxu0 %v6331
          %6587 = vmatprep.subr.bf16.mxu0 %v6336
          %6588 = vmatpush1.bf16.msra.mxu0 %v6335
          %6589 = vmatprep.subr.bf16.mxu0 %v6340
          %6590 = vmatpush1.bf16.msra.mxu0 %v6339
          %6591 = vmatprep.subr.bf16.mxu0 %v6344
          %6592 = vmatpush1.bf16.msra.mxu0 %v6343
          %6593 = vmatprep.subr.bf16.mxu0 %v6348
          %6594 = vmatpush1.bf16.msra.mxu0 %v6347
          %6595 = vmatprep.subr.bf16.mxu0 %v6352
          %6596 = vmatpush1.bf16.msra.mxu0 %v6351
          %6597 = vmatprep.subr.bf16.mxu0 %v6356
          %6598 = vmatpush1.bf16.msra.mxu0 %v6355
          %6599 = vmatprep.subr.bf16.mxu0 %v6360
          %6600 = vmatpush1.bf16.msra.mxu0 %v6359
          %6601 = vmatprep.subr.bf16.mxu0 %v6364
          %6602 = vmatpush1.bf16.msra.mxu0 %v6363
          %6603 = vmatprep.subr.bf16.mxu0 %v6368
          %6604 = vmatpush1.bf16.msra.mxu0 %v6367
          %6605 = vmatprep.subr.bf16.mxu0 %v6372
          %6606 = vmatpush1.bf16.msra.mxu0 %v6371
          %6607 = vmatprep.subr.bf16.mxu0 %v6376
          %6608 = vmatpush1.bf16.msra.mxu0 %v6375
          %6609 = vmatprep.subr.bf16.mxu0 %v6380
          %6610 = vmatpush1.bf16.msra.mxu0 %v6379
          %6611 = vmatprep.subr.bf16.mxu0 %v6384
          %6612 = vmatpush1.bf16.msra.mxu0 %v6383
          %6613 = vmatprep.subr.bf16.mxu0 %v6388
          %6614 = vmatpush1.bf16.msra.mxu0 %v6387
          %6615 = vmatprep.mubr.bf16.mxu0 %v5110
          %6616 = vmatmul.mubr.bf16.gmra.mrb[0].mxu0 %v5109
          %v6617 = vpop.f32.mrb[0].mxu0
          %v6618 = vadd.f32 %v5855, %v6617
          %v6619 = vpop.f32.mrb[0].mxu0
          %v6620 = vadd.f32 %v5857, %v6619
          %v6621 = vpop.f32.mrb[0].mxu0
          %v6622 = vpop.f32.mrb[0].mxu0
          %6623 = vdwg.mxu0
          %6624 = vmatprep.subr.bf16.mxu0 %v6392
          %6625 = vmatpush1.bf16.msra.mxu0 %v6391
          %6626 = vmatprep.subr.bf16.mxu0 %v6396
          %6627 = vmatpush1.bf16.msra.mxu0 %v6395
          %6628 = vmatprep.subr.bf16.mxu0 %v6400
          %6629 = vmatpush1.bf16.msra.mxu0 %v6399
          %6630 = vmatprep.subr.bf16.mxu0 %v6404
          %6631 = vmatpush1.bf16.msra.mxu0 %v6403
          %6632 = vmatprep.subr.bf16.mxu0 %v6408
          %6633 = vmatpush1.bf16.msra.mxu0 %v6407
          %6634 = vmatprep.subr.bf16.mxu0 %v6412
          %6635 = vmatpush1.bf16.msra.mxu0 %v6411
          %6636 = vmatprep.subr.bf16.mxu0 %v6416
          %6637 = vmatpush1.bf16.msra.mxu0 %v6415
          %6638 = vmatprep.subr.bf16.mxu0 %v6420
          %6639 = vmatpush1.bf16.msra.mxu0 %v6419
          %6640 = vmatprep.subr.bf16.mxu0 %v6424
          %6641 = vmatpush1.bf16.msra.mxu0 %v6423
          %6642 = vmatprep.subr.bf16.mxu0 %v6428
          %6643 = vmatpush1.bf16.msra.mxu0 %v6427
          %6644 = vmatprep.subr.bf16.mxu0 %v6432
          %6645 = vmatpush1.bf16.msra.mxu0 %v6431
          %6646 = vmatprep.subr.bf16.mxu0 %v6436
          %6647 = vmatpush1.bf16.msra.mxu0 %v6435
          %6648 = vmatprep.subr.bf16.mxu0 %v6440
          %6649 = vmatpush1.bf16.msra.mxu0 %v6439
          %6650 = vmatprep.subr.bf16.mxu0 %v6444
          %6651 = vmatpush1.bf16.msra.mxu0 %v6443
          %6652 = vmatprep.subr.bf16.mxu0 %v6448
          %6653 = vmatpush1.bf16.msra.mxu0 %v6447
          %6654 = vmatprep.subr.bf16.mxu0 %v6452
          %6655 = vmatpush1.bf16.msra.mxu0 %v6451
          %6656 = vmatprep.mubr.bf16.mxu0 %v5112
          %6657 = vmatmul.mubr.bf16.gmra.mrb[0].mxu0 %v5111
          %v6658 = vpop.f32.mrb[0].mxu0
          %v6659 = vadd.f32 %v6618, %v6658
          %v6660 = vpop.f32.mrb[0].mxu0
          %v6661 = vadd.f32 %v6620, %v6660
          %v6662 = vpop.f32.mrb[0].mxu0
          %v6663 = vpop.f32.mrb[0].mxu0
          %6664 = vdwg.mxu0
          %6665 = vmatprep.subr.bf16.mxu0 %v6330
          %6666 = vmatpush1.bf16.msra.mxu0 %v6329
          %6667 = vmatprep.subr.bf16.mxu0 %v6334
          %6668 = vmatpush1.bf16.msra.mxu0 %v6333
          %6669 = vmatprep.subr.bf16.mxu0 %v6338
          %6670 = vmatpush1.bf16.msra.mxu0 %v6337
          %6671 = vmatprep.subr.bf16.mxu0 %v6342
          %6672 = vmatpush1.bf16.msra.mxu0 %v6341
          %6673 = vmatprep.subr.bf16.mxu0 %v6346
          %6674 = vmatpush1.bf16.msra.mxu0 %v6345
          %6675 = vmatprep.subr.bf16.mxu0 %v6350
          %6676 = vmatpush1.bf16.msra.mxu0 %v6349
          %6677 = vmatprep.subr.bf16.mxu0 %v6354
          %6678 = vmatpush1.bf16.msra.mxu0 %v6353
          %6679 = vmatprep.subr.bf16.mxu0 %v6358
          %6680 = vmatpush1.bf16.msra.mxu0 %v6357
          %6681 = vmatprep.subr.bf16.mxu0 %v6362
          %6682 = vmatpush1.bf16.msra.mxu0 %v6361
          %6683 = vmatprep.subr.bf16.mxu0 %v6366
          %6684 = vmatpush1.bf16.msra.mxu0 %v6365
          %6685 = vmatprep.subr.bf16.mxu0 %v6370
          %6686 = vmatpush1.bf16.msra.mxu0 %v6369
          %6687 = vmatprep.subr.bf16.mxu0 %v6374
          %6688 = vmatpush1.bf16.msra.mxu0 %v6373
          %6689 = vmatprep.subr.bf16.mxu0 %v6378
          %6690 = vmatpush1.bf16.msra.mxu0 %v6377
          %6691 = vmatprep.subr.bf16.mxu0 %v6382
          %6692 = vmatpush1.bf16.msra.mxu0 %v6381
          %6693 = vmatprep.subr.bf16.mxu0 %v6386
          %6694 = vmatpush1.bf16.msra.mxu0 %v6385
          %6695 = vmatprep.subr.bf16.mxu0 %v6390
          %6696 = vmatpush1.bf16.msra.mxu0 %v6389
          %6697 = vmatprep.mubr.bf16.mxu0 %v5110
          %6698 = vmatmul.mubr.bf16.gmra.mrb[0].mxu0 %v5109
          %v6699 = vpop.f32.mrb[0].mxu0
          %v6700 = vadd.f32 %v5937, %v6699
          %v6701 = vpop.f32.mrb[0].mxu0
          %v6702 = vadd.f32 %v5939, %v6701
          %v6703 = vpop.f32.mrb[0].mxu0
          %v6704 = vpop.f32.mrb[0].mxu0
          %6705 = vdwg.mxu0
          %6706 = vmatprep.subr.bf16.mxu0 %v6394
          %6707 = vmatpush1.bf16.msra.mxu0 %v6393
          %6708 = vmatprep.subr.bf16.mxu0 %v6398
          %6709 = vmatpush1.bf16.msra.mxu0 %v6397
          %6710 = vmatprep.subr.bf16.mxu0 %v6402
          %6711 = vmatpush1.bf16.msra.mxu0 %v6401
          %6712 = vmatprep.subr.bf16.mxu0 %v6406
          %6713 = vmatpush1.bf16.msra.mxu0 %v6405
          %6714 = vmatprep.subr.bf16.mxu0 %v6410
          %6715 = vmatpush1.bf16.msra.mxu0 %v6409
          %6716 = vmatprep.subr.bf16.mxu0 %v6414
          %6717 = vmatpush1.bf16.msra.mxu0 %v6413
          %6718 = vmatprep.subr.bf16.mxu0 %v6418
          %6719 = vmatpush1.bf16.msra.mxu0 %v6417
          %6720 = vmatprep.subr.bf16.mxu0 %v6422
          %6721 = vmatpush1.bf16.msra.mxu0 %v6421
          %6722 = vmatprep.subr.bf16.mxu0 %v6426
          %6723 = vmatpush1.bf16.msra.mxu0 %v6425
          %6724 = vmatprep.subr.bf16.mxu0 %v6430
          %6725 = vmatpush1.bf16.msra.mxu0 %v6429
          %6726 = vmatprep.subr.bf16.mxu0 %v6434
          %6727 = vmatpush1.bf16.msra.mxu0 %v6433
          %6728 = vmatprep.subr.bf16.mxu0 %v6438
          %6729 = vmatpush1.bf16.msra.mxu0 %v6437
          %6730 = vmatprep.subr.bf16.mxu0 %v6442
          %6731 = vmatpush1.bf16.msra.mxu0 %v6441
          %6732 = vmatprep.subr.bf16.mxu0 %v6446
          %6733 = vmatpush1.bf16.msra.mxu0 %v6445
          %6734 = vmatprep.subr.bf16.mxu0 %v6450
          %6735 = vmatpush1.bf16.msra.mxu0 %v6449
          %6736 = vmatprep.subr.bf16.mxu0 %v6454
          %6737 = vmatpush1.bf16.msra.mxu0 %v6453
          %6738 = vmatprep.mubr.bf16.mxu0 %v5112
          %6739 = vmatmul.mubr.bf16.gmra.mrb[0].mxu0 %v5111
          %v6740 = vpop.f32.mrb[0].mxu0
          %v6741 = vadd.f32 %v6700, %v6740
          %v6742 = vpop.f32.mrb[0].mxu0
          %v6743 = vadd.f32 %v6702, %v6742
          %v6744 = vpop.f32.mrb[0].mxu0
          %v6745 = vpop.f32.mrb[0].mxu0
          %6746 = vdwg.mxu0
          %v6748 = vlaneseq
          %v6749 = vshrl.u32 %v6748, 7
          %v6750 = vsub.s32 0, %v6749
          %v6751 = vrot.slane %v3489, %v6750
          %v6752 = vlaneseq
          %v6753 = vshrl.u32 %v6752, 7
          %v6754 = vsub.s32 1, %v6753
          %v6755 = vrot.slane %v3489, %v6754
          %v6756 = vlaneseq
          %v6757 = vshrl.u32 %v6756, 7
          %v6758 = vsub.s32 2, %v6757
          %v6759 = vrot.slane %v3489, %v6758
          %v6760 = vlaneseq
          %v6761 = vshrl.u32 %v6760, 7
          %v6762 = vsub.s32 3, %v6761
          %v6763 = vrot.slane %v3489, %v6762
          %v6768 = vadd.f32 %v6659, %v6751
          %v6769 = vadd.f32 %v6661, %v6755
          %v6770 = vadd.f32 %v6741, %v6759
          %v6771 = vadd.f32 %v6743, %v6763
          %v6772 = vmax.f32 %v6768, 0.0
          %v6773 = vmax.f32 %v6769, 0.0
          %v6774 = vmax.f32 %v6770, 0.0
          %v6775 = vmax.f32 %v6771, 0.0
          %v6780 = vcombine.low %v6772, %v6773
          %v6781 = vcombine.low %v6774, %v6775
          %v6783 = vunpack.c.l.s4 1983009808
          %v6784 = vunpack.c.0.s8 %v6783
          %v6785 = vlaneseq
          %v6786 = vshrl.u32 %v6785, 7
          %v6787 = vsub.s32 %v6784, %v6786
          %v6788 = vrot.slane %v6780, %v6787
          %v6790 = vunpack.c.l.s4 1983009808
          %v6791 = vunpack.c.0.s8 %v6790
          %v6792 = vlaneseq
          %v6793 = vshrl.u32 %v6792, 7
          %v6794 = vsub.s32 %v6791, %v6793
          %v6795 = vrot.slane %v6781, %v6794
          %v6796 = vcombine.low %v6788, %v6795
          %6798 = vst [vmem:[#allocation9] sm:$0xff] %v6796
        $region97: #{tpu_custom_call.1} parent=76 // pred_fallthru
          _
        // Predicated region
        $region98: #{tpu_custom_call.1} parent=76 // pred_check
          %p6799 = pneg %p149
        $region99: #{tpu_custom_call.1} parent=76 // pred_check_branch
          %6801 = sbr.rel (%p6799) target = $region101
        $region100: #{tpu_custom_call.1} parent=76 // pred_region
          %s6803 = ssub.s32 128, 128
          %6804 = vsyncadd [#allocation6], %s6803
          %s6806 = sshll.u32 [#allocation9], 4
          %s6807 = int_to_ptr.vmem [resolvable:$true] %s6806
          %6809 = dma.vmem_to_hbm [thread:$0]  %s6807, 128, %s5, [#allocation6]
        $region101: #{tpu_custom_call.1} parent=76 // pred_fallthru
          _
        // Predicated region
        $region102: #{tpu_custom_call.1} parent=76 // pred_check
          %p6810 = pneg %p149
        $region103: #{tpu_custom_call.1} parent=76 // pred_check_branch
          %6812 = sbr.rel (%p6810) target = $region105
        $region104: #{tpu_custom_call.1} parent=76 // pred_region
          %6813 = dma.done [#allocation6], 128
        $region105: #{tpu_custom_call.1} parent=76 // pred_fallthru
          _
      $region77: #{tpu_custom_call.1} parent=5 // pred_fallthru
        _
      %p6814 = scmp.le.s32.totalorder 2, %s16
      // Predicated region
      $region106: #{tpu_custom_call.1} parent=5 // pred_check
        %p6815 = pneg %p6814
      $region107: #{tpu_custom_call.1} parent=5 // pred_check_branch
        %6817 = sbr.rel (%p6815) target = $region109
      $region108: #{tpu_custom_call.1} parent=5 // pred_region
        %s6818 = ssub.s32 %s16, 2
      $region109: #{tpu_custom_call.1} parent=5 // pred_fallthru
        _
    $region6: #{tpu_custom_call.1} parent=1 // loop_footer
      %s20 = sadd.s32 1, %s16
    $region7: #{tpu_custom_call.1} parent=1 // loop_footer_branch
      %15 = sbr.rel target = $region3
    $region8: #{tpu_custom_call.1} parent=1 // loop_exit
      _
    %6819 = vsyncpa [#allocation5], 1
    %s6820 = scalar_lea.sflag [#allocation5], 1
    %6821 = vsyncpa %s6820, 1
    %6822 = vsyncpa [#allocation8], 1
    %6823 = vsyncpa [#allocation6], 1
    %s6824 = scalar_lea.sflag [#allocation6], 1
    %6825 = vsyncpa %s6824, 1

</llo_original>
